<compile_context>
chip_gen: v7x
topology: tpu7x:2x2x1
jax: 0.10.0
libtpu: 0.0.40
codegen_flags: <defaults>
</compile_context>

<pallas_src>
import functools

import jax
import jax.numpy as jnp
import numpy as np
from jax.experimental import pallas as pl
from jax.experimental.pallas import tpu as pltpu


# ----------------------------------------------------------------------------
# Generation-aware VMEM budgets (v5e/v6e: 128 MiB, v7x: 64 MiB per TensorCore)
# ----------------------------------------------------------------------------
def _detect_vmem_bytes():
    try:
        info = pltpu.get_tpu_info()
        v = int(getattr(info, "vmem_capacity_bytes", 0) or 0)
        if v > 0:
            return v
    except Exception:
        pass
    return 64 * 1024 * 1024     # conservative fallback: v7x per-TensorCore VMEM


_PHYS_VMEM_BYTES = _detect_vmem_bytes()
VMEM_LIMIT_BYTES = max(32 * 1024 * 1024,
                       min(_PHYS_VMEM_BYTES - 16 * 1024 * 1024,
                           int(_PHYS_VMEM_BYTES * 0.80)))
VMEM_TILE_BUDGET = int(VMEM_LIMIT_BYTES * 0.75)


def _round_up(x, m):
    return (x + m - 1) // m * m


def _pad2d(x, rows, cols):
    r, c = x.shape
    if r == rows and c == cols:
        return x
    return jnp.pad(x, ((0, rows - r), (0, cols - c)))


# ----------------------------------------------------------------------------
# Kernel 1: tiled matmul + bias (+ residual) + TReLU epilogue.
#   Simple path : grid = (M_tiles, N_tiles), weights resident per block, no
#                 accumulator, fused epilogue every step.
#   K-tiled path: grid = (M_tiles, N_tiles, K_tiles) with f32 VMEM accumulator,
#                 epilogue only at the last K step (used only for K > 4096).
# ----------------------------------------------------------------------------
def _mm_kernel_simple(x_ref, w_ref, b_ref, alpha_ref, *rest, has_sc, apply_trelu):
    if has_sc:
        sc_ref, o_ref = rest
    else:
        (o_ref,) = rest
    acc = jnp.dot(x_ref[...], w_ref[...], preferred_element_type=jnp.float32)
    acc = acc + b_ref[...]
    if has_sc:
        acc = acc + sc_ref[...].astype(jnp.float32)
    if apply_trelu:
        acc = jnp.maximum(acc, alpha_ref[0, 0])     # TReLU(z) = max(z, a)
    o_ref[...] = acc.astype(o_ref.dtype)


def _mm_kernel_ktiled(x_ref, w_ref, b_ref, alpha_ref, *rest, has_sc, apply_trelu):
    if has_sc:
        sc_ref, o_ref, acc_ref = rest
    else:
        o_ref, acc_ref = rest
    k = pl.program_id(2)

    @pl.when(k == 0)
    def _():
        acc_ref[...] = jnp.zeros_like(acc_ref)

    acc_ref[...] += jnp.dot(x_ref[...], w_ref[...],
                            preferred_element_type=jnp.float32)

    @pl.when(k == pl.num_programs(2) - 1)
    def _():
        acc = acc_ref[...] + b_ref[...]
        if has_sc:
            acc = acc + sc_ref[...].astype(jnp.float32)
        if apply_trelu:
            acc = jnp.maximum(acc, alpha_ref[0, 0])
        o_ref[...] = acc.astype(o_ref.dtype)


def _pick_tm(M, tk, tn, out_itemsize, has_sc, ktiled):
    """Largest row tile (128..1024) fitting the per-step VMEM budget, then
    balanced against M so padding waste is small.  No forced >=2-tile rule:
    cross-core parallelism comes from the Cout axis / other grid axes."""
    def vmem_bytes(t):
        per = 2 * t * tk * 2                 # x, double-buffered, bf16
        per += 2 * tk * tn * 2               # w, double-buffered, bf16
        per += 2 * t * tn * out_itemsize     # out, double-buffered
        if ktiled:
            per += t * tn * 4                # f32 accumulator scratch
        if has_sc:
            per += 2 * t * tn * 2            # residual, double-buffered, bf16
        return per

    tm = 1024
    while tm > 128 and vmem_bytes(tm) > VMEM_TILE_BUDGET:
        tm //= 2
    tm = min(tm, _round_up(M, 8))
    n_m = -(-M // tm)
    tm = _round_up(-(-M // n_m), 8)          # balance: minimize padding waste
    return tm, n_m * tm


def _matmul_bias_act(x, w, b, alpha, sc=None, apply_trelu=True,
                     out_dtype=jnp.bfloat16):
    """out = act(x @ w + b [+ sc]).
    x: (M, K), w: (K, Cout), b: (Cout,), sc: (>=M, <=Cout_pad) or None (bf16).
    Returns (Mpad, Cout_pad).  Cout is padded to a lane-dense multiple of
    128 (256 when tiled); padded channels carry zero weight/bias."""
    M, K = x.shape
    Cout = w.shape[1]
    has_sc = sc is not None

    cout_pad = _round_up(max(Cout, 128), 128)
    if cout_pad <= 512:
        tn = cout_pad                         # single Cout block
    else:
        cout_pad = _round_up(cout_pad, 256)   # 256-aligned tiles for v6e/v7x MXU
        tn = 256

    if K > 4096:                              # K-tile only for genuinely huge K
        n_k = -(-K // 2048)
        tk = _round_up(-(-K // n_k), 256)
        kpad = _round_up(K, tk)
        ktiled = True
    else:                                     # weights stay resident: no K axis
        tk = kpad = K
        ktiled = False

    out_itemsize = np.dtype(out_dtype).itemsize
    tm, mpad = _pick_tm(M, tk, tn, out_itemsize, has_sc, ktiled)

    xb = _pad2d(x.astype(jnp.bfloat16), mpad, kpad)
    wb = _pad2d(w.astype(jnp.bfloat16), kpad, cout_pad)
    bb = _pad2d(b.reshape(1, Cout).astype(jnp.float32), 1, cout_pad)
    al = jnp.asarray(alpha, jnp.float32).reshape(1, 1)

    if ktiled:
        grid = (mpad // tm, cout_pad // tn, kpad // tk)
        in_specs = [
            pl.BlockSpec((tm, tk), lambda i, j, k: (i, k)),
            pl.BlockSpec((tk, tn), lambda i, j, k: (k, j)),
            pl.BlockSpec((1, tn), lambda i, j, k: (0, j)),
            pl.BlockSpec(memory_space=pltpu.MemorySpace.SMEM),   # alpha scalar
        ]
        sc_spec = pl.BlockSpec((tm, tn), lambda i, j, k: (i, j))
        out_spec = pl.BlockSpec((tm, tn), lambda i, j, k: (i, j))
        scratch = [pltpu.VMEM((tm, tn), jnp.float32)]
        dims = ("parallel", "parallel", "arbitrary")
        kern = functools.partial(_mm_kernel_ktiled, has_sc=has_sc,
                                 apply_trelu=apply_trelu)
    else:
        grid = (mpad // tm, cout_pad // tn)
        in_specs = [
            pl.BlockSpec((tm, kpad), lambda i, j: (i, 0)),
            pl.BlockSpec((kpad, tn), lambda i, j: (0, j)),
            pl.BlockSpec((1, tn), lambda i, j: (0, j)),
            pl.BlockSpec(memory_space=pltpu.MemorySpace.SMEM),   # alpha scalar
        ]
        sc_spec = pl.BlockSpec((tm, tn), lambda i, j: (i, j))
        out_spec = pl.BlockSpec((tm, tn), lambda i, j: (i, j))
        scratch = []
        dims = ("parallel", "parallel")
        kern = functools.partial(_mm_kernel_simple, has_sc=has_sc,
                                 apply_trelu=apply_trelu)

    args = [xb, wb, bb, al]
    if has_sc:
        scb = _pad2d(sc[:M].astype(jnp.bfloat16), mpad, cout_pad)
        in_specs.append(sc_spec)
        args.append(scb)

    n_m, n_n = mpad // tm, cout_pad // tn
    in_bytes = mpad * kpad * 2 * n_n + kpad * cout_pad * 2 * n_m
    if has_sc:
        in_bytes += mpad * cout_pad * 2
    out_bytes = mpad * cout_pad * out_itemsize

    return pl.pallas_call(
        kern,
        out_shape=jax.ShapeDtypeStruct((mpad, cout_pad), out_dtype),
        grid=grid,
        in_specs=in_specs,
        out_specs=out_spec,
        scratch_shapes=scratch,
        compiler_params=pltpu.CompilerParams(
            dimension_semantics=dims,
            vmem_limit_bytes=VMEM_LIMIT_BYTES),
        cost_estimate=pl.CostEstimate(flops=int(2 * mpad * kpad * cout_pad),
                                      transcendentals=0,
                                      bytes_accessed=int(in_bytes + out_bytes)),
    )(*args)


# ----------------------------------------------------------------------------
# Kernel 2: 3x3 conv (stride s, pad 1) + bias + TReLU as an in-kernel 9-tap
# reduction over stride^2 unit-stride "phase" grids.  The single XLA repack
# pass now emits row tiles shingled with their halo, so the kernel grid is
# (N * row_tiles) with bounded per-step VMEM and >=2 parallel steps.
# ----------------------------------------------------------------------------
def _conv3x3_kernel(ph_ref, w_ref, b_ref, alpha_ref, o_ref, *, stride, TH, Wo):
    cin = ph_ref.shape[-1]
    cout = w_ref.shape[-1]
    # Single SSA accumulate chain keeps partial sums in the MXU result buffer.
    acc = jnp.zeros((TH * Wo, cout), jnp.float32)
    # TODO(synk): taps with ow != 0 pay a slice+reshape relayout; a shifted
    # full-row matmul variant would trade ~6% extra MXU flops for zero input
    # relayouts if the bundle dump shows vld/vst saturating before the MXU.
    for kh in range(3):
        for kw in range(3):
            phase = (kh % stride) * stride + (kw % stride)
            oh, ow = kh // stride, kw // stride
            win = ph_ref[phase, oh:oh + TH, ow:ow + Wo, :]
            acc = acc + jnp.dot(win.reshape(TH * Wo, cin),
                                w_ref[kh * 3 + kw],
                                preferred_element_type=jnp.float32)
    acc = acc + b_ref[...]
    acc = jnp.maximum(acc, alpha_ref[0, 0])
    o_ref[0] = acc.astype(o_ref.dtype)


def _pick_th(Ho, Wo, pW, s2, cin_pad, cout_pad, ext):
    def ws(th):
        per = 2 * s2 * (th + ext) * pW * cin_pad * 2   # input tile, dbl-buf bf16
        per += 2 * 9 * cin_pad * cout_pad * 2          # weights, dbl-buf bf16
        per += 2 * th * Wo * cout_pad * 2              # out tile, dbl-buf bf16
        per += th * Wo * cout_pad * 4                  # f32 accumulator
        return per

    th = Ho
    while th > 1 and ws(th) > VMEM_TILE_BUDGET:
        th = (th + 1) // 2
    if th == Ho and Ho >= 8:
        th = (Ho + 1) // 2        # >=2 row tiles so v7x can split across cores
    return max(th, 1)


def _conv3x3(x_nhwc, w_oihw, b, alpha, stride):
    """x_nhwc: (N, H, W, Cin_pad) bf16 (channel-padded to a multiple of 128);
    w_oihw: (Cout, Cin, 3, 3).  Returns (N, Ho, Wo, Cout_pad) bf16."""
    N, H, W, cin_pad = x_nhwc.shape
    Cout, Cin = w_oihw.shape[0], w_oihw.shape[1]
    assert cin_pad % 128 == 0 and Cin <= cin_pad
    cout_pad = _round_up(max(Cout, 128), 128)
    Ho = (H + 2 - 3) // stride + 1
    Wo = (W + 2 - 3) // stride + 1
    ext = (3 - 1) // stride
    s2 = stride * stride
    pW = Wo + ext

    TH = _pick_th(Ho, Wo, pW, s2, cin_pad, cout_pad, ext)
    n_rt = -(-Ho // TH)
    Ho_pad = n_rt * TH
    pH = Ho_pad + ext

    # Single XLA repack: spatial pad + phase decomposition + row-tile shingling
    # (each TH-row tile carries its ext-row halo, so BlockSpec blocks never
    # overlap).  TODO(synk): fold this repack into conv1's out_specs (or do
    # in-kernel strided phase loads) to remove the extra activation HBM pass.
    xp = jnp.pad(x_nhwc.astype(jnp.bfloat16), ((0, 0), (1, 1), (1, 1), (0, 0)))
    phases = []
    for a in range(stride):
        for b_ in range(stride):
            ph = xp[:, a::stride, b_::stride, :][:, :pH, :pW, :]
            dh, dw = pH - ph.shape[1], pW - ph.shape[2]
            if dh or dw:
                ph = jnp.pad(ph, ((0, 0), (0, dh), (0, dw), (0, 0)))
            phases.append(ph)
    ph_full = jnp.stack(phases, axis=1)                  # (N, s2, pH, pW, Cpad)
    tiles = [ph_full[:, :, i * TH:i * TH + TH + ext] for i in range(n_rt)]
    ph_sh = jnp.stack(tiles, axis=1)                     # (N, n_rt, s2, TH+ext, pW, Cpad)
    ph_sh = ph_sh.reshape(N * n_rt * s2, TH + ext, pW, cin_pad)

    # (Cout, Cin, 3, 3) -> (9, Cin_pad, Cout_pad); zero-padded channels so the
    # non-zero (post-TReLU) padded input lanes never contribute.
    wt = jnp.transpose(w_oihw, (2, 3, 1, 0)).reshape(9, Cin, Cout)
    wt = jnp.pad(wt, ((0, 0), (0, cin_pad - Cin), (0, cout_pad - Cout)))
    wt = wt.astype(jnp.bfloat16)
    bias = _pad2d(b.reshape(1, Cout).astype(jnp.float32), 1, cout_pad)
    al = jnp.asarray(alpha, jnp.float32).reshape(1, 1)

    kernel = functools.partial(_conv3x3_kernel, stride=stride, TH=TH, Wo=Wo)
    flops = 2 * N * n_rt * TH * Wo * 9 * cin_pad * cout_pad
    bytes_accessed = (ph_sh.size + wt.size) * 2 + N * n_rt * TH * Wo * cout_pad * 2

    out = pl.pallas_call(
        kernel,
        out_shape=jax.ShapeDtypeStruct((N * n_rt, TH * Wo, cout_pad),
                                       jnp.bfloat16),
        grid=(N * n_rt,),
        in_specs=[
            pl.BlockSpec((s2, TH + ext, pW, cin_pad), lambda g: (g, 0, 0, 0)),
            pl.BlockSpec((9, cin_pad, cout_pad), lambda g: (0, 0, 0)),
            pl.BlockSpec((1, cout_pad), lambda g: (0, 0)),
            pl.BlockSpec(memory_space=pltpu.MemorySpace.SMEM),   # alpha scalar
        ],
        out_specs=pl.BlockSpec((1, TH * Wo, cout_pad), lambda g: (g, 0, 0)),
        compiler_params=pltpu.CompilerParams(
            dimension_semantics=("parallel",),
            vmem_limit_bytes=VMEM_LIMIT_BYTES),
        cost_estimate=pl.CostEstimate(flops=int(flops), transcendentals=0,
                                      bytes_accessed=int(bytes_accessed)),
    )(ph_sh, wt, bias, al)

    out = out.reshape(N, n_rt * TH, Wo, cout_pad)[:, :Ho]
    return out                                            # (N, Ho, Wo, Cout_pad)


# ----------------------------------------------------------------------------
# Parameter helpers (weight_norm folding) -- plain JAX glue
# ----------------------------------------------------------------------------
def _weight_norm(v, g):
    """PyTorch weight_norm, dim=0: w[o] = g[o] * v[o] / ||v[o]||_2."""
    norm = jnp.sqrt(jnp.sum(v * v, axis=(1, 2, 3), keepdims=True))
    return g.reshape(-1, 1, 1, 1) * v / norm


def init_bottleneck_params(key, in_planes, planes, stride, expansion=4):
    out_planes = expansion * planes
    keys = jax.random.split(key, 12)

    def conv_vg(kv, kg, cout, cin, k):
        v = 0.1 * jax.random.normal(kv, (cout, cin, k, k), jnp.float32)
        g = 0.5 + jax.random.uniform(kg, (cout,), jnp.float32)
        return v, g

    v1, g1 = conv_vg(keys[0], keys[1], planes, in_planes, 1)
    v2, g2 = conv_vg(keys[2], keys[3], planes, planes, 3)
    v3, g3 = conv_vg(keys[4], keys[5], out_planes, planes, 1)
    p = dict(
        v1=v1, g1=g1, b1=0.01 * jax.random.normal(keys[6], (planes,)),
        v2=v2, g2=g2, b2=0.01 * jax.random.normal(keys[7], (planes,)),
        v3=v3, g3=g3, b3=0.01 * jax.random.normal(keys[8], (out_planes,)),
        a1=jnp.array([0.10], jnp.float32),
        a2=jnp.array([-0.05], jnp.float32),
        a3=jnp.array([0.02], jnp.float32),
    )
    has_sc_conv = (stride != 1) or (in_planes != out_planes)
    if has_sc_conv:
        vsc, gsc = conv_vg(keys[9], keys[10], out_planes, in_planes, 1)
        p.update(vsc=vsc, gsc=gsc,
                 bsc=0.01 * jax.random.normal(keys[11], (out_planes,)))
    return p, has_sc_conv


# ----------------------------------------------------------------------------
# Bottleneck forward (Pallas)
# ----------------------------------------------------------------------------
def bottleneck_forward(x_nchw, p, stride, has_sc_conv):
    N, Cin, H, W = x_nchw.shape
    planes = p["v1"].shape[0]
    Cout = p["v3"].shape[0]
    Ho = (H + 2 - 3) // stride + 1
    Wo = (W + 2 - 3) // stride + 1
    M1, M2 = N * H * W, N * Ho * Wo

    w1 = _weight_norm(p["v1"], p["g1"])
    w2 = _weight_norm(p["v2"], p["g2"])
    w3 = _weight_norm(p["v3"], p["g3"])

    # TODO(synk): fuse the NCHW<->NHWC boundary transposes and the shortcut's
    # strided subsample into the Pallas index_maps; kept as one-pass XLA glue.
    x = jnp.transpose(x_nchw, (0, 2, 3, 1)).astype(jnp.bfloat16)   # NHWC, bf16 once

    # conv1 (1x1) + TReLU_1.  NOTE: padded output channels hold max(0, a1),
    # not 0; downstream weight rows for those channels are zero so it is safe.
    out1 = _matmul_bias_act(x.reshape(M1, Cin), w1.reshape(planes, Cin).T,
                            p["b1"], p["a1"], apply_trelu=True,
                            out_dtype=jnp.bfloat16)
    cpad1 = out1.shape[1]
    out1 = out1[:M1].reshape(N, H, W, cpad1)

    # conv2 (3x3, stride, pad=1) + TReLU_2 -- in-kernel 9-tap reduction
    out2 = _conv3x3(out1, w2, p["b2"], p["a2"], stride)
    cpad2 = out2.shape[-1]
    out2 = out2.reshape(M2, cpad2)

    # shortcut (carried in bf16; upcast inside conv3's fused epilogue)
    if has_sc_conv:
        wsc = _weight_norm(p["vsc"], p["gsc"])
        xs = x[:, ::stride, ::stride, :].reshape(M2, Cin)
        sc = _matmul_bias_act(xs, wsc.reshape(Cout, Cin).T, p["bsc"], 0.0,
                              apply_trelu=False, out_dtype=jnp.bfloat16)
    else:
        assert Cin == Cout and stride == 1, \
            "identity shortcut requires Cin == expansion*planes and stride == 1"
        sc = x.reshape(M2, Cin)

    # conv3 (1x1) + residual add + TReLU_3, fused epilogue
    w3m = jnp.pad(w3.reshape(Cout, planes).T, ((0, cpad2 - planes), (0, 0)))
    out3 = _matmul_bias_act(out2, w3m, p["b3"], p["a3"], sc=sc,
                            apply_trelu=True, out_dtype=jnp.float32)
    out3 = out3[:M2, :Cout].reshape(N, Ho, Wo, Cout)
    return jnp.transpose(out3, (0, 3, 1, 2))  # back to NCHW


# ----------------------------------------------------------------------------
# Pure-JAX reference (lax conv) for verification
# ----------------------------------------------------------------------------
def bottleneck_reference(x, p, stride, has_sc_conv, emulate_bf16=False):
    if emulate_bf16:
        cast = lambda t: t.astype(jnp.bfloat16).astype(jnp.float32)
    else:
        cast = lambda t: t

    def conv(x, w, b, s=1, pad=0):
        out = jax.lax.conv_general_dilated(
            cast(x), cast(w), (s, s), [(pad, pad), (pad, pad)],
            dimension_numbers=("NCHW", "OIHW", "NCHW"),
            precision=jax.lax.Precision.HIGHEST)
        return out + b.reshape(1, -1, 1, 1)

    def trelu(z, a):
        return jnp.maximum(z, a[0])   # == relu(z - a) + a

    w1 = _weight_norm(p["v1"], p["g1"])
    w2 = _weight_norm(p["v2"], p["g2"])
    w3 = _weight_norm(p["v3"], p["g3"])
    out = cast(trelu(conv(x, w1, p["b1"]), p["a1"]))                 # bf16 store
    out = cast(trelu(conv(out, w2, p["b2"], s=stride, pad=1), p["a2"]))
    out3 = conv(out, w3, p["b3"])
    if has_sc_conv:
        wsc = _weight_norm(p["vsc"], p["gsc"])
        sc = cast(conv(x, wsc, p["bsc"], s=stride))                  # bf16 residual
    else:
        sc = x
    return trelu(out3 + sc, p["a3"])


if __name__ == "__main__":
    key = jax.random.PRNGKey(0)
    kx, kp = jax.random.split(key)

    N, in_planes, planes, stride, H, W = 2, 8, 4, 2, 16, 16
    x = jax.random.normal(kx, (N, in_planes, H, W), jnp.float32)

    params, has_sc_conv = init_bottleneck_params(kp, in_planes, planes, stride)

    fwd = jax.jit(lambda t: bottleneck_forward(t, params, stride, has_sc_conv))
    out = jax.block_until_ready(fwd(x))

    # bf16-emulated f32 reference matches the kernel's bf16-operand /
    # f32-accumulate numerics, so the check isolates indexing/fusion bugs.
    ref = bottleneck_reference(x, params, stride, has_sc_conv,
                               emulate_bf16=True)
    np.testing.assert_allclose(np.asarray(out), np.asarray(ref),
                               rtol=2e-2, atol=2e-2)
    assert out.shape == (N, 4 * planes, H // stride, W // stride)
    print("KERNEL_OK")
</pallas_src>

<mosaic_0001>
module attributes {stable_mosaic.version = 11 : i64} {
  func.func @_mm_kernel_simple(%arg0: i32, %arg1: i32, %arg2: memref<128x8xbf16, #tpu.memory_space<vmem>>, %arg3: memref<8x128xbf16, #tpu.memory_space<vmem>>, %arg4: memref<1x128xf32, #tpu.memory_space<vmem>>, %arg5: memref<1x1xf32, #tpu.memory_space<smem>>, %arg6: memref<128x128xbf16, #tpu.memory_space<vmem>>) attributes {dimension_semantics = [#tpu.dimension_semantics<parallel>, #tpu.dimension_semantics<parallel>], iteration_bounds = array<i64: 1, 1>, scalar_prefetch = 0 : i64, scratch_operands = 0 : i64, tpu.core_type = #tpu.core_type<tc>, window_params = [{transform_indices = @transform_0, window_bounds = array<i64: 128, 8>}, {transform_indices = @transform_1, window_bounds = array<i64: 8, 128>}, {transform_indices = @transform_2, window_bounds = array<i64: 1, 128>}, {transform_indices = @transform_3, window_bounds = array<i64: 1, 1>}, {transform_indices = @transform_4, window_bounds = array<i64: 128, 128>}]} {
    %c0 = arith.constant 0 : index
    %c0_0 = arith.constant 0 : index
    %0 = vector.load %arg2[%c0, %c0_0] : memref<128x8xbf16, #tpu.memory_space<vmem>>, vector<128x8xbf16>
    %c0_1 = arith.constant 0 : index
    %c0_2 = arith.constant 0 : index
    %1 = vector.load %arg3[%c0_1, %c0_2] : memref<8x128xbf16, #tpu.memory_space<vmem>>, vector<8x128xbf16>
    %cst = arith.constant dense<0.000000e+00> : vector<128x128xf32>
    %2 = tpu.matmul %0, %1, %cst {dimension_numbers = #tpu.dot_dimension_numbers<[1], [0], [0], [1], [0, 0, 1, 1], [], []>} : vector<128x8xbf16>, vector<8x128xbf16>, vector<128x128xf32> -> vector<128x128xf32>
    %c0_3 = arith.constant 0 : index
    %c0_4 = arith.constant 0 : index
    %3 = vector.load %arg4[%c0_3, %c0_4] : memref<1x128xf32, #tpu.memory_space<vmem>>, vector<1x128xf32>
    %4 = vector.broadcast %3 : vector<1x128xf32> to vector<128x128xf32>
    %5 = arith.addf %2, %4 : vector<128x128xf32>
    %6 = arith.truncf %5 : vector<128x128xf32> to vector<128x128xbf16>
    %c0_5 = arith.constant 0 : index
    %c0_6 = arith.constant 0 : index
    %7 = vector.load %arg6[%c0_5, %c0_6] : memref<128x128xbf16, #tpu.memory_space<vmem>>, vector<128x128xbf16>
    tpu.vector_store %arg6[%c0_5, %c0_6], %6 {strides = array<i32>} : memref<128x128xbf16, #tpu.memory_space<vmem>>, vector<128x128xbf16>,
    return
  }
  func.func @transform_0(%arg0: i32, %arg1: i32) -> (i32, i32) {
    %c0_i32 = arith.constant 0 : i32
    %c0_i32_0 = arith.constant 0 : i32
    return %arg0, %c0_i32 : i32, i32
  }
  func.func @transform_1(%arg0: i32, %arg1: i32) -> (i32, i32) {
    %c0_i32 = arith.constant 0 : i32
    %c0_i32_0 = arith.constant 0 : i32
    return %c0_i32, %arg1 : i32, i32
  }
  func.func @transform_2(%arg0: i32, %arg1: i32) -> (i32, i32) {
    %c0_i32 = arith.constant 0 : i32
    %c0_i32_0 = arith.constant 0 : i32
    return %c0_i32, %arg1 : i32, i32
  }
  func.func @transform_3(%arg0: i32, %arg1: i32) -> (i32, i32) {
    %c0_i32 = arith.constant 0 : i32
    %c0_i32_0 = arith.constant 0 : i32
    %c0_i32_1 = arith.constant 0 : i32
    return %c0_i32, %c0_i32_0 : i32, i32
  }
  func.func @transform_4(%arg0: i32, %arg1: i32) -> (i32, i32) {
    %c0_i32 = arith.constant 0 : i32
    return %arg0, %arg1 : i32, i32
  }
}

module attributes {stable_mosaic.version = 11 : i64} {
  func.func @_mm_kernel_simple(%arg0: i32, %arg1: i32, %arg2: memref<512x8xbf16, #tpu.memory_space<vmem>>, %arg3: memref<8x128xbf16, #tpu.memory_space<vmem>>, %arg4: memref<1x128xf32, #tpu.memory_space<vmem>>, %arg5: memref<1x1xf32, #tpu.memory_space<smem>>, %arg6: memref<512x128xbf16, #tpu.memory_space<vmem>>) attributes {dimension_semantics = [#tpu.dimension_semantics<parallel>, #tpu.dimension_semantics<parallel>], iteration_bounds = array<i64: 1, 1>, scalar_prefetch = 0 : i64, scratch_operands = 0 : i64, tpu.core_type = #tpu.core_type<tc>, window_params = [{transform_indices = @transform_0, window_bounds = array<i64: 512, 8>}, {transform_indices = @transform_1, window_bounds = array<i64: 8, 128>}, {transform_indices = @transform_2, window_bounds = array<i64: 1, 128>}, {transform_indices = @transform_3, window_bounds = array<i64: 1, 1>}, {transform_indices = @transform_4, window_bounds = array<i64: 512, 128>}]} {
    %c0 = arith.constant 0 : index
    %c0_0 = arith.constant 0 : index
    %0 = vector.load %arg2[%c0, %c0_0] : memref<512x8xbf16, #tpu.memory_space<vmem>>, vector<512x8xbf16>
    %c0_1 = arith.constant 0 : index
    %c0_2 = arith.constant 0 : index
    %1 = vector.load %arg3[%c0_1, %c0_2] : memref<8x128xbf16, #tpu.memory_space<vmem>>, vector<8x128xbf16>
    %cst = arith.constant dense<0.000000e+00> : vector<512x128xf32>
    %2 = tpu.matmul %0, %1, %cst {dimension_numbers = #tpu.dot_dimension_numbers<[1], [0], [0], [1], [0, 0, 1, 1], [], []>} : vector<512x8xbf16>, vector<8x128xbf16>, vector<512x128xf32> -> vector<512x128xf32>
    %c0_3 = arith.constant 0 : index
    %c0_4 = arith.constant 0 : index
    %3 = vector.load %arg4[%c0_3, %c0_4] : memref<1x128xf32, #tpu.memory_space<vmem>>, vector<1x128xf32>
    %4 = vector.broadcast %3 : vector<1x128xf32> to vector<512x128xf32>
    %5 = arith.addf %2, %4 : vector<512x128xf32>
    %c0_5 = arith.constant 0 : index
    %c0_6 = arith.constant 0 : index
    %6 = memref.load %arg5[%c0_5, %c0_6] : memref<1x1xf32, #tpu.memory_space<smem>>
    %7 = vector.broadcast %6 : f32 to vector<512x128xf32>
    %8 = arith.maximumf %5, %7 : vector<512x128xf32>
    %9 = arith.truncf %8 : vector<512x128xf32> to vector<512x128xbf16>
    %c0_7 = arith.constant 0 : index
    %c0_8 = arith.constant 0 : index
    %10 = vector.load %arg6[%c0_7, %c0_8] : memref<512x128xbf16, #tpu.memory_space<vmem>>, vector<512x128xbf16>
    tpu.vector_store %arg6[%c0_7, %c0_8], %9 {strides = array<i32>} : memref<512x128xbf16, #tpu.memory_space<vmem>>, vector<512x128xbf16>,
    return
  }
  func.func @transform_0(%arg0: i32, %arg1: i32) -> (i32, i32) {
    %c0_i32 = arith.constant 0 : i32
    %c0_i32_0 = arith.constant 0 : i32
    return %arg0, %c0_i32 : i32, i32
  }
  func.func @transform_1(%arg0: i32, %arg1: i32) -> (i32, i32) {
    %c0_i32 = arith.constant 0 : i32
    %c0_i32_0 = arith.constant 0 : i32
    return %c0_i32, %arg1 : i32, i32
  }
  func.func @transform_2(%arg0: i32, %arg1: i32) -> (i32, i32) {
    %c0_i32 = arith.constant 0 : i32
    %c0_i32_0 = arith.constant 0 : i32
    return %c0_i32, %arg1 : i32, i32
  }
  func.func @transform_3(%arg0: i32, %arg1: i32) -> (i32, i32) {
    %c0_i32 = arith.constant 0 : i32
    %c0_i32_0 = arith.constant 0 : i32
    %c0_i32_1 = arith.constant 0 : i32
    return %c0_i32, %c0_i32_0 : i32, i32
  }
  func.func @transform_4(%arg0: i32, %arg1: i32) -> (i32, i32) {
    %c0_i32 = arith.constant 0 : i32
    return %arg0, %arg1 : i32, i32
  }
}

module attributes {stable_mosaic.version = 11 : i64} {
  func.func @_conv3x3_kernel(%arg0: i32, %arg1: memref<4x5x9x128xbf16, #tpu.memory_space<vmem>>, %arg2: memref<9x128x128xbf16, #tpu.memory_space<vmem>>, %arg3: memref<1x128xf32, #tpu.memory_space<vmem>>, %arg4: memref<1x1xf32, #tpu.memory_space<smem>>, %arg5: memref<1x32x128xbf16, #tpu.memory_space<vmem>>) attributes {dimension_semantics = [#tpu.dimension_semantics<parallel>], iteration_bounds = array<i64: 4>, scalar_prefetch = 0 : i64, scratch_operands = 0 : i64, tpu.core_type = #tpu.core_type<tc>, window_params = [{transform_indices = @transform_0, window_bounds = array<i64: 4, 5, 9, 128>}, {pipeline_mode = #tpu.pipeline_mode<synchronous>, transform_indices = @transform_1, window_bounds = array<i64: 9, 128, 128>}, {pipeline_mode = #tpu.pipeline_mode<synchronous>, transform_indices = @transform_2, window_bounds = array<i64: 1, 128>}, {transform_indices = @transform_3, window_bounds = array<i64: 1, 1>}, {transform_indices = @transform_4, window_bounds = array<i64: 1, 32, 128>}]} {
    %cst = arith.constant 0.000000e+00 : f32
    %0 = vector.broadcast %cst : f32 to vector<32x128xf32>
    %c0 = arith.constant 0 : index
    %c0_0 = arith.constant 0 : index
    %c0_1 = arith.constant 0 : index
    %c0_2 = arith.constant 0 : index
    %1 = vector.load %arg1[%c0, %c0_0, %c0_1, %c0_2] : memref<4x5x9x128xbf16, #tpu.memory_space<vmem>>, vector<1x4x8x128xbf16>
    %2 = vector.shape_cast %1 : vector<1x4x8x128xbf16> to vector<4x8x128xbf16>
    %3 = vector.shape_cast %2 : vector<4x8x128xbf16> to vector<32x128xbf16>
    %c0_3 = arith.constant 0 : index
    %c0_4 = arith.constant 0 : index
    %c0_5 = arith.constant 0 : index
    %4 = vector.load %arg2[%c0_3, %c0_4, %c0_5] : memref<9x128x128xbf16, #tpu.memory_space<vmem>>, vector<1x128x128xbf16>
    %5 = vector.shape_cast %4 : vector<1x128x128xbf16> to vector<128x128xbf16>
    %cst_6 = arith.constant dense<0.000000e+00> : vector<32x128xf32>
    %6 = tpu.matmul %3, %5, %cst_6 {dimension_numbers = #tpu.dot_dimension_numbers<[1], [0], [0], [1], [0, 0, 1, 1], [], []>} : vector<32x128xbf16>, vector<128x128xbf16>, vector<32x128xf32> -> vector<32x128xf32>
    %7 = arith.addf %0, %6 : vector<32x128xf32>
    %c1 = arith.constant 1 : index
    %c0_7 = arith.constant 0 : index
    %c0_8 = arith.constant 0 : index
    %c0_9 = arith.constant 0 : index
    %8 = vector.load %arg1[%c1, %c0_7, %c0_8, %c0_9] : memref<4x5x9x128xbf16, #tpu.memory_space<vmem>>, vector<1x4x8x128xbf16>
    %9 = vector.shape_cast %8 : vector<1x4x8x128xbf16> to vector<4x8x128xbf16>
    %10 = vector.shape_cast %9 : vector<4x8x128xbf16> to vector<32x128xbf16>
    %c1_10 = arith.constant 1 : index
    %c0_11 = arith.constant 0 : index
    %c0_12 = arith.constant 0 : index
    %11 = vector.load %arg2[%c1_10, %c0_11, %c0_12] : memref<9x128x128xbf16, #tpu.memory_space<vmem>>, vector<1x128x128xbf16>
    %12 = vector.shape_cast %11 : vector<1x128x128xbf16> to vector<128x128xbf16>
    %cst_13 = arith.constant dense<0.000000e+00> : vector<32x128xf32>
    %13 = tpu.matmul %10, %12, %cst_13 {dimension_numbers = #tpu.dot_dimension_numbers<[1], [0], [0], [1], [0, 0, 1, 1], [], []>} : vector<32x128xbf16>, vector<128x128xbf16>, vector<32x128xf32> -> vector<32x128xf32>
    %14 = arith.addf %7, %13 : vector<32x128xf32>
    %c0_14 = arith.constant 0 : index
    %c0_15 = arith.constant 0 : index
    %c1_16 = arith.constant 1 : index
    %c0_17 = arith.constant 0 : index
    %15 = vector.load %arg1[%c0_14, %c0_15, %c1_16, %c0_17] : memref<4x5x9x128xbf16, #tpu.memory_space<vmem>>, vector<1x4x8x128xbf16>
    %16 = vector.shape_cast %15 : vector<1x4x8x128xbf16> to vector<4x8x128xbf16>
    %17 = vector.shape_cast %16 : vector<4x8x128xbf16> to vector<32x128xbf16>
    %c2 = arith.constant 2 : index
    %c0_18 = arith.constant 0 : index
    %c0_19 = arith.constant 0 : index
    %18 = vector.load %arg2[%c2, %c0_18, %c0_19] : memref<9x128x128xbf16, #tpu.memory_space<vmem>>, vector<1x128x128xbf16>
    %19 = vector.shape_cast %18 : vector<1x128x128xbf16> to vector<128x128xbf16>
    %cst_20 = arith.constant dense<0.000000e+00> : vector<32x128xf32>
    %20 = tpu.matmul %17, %19, %cst_20 {dimension_numbers = #tpu.dot_dimension_numbers<[1], [0], [0], [1], [0, 0, 1, 1], [], []>} : vector<32x128xbf16>, vector<128x128xbf16>, vector<32x128xf32> -> vector<32x128xf32>
    %21 = arith.addf %14, %20 : vector<32x128xf32>
    %c2_21 = arith.constant 2 : index
    %c0_22 = arith.constant 0 : index
    %c0_23 = arith.constant 0 : index
    %c0_24 = arith.constant 0 : index
    %22 = vector.load %arg1[%c2_21, %c0_22, %c0_23, %c0_24] : memref<4x5x9x128xbf16, #tpu.memory_space<vmem>>, vector<1x4x8x128xbf16>
    %23 = vector.shape_cast %22 : vector<1x4x8x128xbf16> to vector<4x8x128xbf16>
    %24 = vector.shape_cast %23 : vector<4x8x128xbf16> to vector<32x128xbf16>
    %c3 = arith.constant 3 : index
    %c0_25 = arith.constant 0 : index
    %c0_26 = arith.constant 0 : index
    %25 = vector.load %arg2[%c3, %c0_25, %c0_26] : memref<9x128x128xbf16, #tpu.memory_space<vmem>>, vector<1x128x128xbf16>
    %26 = vector.shape_cast %25 : vector<1x128x128xbf16> to vector<128x128xbf16>
    %cst_27 = arith.constant dense<0.000000e+00> : vector<32x128xf32>
    %27 = tpu.matmul %24, %26, %cst_27 {dimension_numbers = #tpu.dot_dimension_numbers<[1], [0], [0], [1], [0, 0, 1, 1], [], []>} : vector<32x128xbf16>, vector<128x128xbf16>, vector<32x128xf32> -> vector<32x128xf32>
    %28 = arith.addf %21, %27 : vector<32x128xf32>
    %c3_28 = arith.constant 3 : index
    %c0_29 = arith.constant 0 : index
    %c0_30 = arith.constant 0 : index
    %c0_31 = arith.constant 0 : index
    %29 = vector.load %arg1[%c3_28, %c0_29, %c0_30, %c0_31] : memref<4x5x9x128xbf16, #tpu.memory_space<vmem>>, vector<1x4x8x128xbf16>
    %30 = vector.shape_cast %29 : vector<1x4x8x128xbf16> to vector<4x8x128xbf16>
    %31 = vector.shape_cast %30 : vector<4x8x128xbf16> to vector<32x128xbf16>
    %c4 = arith.constant 4 : index
    %c0_32 = arith.constant 0 : index
    %c0_33 = arith.constant 0 : index
    %32 = vector.load %arg2[%c4, %c0_32, %c0_33] : memref<9x128x128xbf16, #tpu.memory_space<vmem>>, vector<1x128x128xbf16>
    %33 = vector.shape_cast %32 : vector<1x128x128xbf16> to vector<128x128xbf16>
    %cst_34 = arith.constant dense<0.000000e+00> : vector<32x128xf32>
    %34 = tpu.matmul %31, %33, %cst_34 {dimension_numbers = #tpu.dot_dimension_numbers<[1], [0], [0], [1], [0, 0, 1, 1], [], []>} : vector<32x128xbf16>, vector<128x128xbf16>, vector<32x128xf32> -> vector<32x128xf32>
    %35 = arith.addf %28, %34 : vector<32x128xf32>
    %c2_35 = arith.constant 2 : index
    %c0_36 = arith.constant 0 : index
    %c1_37 = arith.constant 1 : index
    %c0_38 = arith.constant 0 : index
    %36 = vector.load %arg1[%c2_35, %c0_36, %c1_37, %c0_38] : memref<4x5x9x128xbf16, #tpu.memory_space<vmem>>, vector<1x4x8x128xbf16>
    %37 = vector.shape_cast %36 : vector<1x4x8x128xbf16> to vector<4x8x128xbf16>
    %38 = vector.shape_cast %37 : vector<4x8x128xbf16> to vector<32x128xbf16>
    %c5 = arith.constant 5 : index
    %c0_39 = arith.constant 0 : index
    %c0_40 = arith.constant 0 : index
    %39 = vector.load %arg2[%c5, %c0_39, %c0_40] : memref<9x128x128xbf16, #tpu.memory_space<vmem>>, vector<1x128x128xbf16>
    %40 = vector.shape_cast %39 : vector<1x128x128xbf16> to vector<128x128xbf16>
    %cst_41 = arith.constant dense<0.000000e+00> : vector<32x128xf32>
    %41 = tpu.matmul %38, %40, %cst_41 {dimension_numbers = #tpu.dot_dimension_numbers<[1], [0], [0], [1], [0, 0, 1, 1], [], []>} : vector<32x128xbf16>, vector<128x128xbf16>, vector<32x128xf32> -> vector<32x128xf32>
    %42 = arith.addf %35, %41 : vector<32x128xf32>
    %c0_42 = arith.constant 0 : index
    %c1_43 = arith.constant 1 : index
    %c0_44 = arith.constant 0 : index
    %c0_45 = arith.constant 0 : index
    %43 = vector.load %arg1[%c0_42, %c1_43, %c0_44, %c0_45] : memref<4x5x9x128xbf16, #tpu.memory_space<vmem>>, vector<1x4x8x128xbf16>
    %44 = vector.shape_cast %43 : vector<1x4x8x128xbf16> to vector<4x8x128xbf16>
    %45 = vector.shape_cast %44 : vector<4x8x128xbf16> to vector<32x128xbf16>
    %c6 = arith.constant 6 : index
    %c0_46 = arith.constant 0 : index
    %c0_47 = arith.constant 0 : index
    %46 = vector.load %arg2[%c6, %c0_46, %c0_47] : memref<9x128x128xbf16, #tpu.memory_space<vmem>>, vector<1x128x128xbf16>
    %47 = vector.shape_cast %46 : vector<1x128x128xbf16> to vector<128x128xbf16>
    %cst_48 = arith.constant dense<0.000000e+00> : vector<32x128xf32>
    %48 = tpu.matmul %45, %47, %cst_48 {dimension_numbers = #tpu.dot_dimension_numbers<[1], [0], [0], [1], [0, 0, 1, 1], [], []>} : vector<32x128xbf16>, vector<128x128xbf16>, vector<32x128xf32> -> vector<32x128xf32>
    %49 = arith.addf %42, %48 : vector<32x128xf32>
    %c1_49 = arith.constant 1 : index
    %c1_50 = arith.constant 1 : index
    %c0_51 = arith.constant 0 : index
    %c0_52 = arith.constant 0 : index
    %50 = vector.load %arg1[%c1_49, %c1_50, %c0_51, %c0_52] : memref<4x5x9x128xbf16, #tpu.memory_space<vmem>>, vector<1x4x8x128xbf16>
    %51 = vector.shape_cast %50 : vector<1x4x8x128xbf16> to vector<4x8x128xbf16>
    %52 = vector.shape_cast %51 : vector<4x8x128xbf16> to vector<32x128xbf16>
    %c7 = arith.constant 7 : index
    %c0_53 = arith.constant 0 : index
    %c0_54 = arith.constant 0 : index
    %53 = vector.load %arg2[%c7, %c0_53, %c0_54] : memref<9x128x128xbf16, #tpu.memory_space<vmem>>, vector<1x128x128xbf16>
    %54 = vector.shape_cast %53 : vector<1x128x128xbf16> to vector<128x128xbf16>
    %cst_55 = arith.constant dense<0.000000e+00> : vector<32x128xf32>
    %55 = tpu.matmul %52, %54, %cst_55 {dimension_numbers = #tpu.dot_dimension_numbers<[1], [0], [0], [1], [0, 0, 1, 1], [], []>} : vector<32x128xbf16>, vector<128x128xbf16>, vector<32x128xf32> -> vector<32x128xf32>
    %56 = arith.addf %49, %55 : vector<32x128xf32>
    %c0_56 = arith.constant 0 : index
    %c1_57 = arith.constant 1 : index
    %c1_58 = arith.constant 1 : index
    %c0_59 = arith.constant 0 : index
    %57 = vector.load %arg1[%c0_56, %c1_57, %c1_58, %c0_59] : memref<4x5x9x128xbf16, #tpu.memory_space<vmem>>, vector<1x4x8x128xbf16>
    %58 = vector.shape_cast %57 : vector<1x4x8x128xbf16> to vector<4x8x128xbf16>
    %59 = vector.shape_cast %58 : vector<4x8x128xbf16> to vector<32x128xbf16>
    %c8 = arith.constant 8 : index
    %c0_60 = arith.constant 0 : index
    %c0_61 = arith.constant 0 : index
    %60 = vector.load %arg2[%c8, %c0_60, %c0_61] : memref<9x128x128xbf16, #tpu.memory_space<vmem>>, vector<1x128x128xbf16>
    %61 = vector.shape_cast %60 : vector<1x128x128xbf16> to vector<128x128xbf16>
    %cst_62 = arith.constant dense<0.000000e+00> : vector<32x128xf32>
    %62 = tpu.matmul %59, %61, %cst_62 {dimension_numbers = #tpu.dot_dimension_numbers<[1], [0], [0], [1], [0, 0, 1, 1], [], []>} : vector<32x128xbf16>, vector<128x128xbf16>, vector<32x128xf32> -> vector<32x128xf32>
    %63 = arith.addf %56, %62 : vector<32x128xf32>
    %c0_63 = arith.constant 0 : index
    %c0_64 = arith.constant 0 : index
    %64 = vector.load %arg3[%c0_63, %c0_64] : memref<1x128xf32, #tpu.memory_space<vmem>>, vector<1x128xf32>
    %65 = vector.broadcast %64 : vector<1x128xf32> to vector<32x128xf32>
    %66 = arith.addf %63, %65 : vector<32x128xf32>
    %c0_65 = arith.constant 0 : index
    %c0_66 = arith.constant 0 : index
    %67 = memref.load %arg4[%c0_65, %c0_66] : memref<1x1xf32, #tpu.memory_space<smem>>
    %68 = vector.broadcast %67 : f32 to vector<32x128xf32>
    %69 = arith.maximumf %66, %68 : vector<32x128xf32>
    %70 = arith.truncf %69 : vector<32x128xf32> to vector<32x128xbf16>
    %c0_67 = arith.constant 0 : index
    %c0_68 = arith.constant 0 : index
    %c0_69 = arith.constant 0 : index
    %71 = vector.load %arg5[%c0_67, %c0_68, %c0_69] : memref<1x32x128xbf16, #tpu.memory_space<vmem>>, vector<1x32x128xbf16>
    %72 = vector.shape_cast %71 : vector<1x32x128xbf16> to vector<32x128xbf16>
    %73 = vector.shape_cast %70 : vector<32x128xbf16> to vector<1x32x128xbf16>
    tpu.vector_store %arg5[%c0_67, %c0_68, %c0_69], %73 {strides = array<i32>} : memref<1x32x128xbf16, #tpu.memory_space<vmem>>, vector<1x32x128xbf16>,
    return
  }
  func.func @transform_0(%arg0: i32) -> (i32, i32, i32, i32) {
    %c0_i32 = arith.constant 0 : i32
    %c0_i32_0 = arith.constant 0 : i32
    %c0_i32_1 = arith.constant 0 : i32
    %c0_i32_2 = arith.constant 0 : i32
    return %arg0, %c0_i32, %c0_i32_0, %c0_i32_1 : i32, i32, i32, i32
  }
  func.func @transform_1(%arg0: i32) -> (i32, i32, i32) {
    %c0_i32 = arith.constant 0 : i32
    %c0_i32_0 = arith.constant 0 : i32
    %c0_i32_1 = arith.constant 0 : i32
    %c0_i32_2 = arith.constant 0 : i32
    return %c0_i32, %c0_i32_0, %c0_i32_1 : i32, i32, i32
  }
  func.func @transform_2(%arg0: i32) -> (i32, i32) {
    %c0_i32 = arith.constant 0 : i32
    %c0_i32_0 = arith.constant 0 : i32
    %c0_i32_1 = arith.constant 0 : i32
    return %c0_i32, %c0_i32_0 : i32, i32
  }
  func.func @transform_3(%arg0: i32) -> (i32, i32) {
    %c0_i32 = arith.constant 0 : i32
    %c0_i32_0 = arith.constant 0 : i32
    %c0_i32_1 = arith.constant 0 : i32
    return %c0_i32, %c0_i32_0 : i32, i32
  }
  func.func @transform_4(%arg0: i32) -> (i32, i32, i32) {
    %c0_i32 = arith.constant 0 : i32
    %c0_i32_0 = arith.constant 0 : i32
    %c0_i32_1 = arith.constant 0 : i32
    return %arg0, %c0_i32, %c0_i32_0 : i32, i32, i32
  }
}

module attributes {stable_mosaic.version = 11 : i64} {
  func.func @_mm_kernel_simple(%arg0: i32, %arg1: i32, %arg2: memref<128x128xbf16, #tpu.memory_space<vmem>>, %arg3: memref<128x128xbf16, #tpu.memory_space<vmem>>, %arg4: memref<1x128xf32, #tpu.memory_space<vmem>>, %arg5: memref<1x1xf32, #tpu.memory_space<smem>>, %arg6: memref<128x128xbf16, #tpu.memory_space<vmem>>, %arg7: memref<128x128xf32, #tpu.memory_space<vmem>>) attributes {dimension_semantics = [#tpu.dimension_semantics<parallel>, #tpu.dimension_semantics<parallel>], iteration_bounds = array<i64: 1, 1>, scalar_prefetch = 0 : i64, scratch_operands = 0 : i64, tpu.core_type = #tpu.core_type<tc>, window_params = [{transform_indices = @transform_0, window_bounds = array<i64: 128, 128>}, {transform_indices = @transform_1, window_bounds = array<i64: 128, 128>}, {transform_indices = @transform_2, window_bounds = array<i64: 1, 128>}, {transform_indices = @transform_3, window_bounds = array<i64: 1, 1>}, {transform_indices = @transform_4, window_bounds = array<i64: 128, 128>}, {transform_indices = @transform_5, window_bounds = array<i64: 128, 128>}]} {
    %c0 = arith.constant 0 : index
    %c0_0 = arith.constant 0 : index
    %0 = vector.load %arg2[%c0, %c0_0] : memref<128x128xbf16, #tpu.memory_space<vmem>>, vector<128x128xbf16>
    %c0_1 = arith.constant 0 : index
    %c0_2 = arith.constant 0 : index
    %1 = vector.load %arg3[%c0_1, %c0_2] : memref<128x128xbf16, #tpu.memory_space<vmem>>, vector<128x128xbf16>
    %cst = arith.constant dense<0.000000e+00> : vector<128x128xf32>
    %2 = tpu.matmul %0, %1, %cst {dimension_numbers = #tpu.dot_dimension_numbers<[1], [0], [0], [1], [0, 0, 1, 1], [], []>} : vector<128x128xbf16>, vector<128x128xbf16>, vector<128x128xf32> -> vector<128x128xf32>
    %c0_3 = arith.constant 0 : index
    %c0_4 = arith.constant 0 : index
    %3 = vector.load %arg4[%c0_3, %c0_4] : memref<1x128xf32, #tpu.memory_space<vmem>>, vector<1x128xf32>
    %4 = vector.broadcast %3 : vector<1x128xf32> to vector<128x128xf32>
    %5 = arith.addf %2, %4 : vector<128x128xf32>
    %c0_5 = arith.constant 0 : index
    %c0_6 = arith.constant 0 : index
    %6 = vector.load %arg6[%c0_5, %c0_6] : memref<128x128xbf16, #tpu.memory_space<vmem>>, vector<128x128xbf16>
    %7 = arith.extf %6 : vector<128x128xbf16> to vector<128x128xf32>
    %8 = arith.addf %5, %7 : vector<128x128xf32>
    %c0_7 = arith.constant 0 : index
    %c0_8 = arith.constant 0 : index
    %9 = memref.load %arg5[%c0_7, %c0_8] : memref<1x1xf32, #tpu.memory_space<smem>>
    %10 = vector.broadcast %9 : f32 to vector<128x128xf32>
    %11 = arith.maximumf %8, %10 : vector<128x128xf32>
    %c0_9 = arith.constant 0 : index
    %c0_10 = arith.constant 0 : index
    %12 = vector.load %arg7[%c0_9, %c0_10] : memref<128x128xf32, #tpu.memory_space<vmem>>, vector<128x128xf32>
    tpu.vector_store %arg7[%c0_9, %c0_10], %11 {strides = array<i32>} : memref<128x128xf32, #tpu.memory_space<vmem>>, vector<128x128xf32>,
    return
  }
  func.func @transform_0(%arg0: i32, %arg1: i32) -> (i32, i32) {
    %c0_i32 = arith.constant 0 : i32
    %c0_i32_0 = arith.constant 0 : i32
    return %arg0, %c0_i32 : i32, i32
  }
  func.func @transform_1(%arg0: i32, %arg1: i32) -> (i32, i32) {
    %c0_i32 = arith.constant 0 : i32
    %c0_i32_0 = arith.constant 0 : i32
    return %c0_i32, %arg1 : i32, i32
  }
  func.func @transform_2(%arg0: i32, %arg1: i32) -> (i32, i32) {
    %c0_i32 = arith.constant 0 : i32
    %c0_i32_0 = arith.constant 0 : i32
    return %c0_i32, %arg1 : i32, i32
  }
  func.func @transform_3(%arg0: i32, %arg1: i32) -> (i32, i32) {
    %c0_i32 = arith.constant 0 : i32
    %c0_i32_0 = arith.constant 0 : i32
    %c0_i32_1 = arith.constant 0 : i32
    return %c0_i32, %c0_i32_0 : i32, i32
  }
  func.func @transform_4(%arg0: i32, %arg1: i32) -> (i32, i32) {
    %c0_i32 = arith.constant 0 : i32
    return %arg0, %arg1 : i32, i32
  }
  func.func @transform_5(%arg0: i32, %arg1: i32) -> (i32, i32) {
    %c0_i32 = arith.constant 0 : i32
    return %arg0, %arg1 : i32, i32
  }
}

</mosaic_0001>

<llo_original>
// kernel: _lambda_.6
$region0: #{_lambda_.6}
  #allocation0 [shape = 'u32[]', space=smem, size = 0x4, offset = 0x4, fixed_abs, tag = 'smem constant byte address 0x4 - core index']
  #allocation1 [shape = 'u32[144,128]{1,0:T(1,128)}', space=vmem, size = 0x12000, scoped, tag = 'internal scratch']
  #allocation2 [shape = 'f32[1,1]{1,0:T(1,128)S(6)}', space=smem, size = 0x200, scoped, tag = 'scoped memory for _lambda_.6']
  %s0 = inlined_call_operand.vmem [shape: bf16[128,8], index: 0, kind: input, shape index: {}]
  %s1 = inlined_call_operand.vmem [shape: bf16[8,128], index: 1, kind: input, shape index: {}]
  %s2 = inlined_call_operand.vmem [shape: f32[1,128], index: 2, kind: input, shape index: {}]
  %s3 = inlined_call_operand.<no memory space> [shape: f32[1,1], index: 3, kind: input, shape index: {}]
  %s4 = inlined_call_operand.vmem [shape: bf16[128,128], index: 4, kind: output, shape index: {}]
  %s5 = sld [smem:[#allocation0]]
  $region26: #{_lambda_.6} parent=0
    _
  %s7 = ssub.s32 1, %s5
  %s8 = scalar_select 0, %s7, %s5
  %9 = sst [smem:[#allocation2]] %s3
  // Predicated region
  $region2: #{_lambda_.6} parent=0 // pred_check
    _
  $region3: #{_lambda_.6} parent=0 // pred_check_branch
    %11 = sbr.rel (0) target = $region5
  $region4: #{_lambda_.6} parent=0 // pred_region
    _
  $region5: #{_lambda_.6} parent=0 // pred_fallthru
    _
  // Predicated region
  $region6: #{_lambda_.6} parent=0 // pred_check
    _
  $region7: #{_lambda_.6} parent=0 // pred_check_branch
    %13 = sbr.rel (0) target = $region9
  $region8: #{_lambda_.6} parent=0 // pred_region
    _
  $region9: #{_lambda_.6} parent=0 // pred_fallthru
    _
  // Predicated region
  $region10: #{_lambda_.6} parent=0 // pred_check
    _
  $region11: #{_lambda_.6} parent=0 // pred_check_branch
    %15 = sbr.rel (0) target = $region13
  $region12: #{_lambda_.6} parent=0 // pred_region
    _
  $region13: #{_lambda_.6} parent=0 // pred_fallthru
    _
  // Predicated region
  $region14: #{_lambda_.6} parent=0 // pred_check
    _
  $region15: #{_lambda_.6} parent=0 // pred_check_branch
    %17 = sbr.rel (0) target = $region17
  $region16: #{_lambda_.6} parent=0 // pred_region
    _
  $region17: #{_lambda_.6} parent=0 // pred_fallthru
    _
  %v19 = vld [vmem:[%s0] sm:$0xf]
  %v20 = vld [vmem:[%s0 + $0x4] sm:$0xf]
  %v21 = vld [vmem:[%s0 + $0x8] sm:$0xf]
  %v22 = vld [vmem:[%s0 + $0xc] sm:$0xf]
  %v23 = vld [vmem:[%s0 + $0x10] sm:$0xf]
  %v24 = vld [vmem:[%s0 + $0x14] sm:$0xf]
  %v25 = vld [vmem:[%s0 + $0x18] sm:$0xf]
  %v26 = vld [vmem:[%s0 + $0x1c] sm:$0xf]
  %v27 = vld [vmem:[%s0 + $0x20] sm:$0xf]
  %v28 = vld [vmem:[%s0 + $0x24] sm:$0xf]
  %v29 = vld [vmem:[%s0 + $0x28] sm:$0xf]
  %v30 = vld [vmem:[%s0 + $0x2c] sm:$0xf]
  %v31 = vld [vmem:[%s0 + $0x30] sm:$0xf]
  %v32 = vld [vmem:[%s0 + $0x34] sm:$0xf]
  %v33 = vld [vmem:[%s0 + $0x38] sm:$0xf]
  %v34 = vld [vmem:[%s0 + $0x3c] sm:$0xf]
  %v35 = vld [vmem:[%s1] sm:$0xf]
  %v36 = vld [vmem:[%s2] sm:$0x1]
  %v38 = vlaneseq
  %v39 = vshrl.u32 %v38, 7
  %v40 = vsub.s32 0, %v39
  %v41 = vrot.slane %v36, %v40
  %v59 = vunpack.c.l.b16 %v19
  %v60 = vunpack.c.l.b16 %v20
  %v61 = vunpack.c.l.b16 %v21
  %v62 = vunpack.c.l.b16 %v22
  %v63 = vunpack.c.l.b16 %v23
  %v64 = vunpack.c.l.b16 %v24
  %v65 = vunpack.c.l.b16 %v25
  %v66 = vunpack.c.l.b16 %v26
  %v67 = vunpack.c.l.b16 %v27
  %v68 = vunpack.c.l.b16 %v28
  %v69 = vunpack.c.l.b16 %v29
  %v70 = vunpack.c.l.b16 %v30
  %v71 = vunpack.c.l.b16 %v31
  %v72 = vunpack.c.l.b16 %v32
  %v73 = vunpack.c.l.b16 %v33
  %v74 = vunpack.c.l.b16 %v34
  %v75 = vpack.c.b16 %v60, %v59
  %v76 = vpack.c.b16 %v62, %v61
  %v77 = vpack.c.b16 %v64, %v63
  %v78 = vpack.c.b16 %v66, %v65
  %v79 = vpack.c.b16 %v68, %v67
  %v80 = vpack.c.b16 %v70, %v69
  %v81 = vpack.c.b16 %v72, %v71
  %v82 = vpack.c.b16 %v74, %v73
  %vm83 = vcmask 64512
  %v85 = vsel %vm83, %v75, 0
  %v88 = vsel %vm83, %v76, 0
  %v91 = vsel %vm83, %v77, 0
  %v94 = vsel %vm83, %v78, 0
  %v97 = vsel %vm83, %v79, 0
  %v100 = vsel %vm83, %v80, 0
  %v103 = vsel %vm83, %v81, 0
  %v106 = vsel %vm83, %v82, 0
  %vm108 = vcmask 1043456
  %v110 = vsel %vm108, %v35, 0
  %112 = vmatprep.subr.bf16.mxu0 0
  %113 = vmatpush1.bf16.msra.mxu0 %v110
  %114 = vmatprep.subr.bf16.mxu0 0
  %115 = vmatpush1.bf16.msra.mxu0 0
  %116 = vmatprep.subr.bf16.mxu0 0
  %117 = vmatpush1.bf16.msra.mxu0 0
  %118 = vmatprep.subr.bf16.mxu0 0
  %119 = vmatpush1.bf16.msra.mxu0 0
  %120 = vmatprep.subr.bf16.mxu0 0
  %121 = vmatpush1.bf16.msra.mxu0 0
  %122 = vmatprep.subr.bf16.mxu0 0
  %123 = vmatpush1.bf16.msra.mxu0 0
  %124 = vmatprep.subr.bf16.mxu0 0
  %125 = vmatpush1.bf16.msra.mxu0 0
  %126 = vmatprep.subr.bf16.mxu0 0
  %127 = vmatpush1.bf16.msra.mxu0 0
  %128 = vmatprep.subr.bf16.mxu0 0
  %129 = vmatpush1.bf16.msra.mxu0 0
  %130 = vmatprep.subr.bf16.mxu0 0
  %131 = vmatpush1.bf16.msra.mxu0 0
  %132 = vmatprep.subr.bf16.mxu0 0
  %133 = vmatpush1.bf16.msra.mxu0 0
  %134 = vmatprep.subr.bf16.mxu0 0
  %135 = vmatpush1.bf16.msra.mxu0 0
  %136 = vmatprep.subr.bf16.mxu0 0
  %137 = vmatpush1.bf16.msra.mxu0 0
  %138 = vmatprep.subr.bf16.mxu0 0
  %139 = vmatpush1.bf16.msra.mxu0 0
  %140 = vmatprep.subr.bf16.mxu0 0
  %141 = vmatpush1.bf16.msra.mxu0 0
  %142 = vmatprep.subr.bf16.mxu0 0
  %143 = vmatpush1.bf16.msra.mxu0 0
  %144 = vmatprep.mubr.bf16.mxu0 0
  %145 = vmatmul.mubr.bf16.gmra.mrb[0].mxu0 %v85
  %v146 = vpop.f32.mrb[0].mxu0
  %v147 = vadd.f32 %v41, %v146
  %v148 = vpop.f32.mrb[0].mxu0
  %v149 = vpop.f32.mrb[0].mxu0
  %v150 = vadd.f32 %v41, %v149
  %v151 = vpop.f32.mrb[0].mxu0
  %152 = vmatprep.mubr.bf16.mxu0 0
  %153 = vmatmul.mubr.bf16.gmra.mrb[0].mxu0 %v88
  %v154 = vpop.f32.mrb[0].mxu0
  %v155 = vadd.f32 %v41, %v154
  %v156 = vpop.f32.mrb[0].mxu0
  %v157 = vpop.f32.mrb[0].mxu0
  %v158 = vadd.f32 %v41, %v157
  %v159 = vpop.f32.mrb[0].mxu0
  %160 = vmatprep.mubr.bf16.mxu0 0
  %161 = vmatmul.mubr.bf16.gmra.mrb[0].mxu0 %v91
  %v162 = vpop.f32.mrb[0].mxu0
  %v163 = vadd.f32 %v41, %v162
  %v164 = vpop.f32.mrb[0].mxu0
  %v165 = vpop.f32.mrb[0].mxu0
  %v166 = vadd.f32 %v41, %v165
  %v167 = vpop.f32.mrb[0].mxu0
  %168 = vmatprep.mubr.bf16.mxu0 0
  %169 = vmatmul.mubr.bf16.gmra.mrb[0].mxu0 %v94
  %v170 = vpop.f32.mrb[0].mxu0
  %v171 = vadd.f32 %v41, %v170
  %v172 = vpop.f32.mrb[0].mxu0
  %v173 = vpop.f32.mrb[0].mxu0
  %v174 = vadd.f32 %v41, %v173
  %v175 = vpop.f32.mrb[0].mxu0
  %176 = vmatprep.mubr.bf16.mxu0 0
  %177 = vmatmul.mubr.bf16.gmra.mrb[0].mxu0 %v97
  %v178 = vpop.f32.mrb[0].mxu0
  %v179 = vadd.f32 %v41, %v178
  %v180 = vpop.f32.mrb[0].mxu0
  %v181 = vpop.f32.mrb[0].mxu0
  %v182 = vadd.f32 %v41, %v181
  %v183 = vpop.f32.mrb[0].mxu0
  %184 = vmatprep.mubr.bf16.mxu0 0
  %185 = vmatmul.mubr.bf16.gmra.mrb[0].mxu0 %v100
  %v186 = vpop.f32.mrb[0].mxu0
  %v187 = vadd.f32 %v41, %v186
  %v188 = vpop.f32.mrb[0].mxu0
  %v189 = vpop.f32.mrb[0].mxu0
  %v190 = vadd.f32 %v41, %v189
  %v191 = vpop.f32.mrb[0].mxu0
  %192 = vmatprep.mubr.bf16.mxu0 0
  %193 = vmatmul.mubr.bf16.gmra.mrb[0].mxu0 %v103
  %v194 = vpop.f32.mrb[0].mxu0
  %v195 = vadd.f32 %v41, %v194
  %v196 = vpop.f32.mrb[0].mxu0
  %v197 = vpop.f32.mrb[0].mxu0
  %v198 = vadd.f32 %v41, %v197
  %v199 = vpop.f32.mrb[0].mxu0
  %200 = vmatprep.mubr.bf16.mxu0 0
  %201 = vmatmul.mubr.bf16.gmra.mrb[0].mxu0 %v106
  %v202 = vpop.f32.mrb[0].mxu0
  %v203 = vadd.f32 %v41, %v202
  %v204 = vpop.f32.mrb[0].mxu0
  %v205 = vpop.f32.mrb[0].mxu0
  %v206 = vadd.f32 %v41, %v205
  %v207 = vpop.f32.mrb[0].mxu0
  %208 = vdwg.mxu0
  %v209 = vpack.c.bf16 %v150, %v147
  %v210 = vpack.c.bf16 %v158, %v155
  %v211 = vpack.c.bf16 %v166, %v163
  %v212 = vpack.c.bf16 %v174, %v171
  %v213 = vpack.c.bf16 %v182, %v179
  %v214 = vpack.c.bf16 %v190, %v187
  %v215 = vpack.c.bf16 %v198, %v195
  %v216 = vpack.c.bf16 %v206, %v203
  %v225 = vunpack.c.l.b16 %v209
  %v226 = vunpack.c.h.b16 %v209
  %v227 = vunpack.c.l.b16 %v210
  %v228 = vunpack.c.h.b16 %v210
  %v229 = vunpack.c.l.b16 %v211
  %v230 = vunpack.c.h.b16 %v211
  %v231 = vunpack.c.l.b16 %v212
  %v232 = vunpack.c.h.b16 %v212
  %v233 = vunpack.c.l.b16 %v213
  %v234 = vunpack.c.h.b16 %v213
  %v235 = vunpack.c.l.b16 %v214
  %v236 = vunpack.c.h.b16 %v214
  %v237 = vunpack.c.l.b16 %v215
  %v238 = vunpack.c.h.b16 %v215
  %v239 = vunpack.c.l.b16 %v216
  %v240 = vunpack.c.h.b16 %v216
  %v241 = vpack.c.b16 %v225, %v225
  %v242 = vpack.c.b16 %v226, %v226
  %v243 = vpack.c.b16 %v227, %v227
  %v244 = vpack.c.b16 %v228, %v228
  %v245 = vpack.c.b16 %v229, %v229
  %v246 = vpack.c.b16 %v230, %v230
  %v247 = vpack.c.b16 %v231, %v231
  %v248 = vpack.c.b16 %v232, %v232
  %v249 = vpack.c.b16 %v233, %v233
  %v250 = vpack.c.b16 %v234, %v234
  %v251 = vpack.c.b16 %v235, %v235
  %v252 = vpack.c.b16 %v236, %v236
  %v253 = vpack.c.b16 %v237, %v237
  %v254 = vpack.c.b16 %v238, %v238
  %v255 = vpack.c.b16 %v239, %v239
  %v256 = vpack.c.b16 %v240, %v240
  %273 = vst [vmem:[%s4] sm:$0xf] %v241
  %274 = vst [vmem:[%s4 + $0x4] sm:$0xf] %v242
  %275 = vst [vmem:[%s4 + $0x8] sm:$0xf] %v243
  %276 = vst [vmem:[%s4 + $0xc] sm:$0xf] %v244
  %277 = vst [vmem:[%s4 + $0x10] sm:$0xf] %v245
  %278 = vst [vmem:[%s4 + $0x14] sm:$0xf] %v246
  %279 = vst [vmem:[%s4 + $0x18] sm:$0xf] %v247
  %280 = vst [vmem:[%s4 + $0x1c] sm:$0xf] %v248
  %281 = vst [vmem:[%s4 + $0x20] sm:$0xf] %v249
  %282 = vst [vmem:[%s4 + $0x24] sm:$0xf] %v250
  %283 = vst [vmem:[%s4 + $0x28] sm:$0xf] %v251
  %284 = vst [vmem:[%s4 + $0x2c] sm:$0xf] %v252
  %285 = vst [vmem:[%s4 + $0x30] sm:$0xf] %v253
  %286 = vst [vmem:[%s4 + $0x34] sm:$0xf] %v254
  %287 = vst [vmem:[%s4 + $0x38] sm:$0xf] %v255
  %288 = vst [vmem:[%s4 + $0x3c] sm:$0xf] %v256
  // Predicated region
  $region18: #{_lambda_.6} parent=0 // pred_check
    _
  $region19: #{_lambda_.6} parent=0 // pred_check_branch
    %290 = sbr.rel (0) target = $region21
  $region20: #{_lambda_.6} parent=0 // pred_region
    _
  $region21: #{_lambda_.6} parent=0 // pred_fallthru
    _
  // Predicated region
  $region22: #{_lambda_.6} parent=0 // pred_check
    _
  $region23: #{_lambda_.6} parent=0 // pred_check_branch
    %292 = sbr.rel (0) target = $region25
  $region24: #{_lambda_.6} parent=0 // pred_region
    _
  $region25: #{_lambda_.6} parent=0 // pred_fallthru
    _

// kernel: _lambda_.4
$region0: #{_lambda_.4}
  #allocation0 [shape = 'u32[]', space=smem, size = 0x4, offset = 0x4, fixed_abs, tag = 'smem constant byte address 0x4 - core index']
  #allocation1 [shape = 'u32[144,128]{1,0:T(1,128)}', space=vmem, size = 0x12000, scoped, tag = 'internal scratch']
  #allocation2 [shape = 'f32[1,1]{1,0:T(1,128)S(6)}', space=smem, size = 0x200, scoped, tag = 'scoped memory for _lambda_.4']
  %s0 = inlined_call_operand.vmem [shape: bf16[512,8], index: 0, kind: input, shape index: {}]
  %s1 = inlined_call_operand.vmem [shape: bf16[8,128], index: 1, kind: input, shape index: {}]
  %s2 = inlined_call_operand.vmem [shape: f32[1,128], index: 2, kind: input, shape index: {}]
  %s3 = inlined_call_operand.<no memory space> [shape: f32[1,1], index: 3, kind: input, shape index: {}]
  %s4 = inlined_call_operand.vmem [shape: bf16[512,128], index: 4, kind: output, shape index: {}]
  %s5 = sld [smem:[#allocation0]]
  $region26: #{_lambda_.4} parent=0
    _
  %s7 = ssub.s32 1, %s5
  %s8 = scalar_select 0, %s7, %s5
  %9 = sst [smem:[#allocation2]] %s3
  // Predicated region
  $region2: #{_lambda_.4} parent=0 // pred_check
    _
  $region3: #{_lambda_.4} parent=0 // pred_check_branch
    %11 = sbr.rel (0) target = $region5
  $region4: #{_lambda_.4} parent=0 // pred_region
    _
  $region5: #{_lambda_.4} parent=0 // pred_fallthru
    _
  // Predicated region
  $region6: #{_lambda_.4} parent=0 // pred_check
    _
  $region7: #{_lambda_.4} parent=0 // pred_check_branch
    %13 = sbr.rel (0) target = $region9
  $region8: #{_lambda_.4} parent=0 // pred_region
    _
  $region9: #{_lambda_.4} parent=0 // pred_fallthru
    _
  // Predicated region
  $region10: #{_lambda_.4} parent=0 // pred_check
    _
  $region11: #{_lambda_.4} parent=0 // pred_check_branch
    %15 = sbr.rel (0) target = $region13
  $region12: #{_lambda_.4} parent=0 // pred_region
    _
  $region13: #{_lambda_.4} parent=0 // pred_fallthru
    _
  // Predicated region
  $region14: #{_lambda_.4} parent=0 // pred_check
    _
  $region15: #{_lambda_.4} parent=0 // pred_check_branch
    %17 = sbr.rel (0) target = $region17
  $region16: #{_lambda_.4} parent=0 // pred_region
    _
  $region17: #{_lambda_.4} parent=0 // pred_fallthru
    _
  %v19 = vld [vmem:[%s0] sm:$0xf]
  %v20 = vld [vmem:[%s0 + $0x4] sm:$0xf]
  %v21 = vld [vmem:[%s0 + $0x8] sm:$0xf]
  %v22 = vld [vmem:[%s0 + $0xc] sm:$0xf]
  %v23 = vld [vmem:[%s0 + $0x10] sm:$0xf]
  %v24 = vld [vmem:[%s0 + $0x14] sm:$0xf]
  %v25 = vld [vmem:[%s0 + $0x18] sm:$0xf]
  %v26 = vld [vmem:[%s0 + $0x1c] sm:$0xf]
  %v27 = vld [vmem:[%s0 + $0x20] sm:$0xf]
  %v28 = vld [vmem:[%s0 + $0x24] sm:$0xf]
  %v29 = vld [vmem:[%s0 + $0x28] sm:$0xf]
  %v30 = vld [vmem:[%s0 + $0x2c] sm:$0xf]
  %v31 = vld [vmem:[%s0 + $0x30] sm:$0xf]
  %v32 = vld [vmem:[%s0 + $0x34] sm:$0xf]
  %v33 = vld [vmem:[%s0 + $0x38] sm:$0xf]
  %v34 = vld [vmem:[%s0 + $0x3c] sm:$0xf]
  %v35 = vld [vmem:[%s0 + $0x40] sm:$0xf]
  %v36 = vld [vmem:[%s0 + $0x44] sm:$0xf]
  %v37 = vld [vmem:[%s0 + $0x48] sm:$0xf]
  %v38 = vld [vmem:[%s0 + $0x4c] sm:$0xf]
  %v39 = vld [vmem:[%s0 + $0x50] sm:$0xf]
  %v40 = vld [vmem:[%s0 + $0x54] sm:$0xf]
  %v41 = vld [vmem:[%s0 + $0x58] sm:$0xf]
  %v42 = vld [vmem:[%s0 + $0x5c] sm:$0xf]
  %v43 = vld [vmem:[%s0 + $0x60] sm:$0xf]
  %v44 = vld [vmem:[%s0 + $0x64] sm:$0xf]
  %v45 = vld [vmem:[%s0 + $0x68] sm:$0xf]
  %v46 = vld [vmem:[%s0 + $0x6c] sm:$0xf]
  %v47 = vld [vmem:[%s0 + $0x70] sm:$0xf]
  %v48 = vld [vmem:[%s0 + $0x74] sm:$0xf]
  %v49 = vld [vmem:[%s0 + $0x78] sm:$0xf]
  %v50 = vld [vmem:[%s0 + $0x7c] sm:$0xf]
  %v51 = vld [vmem:[%s0 + $0x80] sm:$0xf]
  %v52 = vld [vmem:[%s0 + $0x84] sm:$0xf]
  %v53 = vld [vmem:[%s0 + $0x88] sm:$0xf]
  %v54 = vld [vmem:[%s0 + $0x8c] sm:$0xf]
  %v55 = vld [vmem:[%s0 + $0x90] sm:$0xf]
  %v56 = vld [vmem:[%s0 + $0x94] sm:$0xf]
  %v57 = vld [vmem:[%s0 + $0x98] sm:$0xf]
  %v58 = vld [vmem:[%s0 + $0x9c] sm:$0xf]
  %v59 = vld [vmem:[%s0 + $0xa0] sm:$0xf]
  %v60 = vld [vmem:[%s0 + $0xa4] sm:$0xf]
  %v61 = vld [vmem:[%s0 + $0xa8] sm:$0xf]
  %v62 = vld [vmem:[%s0 + $0xac] sm:$0xf]
  %v63 = vld [vmem:[%s0 + $0xb0] sm:$0xf]
  %v64 = vld [vmem:[%s0 + $0xb4] sm:$0xf]
  %v65 = vld [vmem:[%s0 + $0xb8] sm:$0xf]
  %v66 = vld [vmem:[%s0 + $0xbc] sm:$0xf]
  %v67 = vld [vmem:[%s0 + $0xc0] sm:$0xf]
  %v68 = vld [vmem:[%s0 + $0xc4] sm:$0xf]
  %v69 = vld [vmem:[%s0 + $0xc8] sm:$0xf]
  %v70 = vld [vmem:[%s0 + $0xcc] sm:$0xf]
  %v71 = vld [vmem:[%s0 + $0xd0] sm:$0xf]
  %v72 = vld [vmem:[%s0 + $0xd4] sm:$0xf]
  %v73 = vld [vmem:[%s0 + $0xd8] sm:$0xf]
  %v74 = vld [vmem:[%s0 + $0xdc] sm:$0xf]
  %v75 = vld [vmem:[%s0 + $0xe0] sm:$0xf]
  %v76 = vld [vmem:[%s0 + $0xe4] sm:$0xf]
  %v77 = vld [vmem:[%s0 + $0xe8] sm:$0xf]
  %v78 = vld [vmem:[%s0 + $0xec] sm:$0xf]
  %v79 = vld [vmem:[%s0 + $0xf0] sm:$0xf]
  %v80 = vld [vmem:[%s0 + $0xf4] sm:$0xf]
  %v81 = vld [vmem:[%s0 + $0xf8] sm:$0xf]
  %v82 = vld [vmem:[%s0 + $0xfc] sm:$0xf]
  %v83 = vld [vmem:[%s1] sm:$0xf]
  %v84 = vld [vmem:[%s2] sm:$0x1]
  %v86 = vlaneseq
  %v87 = vshrl.u32 %v86, 7
  %v88 = vsub.s32 0, %v87
  %v89 = vrot.slane %v84, %v88
  %v155 = vunpack.c.l.b16 %v19
  %v156 = vunpack.c.l.b16 %v20
  %v157 = vunpack.c.l.b16 %v21
  %v158 = vunpack.c.l.b16 %v22
  %v159 = vunpack.c.l.b16 %v23
  %v160 = vunpack.c.l.b16 %v24
  %v161 = vunpack.c.l.b16 %v25
  %v162 = vunpack.c.l.b16 %v26
  %v163 = vunpack.c.l.b16 %v27
  %v164 = vunpack.c.l.b16 %v28
  %v165 = vunpack.c.l.b16 %v29
  %v166 = vunpack.c.l.b16 %v30
  %v167 = vunpack.c.l.b16 %v31
  %v168 = vunpack.c.l.b16 %v32
  %v169 = vunpack.c.l.b16 %v33
  %v170 = vunpack.c.l.b16 %v34
  %v171 = vunpack.c.l.b16 %v35
  %v172 = vunpack.c.l.b16 %v36
  %v173 = vunpack.c.l.b16 %v37
  %v174 = vunpack.c.l.b16 %v38
  %v175 = vunpack.c.l.b16 %v39
  %v176 = vunpack.c.l.b16 %v40
  %v177 = vunpack.c.l.b16 %v41
  %v178 = vunpack.c.l.b16 %v42
  %v179 = vunpack.c.l.b16 %v43
  %v180 = vunpack.c.l.b16 %v44
  %v181 = vunpack.c.l.b16 %v45
  %v182 = vunpack.c.l.b16 %v46
  %v183 = vunpack.c.l.b16 %v47
  %v184 = vunpack.c.l.b16 %v48
  %v185 = vunpack.c.l.b16 %v49
  %v186 = vunpack.c.l.b16 %v50
  %v187 = vunpack.c.l.b16 %v51
  %v188 = vunpack.c.l.b16 %v52
  %v189 = vunpack.c.l.b16 %v53
  %v190 = vunpack.c.l.b16 %v54
  %v191 = vunpack.c.l.b16 %v55
  %v192 = vunpack.c.l.b16 %v56
  %v193 = vunpack.c.l.b16 %v57
  %v194 = vunpack.c.l.b16 %v58
  %v195 = vunpack.c.l.b16 %v59
  %v196 = vunpack.c.l.b16 %v60
  %v197 = vunpack.c.l.b16 %v61
  %v198 = vunpack.c.l.b16 %v62
  %v199 = vunpack.c.l.b16 %v63
  %v200 = vunpack.c.l.b16 %v64
  %v201 = vunpack.c.l.b16 %v65
  %v202 = vunpack.c.l.b16 %v66
  %v203 = vunpack.c.l.b16 %v67
  %v204 = vunpack.c.l.b16 %v68
  %v205 = vunpack.c.l.b16 %v69
  %v206 = vunpack.c.l.b16 %v70
  %v207 = vunpack.c.l.b16 %v71
  %v208 = vunpack.c.l.b16 %v72
  %v209 = vunpack.c.l.b16 %v73
  %v210 = vunpack.c.l.b16 %v74
  %v211 = vunpack.c.l.b16 %v75
  %v212 = vunpack.c.l.b16 %v76
  %v213 = vunpack.c.l.b16 %v77
  %v214 = vunpack.c.l.b16 %v78
  %v215 = vunpack.c.l.b16 %v79
  %v216 = vunpack.c.l.b16 %v80
  %v217 = vunpack.c.l.b16 %v81
  %v218 = vunpack.c.l.b16 %v82
  %v219 = vpack.c.b16 %v156, %v155
  %v220 = vpack.c.b16 %v158, %v157
  %v221 = vpack.c.b16 %v160, %v159
  %v222 = vpack.c.b16 %v162, %v161
  %v223 = vpack.c.b16 %v164, %v163
  %v224 = vpack.c.b16 %v166, %v165
  %v225 = vpack.c.b16 %v168, %v167
  %v226 = vpack.c.b16 %v170, %v169
  %v227 = vpack.c.b16 %v172, %v171
  %v228 = vpack.c.b16 %v174, %v173
  %v229 = vpack.c.b16 %v176, %v175
  %v230 = vpack.c.b16 %v178, %v177
  %v231 = vpack.c.b16 %v180, %v179
  %v232 = vpack.c.b16 %v182, %v181
  %v233 = vpack.c.b16 %v184, %v183
  %v234 = vpack.c.b16 %v186, %v185
  %v235 = vpack.c.b16 %v188, %v187
  %v236 = vpack.c.b16 %v190, %v189
  %v237 = vpack.c.b16 %v192, %v191
  %v238 = vpack.c.b16 %v194, %v193
  %v239 = vpack.c.b16 %v196, %v195
  %v240 = vpack.c.b16 %v198, %v197
  %v241 = vpack.c.b16 %v200, %v199
  %v242 = vpack.c.b16 %v202, %v201
  %v243 = vpack.c.b16 %v204, %v203
  %v244 = vpack.c.b16 %v206, %v205
  %v245 = vpack.c.b16 %v208, %v207
  %v246 = vpack.c.b16 %v210, %v209
  %v247 = vpack.c.b16 %v212, %v211
  %v248 = vpack.c.b16 %v214, %v213
  %v249 = vpack.c.b16 %v216, %v215
  %v250 = vpack.c.b16 %v218, %v217
  %vm251 = vcmask 64512
  %v253 = vsel %vm251, %v219, 0
  %v256 = vsel %vm251, %v220, 0
  %v259 = vsel %vm251, %v221, 0
  %v262 = vsel %vm251, %v222, 0
  %v265 = vsel %vm251, %v223, 0
  %v268 = vsel %vm251, %v224, 0
  %v271 = vsel %vm251, %v225, 0
  %v274 = vsel %vm251, %v226, 0
  %v277 = vsel %vm251, %v227, 0
  %v280 = vsel %vm251, %v228, 0
  %v283 = vsel %vm251, %v229, 0
  %v286 = vsel %vm251, %v230, 0
  %v289 = vsel %vm251, %v231, 0
  %v292 = vsel %vm251, %v232, 0
  %v295 = vsel %vm251, %v233, 0
  %v298 = vsel %vm251, %v234, 0
  %v301 = vsel %vm251, %v235, 0
  %v304 = vsel %vm251, %v236, 0
  %v307 = vsel %vm251, %v237, 0
  %v310 = vsel %vm251, %v238, 0
  %v313 = vsel %vm251, %v239, 0
  %v316 = vsel %vm251, %v240, 0
  %v319 = vsel %vm251, %v241, 0
  %v322 = vsel %vm251, %v242, 0
  %v325 = vsel %vm251, %v243, 0
  %v328 = vsel %vm251, %v244, 0
  %v331 = vsel %vm251, %v245, 0
  %v334 = vsel %vm251, %v246, 0
  %v337 = vsel %vm251, %v247, 0
  %v340 = vsel %vm251, %v248, 0
  %v343 = vsel %vm251, %v249, 0
  %v346 = vsel %vm251, %v250, 0
  %vm348 = vcmask 1043456
  %v350 = vsel %vm348, %v83, 0
  %352 = vmatprep.subr.bf16.mxu0 0
  %353 = vmatpush1.bf16.msra.mxu0 %v350
  %354 = vmatprep.subr.bf16.mxu0 0
  %355 = vmatpush1.bf16.msra.mxu0 0
  %356 = vmatprep.subr.bf16.mxu0 0
  %357 = vmatpush1.bf16.msra.mxu0 0
  %358 = vmatprep.subr.bf16.mxu0 0
  %359 = vmatpush1.bf16.msra.mxu0 0
  %360 = vmatprep.subr.bf16.mxu0 0
  %361 = vmatpush1.bf16.msra.mxu0 0
  %362 = vmatprep.subr.bf16.mxu0 0
  %363 = vmatpush1.bf16.msra.mxu0 0
  %364 = vmatprep.subr.bf16.mxu0 0
  %365 = vmatpush1.bf16.msra.mxu0 0
  %366 = vmatprep.subr.bf16.mxu0 0
  %367 = vmatpush1.bf16.msra.mxu0 0
  %368 = vmatprep.subr.bf16.mxu0 0
  %369 = vmatpush1.bf16.msra.mxu0 0
  %370 = vmatprep.subr.bf16.mxu0 0
  %371 = vmatpush1.bf16.msra.mxu0 0
  %372 = vmatprep.subr.bf16.mxu0 0
  %373 = vmatpush1.bf16.msra.mxu0 0
  %374 = vmatprep.subr.bf16.mxu0 0
  %375 = vmatpush1.bf16.msra.mxu0 0
  %376 = vmatprep.subr.bf16.mxu0 0
  %377 = vmatpush1.bf16.msra.mxu0 0
  %378 = vmatprep.subr.bf16.mxu0 0
  %379 = vmatpush1.bf16.msra.mxu0 0
  %380 = vmatprep.subr.bf16.mxu0 0
  %381 = vmatpush1.bf16.msra.mxu0 0
  %382 = vmatprep.subr.bf16.mxu0 0
  %383 = vmatpush1.bf16.msra.mxu0 0
  %384 = vmatprep.mubr.bf16.mxu0 0
  %385 = vmatmul.mubr.bf16.gmra.mrb[0].mxu0 %v253
  %v386 = vpop.f32.mrb[0].mxu0
  %v387 = vadd.f32 %v89, %v386
  %v388 = vpop.f32.mrb[0].mxu0
  %v389 = vpop.f32.mrb[0].mxu0
  %v390 = vadd.f32 %v89, %v389
  %v391 = vpop.f32.mrb[0].mxu0
  %392 = vmatprep.mubr.bf16.mxu0 0
  %393 = vmatmul.mubr.bf16.gmra.mrb[0].mxu0 %v256
  %v394 = vpop.f32.mrb[0].mxu0
  %v395 = vadd.f32 %v89, %v394
  %v396 = vpop.f32.mrb[0].mxu0
  %v397 = vpop.f32.mrb[0].mxu0
  %v398 = vadd.f32 %v89, %v397
  %v399 = vpop.f32.mrb[0].mxu0
  %400 = vmatprep.mubr.bf16.mxu0 0
  %401 = vmatmul.mubr.bf16.gmra.mrb[0].mxu0 %v259
  %v402 = vpop.f32.mrb[0].mxu0
  %v403 = vadd.f32 %v89, %v402
  %v404 = vpop.f32.mrb[0].mxu0
  %v405 = vpop.f32.mrb[0].mxu0
  %v406 = vadd.f32 %v89, %v405
  %v407 = vpop.f32.mrb[0].mxu0
  %408 = vmatprep.mubr.bf16.mxu0 0
  %409 = vmatmul.mubr.bf16.gmra.mrb[0].mxu0 %v262
  %v410 = vpop.f32.mrb[0].mxu0
  %v411 = vadd.f32 %v89, %v410
  %v412 = vpop.f32.mrb[0].mxu0
  %v413 = vpop.f32.mrb[0].mxu0
  %v414 = vadd.f32 %v89, %v413
  %v415 = vpop.f32.mrb[0].mxu0
  %416 = vmatprep.mubr.bf16.mxu0 0
  %417 = vmatmul.mubr.bf16.gmra.mrb[0].mxu0 %v265
  %v418 = vpop.f32.mrb[0].mxu0
  %v419 = vadd.f32 %v89, %v418
  %v420 = vpop.f32.mrb[0].mxu0
  %v421 = vpop.f32.mrb[0].mxu0
  %v422 = vadd.f32 %v89, %v421
  %v423 = vpop.f32.mrb[0].mxu0
  %424 = vmatprep.mubr.bf16.mxu0 0
  %425 = vmatmul.mubr.bf16.gmra.mrb[0].mxu0 %v268
  %v426 = vpop.f32.mrb[0].mxu0
  %v427 = vadd.f32 %v89, %v426
  %v428 = vpop.f32.mrb[0].mxu0
  %v429 = vpop.f32.mrb[0].mxu0
  %v430 = vadd.f32 %v89, %v429
  %v431 = vpop.f32.mrb[0].mxu0
  %432 = vmatprep.mubr.bf16.mxu0 0
  %433 = vmatmul.mubr.bf16.gmra.mrb[0].mxu0 %v271
  %v434 = vpop.f32.mrb[0].mxu0
  %v435 = vadd.f32 %v89, %v434
  %v436 = vpop.f32.mrb[0].mxu0
  %v437 = vpop.f32.mrb[0].mxu0
  %v438 = vadd.f32 %v89, %v437
  %v439 = vpop.f32.mrb[0].mxu0
  %440 = vmatprep.mubr.bf16.mxu0 0
  %441 = vmatmul.mubr.bf16.gmra.mrb[0].mxu0 %v274
  %v442 = vpop.f32.mrb[0].mxu0
  %v443 = vadd.f32 %v89, %v442
  %v444 = vpop.f32.mrb[0].mxu0
  %v445 = vpop.f32.mrb[0].mxu0
  %v446 = vadd.f32 %v89, %v445
  %v447 = vpop.f32.mrb[0].mxu0
  %448 = vmatprep.mubr.bf16.mxu0 0
  %449 = vmatmul.mubr.bf16.gmra.mrb[0].mxu0 %v277
  %v450 = vpop.f32.mrb[0].mxu0
  %v451 = vadd.f32 %v89, %v450
  %v452 = vpop.f32.mrb[0].mxu0
  %v453 = vpop.f32.mrb[0].mxu0
  %v454 = vadd.f32 %v89, %v453
  %v455 = vpop.f32.mrb[0].mxu0
  %456 = vmatprep.mubr.bf16.mxu0 0
  %457 = vmatmul.mubr.bf16.gmra.mrb[0].mxu0 %v280
  %v458 = vpop.f32.mrb[0].mxu0
  %v459 = vadd.f32 %v89, %v458
  %v460 = vpop.f32.mrb[0].mxu0
  %v461 = vpop.f32.mrb[0].mxu0
  %v462 = vadd.f32 %v89, %v461
  %v463 = vpop.f32.mrb[0].mxu0
  %464 = vmatprep.mubr.bf16.mxu0 0
  %465 = vmatmul.mubr.bf16.gmra.mrb[0].mxu0 %v283
  %v466 = vpop.f32.mrb[0].mxu0
  %v467 = vadd.f32 %v89, %v466
  %v468 = vpop.f32.mrb[0].mxu0
  %v469 = vpop.f32.mrb[0].mxu0
  %v470 = vadd.f32 %v89, %v469
  %v471 = vpop.f32.mrb[0].mxu0
  %472 = vmatprep.mubr.bf16.mxu0 0
  %473 = vmatmul.mubr.bf16.gmra.mrb[0].mxu0 %v286
  %v474 = vpop.f32.mrb[0].mxu0
  %v475 = vadd.f32 %v89, %v474
  %v476 = vpop.f32.mrb[0].mxu0
  %v477 = vpop.f32.mrb[0].mxu0
  %v478 = vadd.f32 %v89, %v477
  %v479 = vpop.f32.mrb[0].mxu0
  %480 = vmatprep.mubr.bf16.mxu0 0
  %481 = vmatmul.mubr.bf16.gmra.mrb[0].mxu0 %v289
  %v482 = vpop.f32.mrb[0].mxu0
  %v483 = vadd.f32 %v89, %v482
  %v484 = vpop.f32.mrb[0].mxu0
  %v485 = vpop.f32.mrb[0].mxu0
  %v486 = vadd.f32 %v89, %v485
  %v487 = vpop.f32.mrb[0].mxu0
  %488 = vmatprep.mubr.bf16.mxu0 0
  %489 = vmatmul.mubr.bf16.gmra.mrb[0].mxu0 %v292
  %v490 = vpop.f32.mrb[0].mxu0
  %v491 = vadd.f32 %v89, %v490
  %v492 = vpop.f32.mrb[0].mxu0
  %v493 = vpop.f32.mrb[0].mxu0
  %v494 = vadd.f32 %v89, %v493
  %v495 = vpop.f32.mrb[0].mxu0
  %496 = vmatprep.mubr.bf16.mxu0 0
  %497 = vmatmul.mubr.bf16.gmra.mrb[0].mxu0 %v295
  %v498 = vpop.f32.mrb[0].mxu0
  %v499 = vadd.f32 %v89, %v498
  %v500 = vpop.f32.mrb[0].mxu0
  %v501 = vpop.f32.mrb[0].mxu0
  %v502 = vadd.f32 %v89, %v501
  %v503 = vpop.f32.mrb[0].mxu0
  %504 = vmatprep.mubr.bf16.mxu0 0
  %505 = vmatmul.mubr.bf16.gmra.mrb[0].mxu0 %v298
  %v506 = vpop.f32.mrb[0].mxu0
  %v507 = vadd.f32 %v89, %v506
  %v508 = vpop.f32.mrb[0].mxu0
  %v509 = vpop.f32.mrb[0].mxu0
  %v510 = vadd.f32 %v89, %v509
  %v511 = vpop.f32.mrb[0].mxu0
  %512 = vmatprep.mubr.bf16.mxu0 0
  %513 = vmatmul.mubr.bf16.gmra.mrb[0].mxu0 %v301
  %v514 = vpop.f32.mrb[0].mxu0
  %v515 = vadd.f32 %v89, %v514
  %v516 = vpop.f32.mrb[0].mxu0
  %v517 = vpop.f32.mrb[0].mxu0
  %v518 = vadd.f32 %v89, %v517
  %v519 = vpop.f32.mrb[0].mxu0
  %520 = vmatprep.mubr.bf16.mxu0 0
  %521 = vmatmul.mubr.bf16.gmra.mrb[0].mxu0 %v304
  %v522 = vpop.f32.mrb[0].mxu0
  %v523 = vadd.f32 %v89, %v522
  %v524 = vpop.f32.mrb[0].mxu0
  %v525 = vpop.f32.mrb[0].mxu0
  %v526 = vadd.f32 %v89, %v525
  %v527 = vpop.f32.mrb[0].mxu0
  %528 = vmatprep.mubr.bf16.mxu0 0
  %529 = vmatmul.mubr.bf16.gmra.mrb[0].mxu0 %v307
  %v530 = vpop.f32.mrb[0].mxu0
  %v531 = vadd.f32 %v89, %v530
  %v532 = vpop.f32.mrb[0].mxu0
  %v533 = vpop.f32.mrb[0].mxu0
  %v534 = vadd.f32 %v89, %v533
  %v535 = vpop.f32.mrb[0].mxu0
  %536 = vmatprep.mubr.bf16.mxu0 0
  %537 = vmatmul.mubr.bf16.gmra.mrb[0].mxu0 %v310
  %v538 = vpop.f32.mrb[0].mxu0
  %v539 = vadd.f32 %v89, %v538
  %v540 = vpop.f32.mrb[0].mxu0
  %v541 = vpop.f32.mrb[0].mxu0
  %v542 = vadd.f32 %v89, %v541
  %v543 = vpop.f32.mrb[0].mxu0
  %544 = vmatprep.mubr.bf16.mxu0 0
  %545 = vmatmul.mubr.bf16.gmra.mrb[0].mxu0 %v313
  %v546 = vpop.f32.mrb[0].mxu0
  %v547 = vadd.f32 %v89, %v546
  %v548 = vpop.f32.mrb[0].mxu0
  %v549 = vpop.f32.mrb[0].mxu0
  %v550 = vadd.f32 %v89, %v549
  %v551 = vpop.f32.mrb[0].mxu0
  %552 = vmatprep.mubr.bf16.mxu0 0
  %553 = vmatmul.mubr.bf16.gmra.mrb[0].mxu0 %v316
  %v554 = vpop.f32.mrb[0].mxu0
  %v555 = vadd.f32 %v89, %v554
  %v556 = vpop.f32.mrb[0].mxu0
  %v557 = vpop.f32.mrb[0].mxu0
  %v558 = vadd.f32 %v89, %v557
  %v559 = vpop.f32.mrb[0].mxu0
  %560 = vmatprep.mubr.bf16.mxu0 0
  %561 = vmatmul.mubr.bf16.gmra.mrb[0].mxu0 %v319
  %v562 = vpop.f32.mrb[0].mxu0
  %v563 = vadd.f32 %v89, %v562
  %v564 = vpop.f32.mrb[0].mxu0
  %v565 = vpop.f32.mrb[0].mxu0
  %v566 = vadd.f32 %v89, %v565
  %v567 = vpop.f32.mrb[0].mxu0
  %568 = vmatprep.mubr.bf16.mxu0 0
  %569 = vmatmul.mubr.bf16.gmra.mrb[0].mxu0 %v322
  %v570 = vpop.f32.mrb[0].mxu0
  %v571 = vadd.f32 %v89, %v570
  %v572 = vpop.f32.mrb[0].mxu0
  %v573 = vpop.f32.mrb[0].mxu0
  %v574 = vadd.f32 %v89, %v573
  %v575 = vpop.f32.mrb[0].mxu0
  %576 = vmatprep.mubr.bf16.mxu0 0
  %577 = vmatmul.mubr.bf16.gmra.mrb[0].mxu0 %v325
  %v578 = vpop.f32.mrb[0].mxu0
  %v579 = vadd.f32 %v89, %v578
  %v580 = vpop.f32.mrb[0].mxu0
  %v581 = vpop.f32.mrb[0].mxu0
  %v582 = vadd.f32 %v89, %v581
  %v583 = vpop.f32.mrb[0].mxu0
  %584 = vmatprep.mubr.bf16.mxu0 0
  %585 = vmatmul.mubr.bf16.gmra.mrb[0].mxu0 %v328
  %v586 = vpop.f32.mrb[0].mxu0
  %v587 = vadd.f32 %v89, %v586
  %v588 = vpop.f32.mrb[0].mxu0
  %v589 = vpop.f32.mrb[0].mxu0
  %v590 = vadd.f32 %v89, %v589
  %v591 = vpop.f32.mrb[0].mxu0
  %592 = vmatprep.mubr.bf16.mxu0 0
  %593 = vmatmul.mubr.bf16.gmra.mrb[0].mxu0 %v331
  %v594 = vpop.f32.mrb[0].mxu0
  %v595 = vadd.f32 %v89, %v594
  %v596 = vpop.f32.mrb[0].mxu0
  %v597 = vpop.f32.mrb[0].mxu0
  %v598 = vadd.f32 %v89, %v597
  %v599 = vpop.f32.mrb[0].mxu0
  %600 = vmatprep.mubr.bf16.mxu0 0
  %601 = vmatmul.mubr.bf16.gmra.mrb[0].mxu0 %v334
  %v602 = vpop.f32.mrb[0].mxu0
  %v603 = vadd.f32 %v89, %v602
  %v604 = vpop.f32.mrb[0].mxu0
  %v605 = vpop.f32.mrb[0].mxu0
  %v606 = vadd.f32 %v89, %v605
  %v607 = vpop.f32.mrb[0].mxu0
  %608 = vmatprep.mubr.bf16.mxu0 0
  %609 = vmatmul.mubr.bf16.gmra.mrb[0].mxu0 %v337
  %v610 = vpop.f32.mrb[0].mxu0
  %v611 = vadd.f32 %v89, %v610
  %v612 = vpop.f32.mrb[0].mxu0
  %v613 = vpop.f32.mrb[0].mxu0
  %v614 = vadd.f32 %v89, %v613
  %v615 = vpop.f32.mrb[0].mxu0
  %616 = vmatprep.mubr.bf16.mxu0 0
  %617 = vmatmul.mubr.bf16.gmra.mrb[0].mxu0 %v340
  %v618 = vpop.f32.mrb[0].mxu0
  %v619 = vadd.f32 %v89, %v618
  %v620 = vpop.f32.mrb[0].mxu0
  %v621 = vpop.f32.mrb[0].mxu0
  %v622 = vadd.f32 %v89, %v621
  %v623 = vpop.f32.mrb[0].mxu0
  %624 = vmatprep.mubr.bf16.mxu0 0
  %625 = vmatmul.mubr.bf16.gmra.mrb[0].mxu0 %v343
  %v626 = vpop.f32.mrb[0].mxu0
  %v627 = vadd.f32 %v89, %v626
  %v628 = vpop.f32.mrb[0].mxu0
  %v629 = vpop.f32.mrb[0].mxu0
  %v630 = vadd.f32 %v89, %v629
  %v631 = vpop.f32.mrb[0].mxu0
  %632 = vmatprep.mubr.bf16.mxu0 0
  %633 = vmatmul.mubr.bf16.gmra.mrb[0].mxu0 %v346
  %v634 = vpop.f32.mrb[0].mxu0
  %v635 = vadd.f32 %v89, %v634
  %v636 = vpop.f32.mrb[0].mxu0
  %v637 = vpop.f32.mrb[0].mxu0
  %v638 = vadd.f32 %v89, %v637
  %v639 = vpop.f32.mrb[0].mxu0
  %640 = vdwg.mxu0
  %s641 = sld [smem:[#allocation2]]
  %v642 = vstv %s641
  %v643 = vmax.f32 %v387, %v642
  %v644 = vmax.f32 %v390, %v642
  %v645 = vmax.f32 %v395, %v642
  %v646 = vmax.f32 %v398, %v642
  %v647 = vmax.f32 %v403, %v642
  %v648 = vmax.f32 %v406, %v642
  %v649 = vmax.f32 %v411, %v642
  %v650 = vmax.f32 %v414, %v642
  %v651 = vmax.f32 %v419, %v642
  %v652 = vmax.f32 %v422, %v642
  %v653 = vmax.f32 %v427, %v642
  %v654 = vmax.f32 %v430, %v642
  %v655 = vmax.f32 %v435, %v642
  %v656 = vmax.f32 %v438, %v642
  %v657 = vmax.f32 %v443, %v642
  %v658 = vmax.f32 %v446, %v642
  %v659 = vmax.f32 %v451, %v642
  %v660 = vmax.f32 %v454, %v642
  %v661 = vmax.f32 %v459, %v642
  %v662 = vmax.f32 %v462, %v642
  %v663 = vmax.f32 %v467, %v642
  %v664 = vmax.f32 %v470, %v642
  %v665 = vmax.f32 %v475, %v642
  %v666 = vmax.f32 %v478, %v642
  %v667 = vmax.f32 %v483, %v642
  %v668 = vmax.f32 %v486, %v642
  %v669 = vmax.f32 %v491, %v642
  %v670 = vmax.f32 %v494, %v642
  %v671 = vmax.f32 %v499, %v642
  %v672 = vmax.f32 %v502, %v642
  %v673 = vmax.f32 %v507, %v642
  %v674 = vmax.f32 %v510, %v642
  %v675 = vmax.f32 %v515, %v642
  %v676 = vmax.f32 %v518, %v642
  %v677 = vmax.f32 %v523, %v642
  %v678 = vmax.f32 %v526, %v642
  %v679 = vmax.f32 %v531, %v642
  %v680 = vmax.f32 %v534, %v642
  %v681 = vmax.f32 %v539, %v642
  %v682 = vmax.f32 %v542, %v642
  %v683 = vmax.f32 %v547, %v642
  %v684 = vmax.f32 %v550, %v642
  %v685 = vmax.f32 %v555, %v642
  %v686 = vmax.f32 %v558, %v642
  %v687 = vmax.f32 %v563, %v642
  %v688 = vmax.f32 %v566, %v642
  %v689 = vmax.f32 %v571, %v642
  %v690 = vmax.f32 %v574, %v642
  %v691 = vmax.f32 %v579, %v642
  %v692 = vmax.f32 %v582, %v642
  %v693 = vmax.f32 %v587, %v642
  %v694 = vmax.f32 %v590, %v642
  %v695 = vmax.f32 %v595, %v642
  %v696 = vmax.f32 %v598, %v642
  %v697 = vmax.f32 %v603, %v642
  %v698 = vmax.f32 %v606, %v642
  %v699 = vmax.f32 %v611, %v642
  %v700 = vmax.f32 %v614, %v642
  %v701 = vmax.f32 %v619, %v642
  %v702 = vmax.f32 %v622, %v642
  %v703 = vmax.f32 %v627, %v642
  %v704 = vmax.f32 %v630, %v642
  %v705 = vmax.f32 %v635, %v642
  %v706 = vmax.f32 %v638, %v642
  %v707 = vpack.c.bf16 %v644, %v643
  %v708 = vpack.c.bf16 %v646, %v645
  %v709 = vpack.c.bf16 %v648, %v647
  %v710 = vpack.c.bf16 %v650, %v649
  %v711 = vpack.c.bf16 %v652, %v651
  %v712 = vpack.c.bf16 %v654, %v653
  %v713 = vpack.c.bf16 %v656, %v655
  %v714 = vpack.c.bf16 %v658, %v657
  %v715 = vpack.c.bf16 %v660, %v659
  %v716 = vpack.c.bf16 %v662, %v661
  %v717 = vpack.c.bf16 %v664, %v663
  %v718 = vpack.c.bf16 %v666, %v665
  %v719 = vpack.c.bf16 %v668, %v667
  %v720 = vpack.c.bf16 %v670, %v669
  %v721 = vpack.c.bf16 %v672, %v671
  %v722 = vpack.c.bf16 %v674, %v673
  %v723 = vpack.c.bf16 %v676, %v675
  %v724 = vpack.c.bf16 %v678, %v677
  %v725 = vpack.c.bf16 %v680, %v679
  %v726 = vpack.c.bf16 %v682, %v681
  %v727 = vpack.c.bf16 %v684, %v683
  %v728 = vpack.c.bf16 %v686, %v685
  %v729 = vpack.c.bf16 %v688, %v687
  %v730 = vpack.c.bf16 %v690, %v689
  %v731 = vpack.c.bf16 %v692, %v691
  %v732 = vpack.c.bf16 %v694, %v693
  %v733 = vpack.c.bf16 %v696, %v695
  %v734 = vpack.c.bf16 %v698, %v697
  %v735 = vpack.c.bf16 %v700, %v699
  %v736 = vpack.c.bf16 %v702, %v701
  %v737 = vpack.c.bf16 %v704, %v703
  %v738 = vpack.c.bf16 %v706, %v705
  %v771 = vunpack.c.l.b16 %v707
  %v772 = vunpack.c.h.b16 %v707
  %v773 = vunpack.c.l.b16 %v708
  %v774 = vunpack.c.h.b16 %v708
  %v775 = vunpack.c.l.b16 %v709
  %v776 = vunpack.c.h.b16 %v709
  %v777 = vunpack.c.l.b16 %v710
  %v778 = vunpack.c.h.b16 %v710
  %v779 = vunpack.c.l.b16 %v711
  %v780 = vunpack.c.h.b16 %v711
  %v781 = vunpack.c.l.b16 %v712
  %v782 = vunpack.c.h.b16 %v712
  %v783 = vunpack.c.l.b16 %v713
  %v784 = vunpack.c.h.b16 %v713
  %v785 = vunpack.c.l.b16 %v714
  %v786 = vunpack.c.h.b16 %v714
  %v787 = vunpack.c.l.b16 %v715
  %v788 = vunpack.c.h.b16 %v715
  %v789 = vunpack.c.l.b16 %v716
  %v790 = vunpack.c.h.b16 %v716
  %v791 = vunpack.c.l.b16 %v717
  %v792 = vunpack.c.h.b16 %v717
  %v793 = vunpack.c.l.b16 %v718
  %v794 = vunpack.c.h.b16 %v718
  %v795 = vunpack.c.l.b16 %v719
  %v796 = vunpack.c.h.b16 %v719
  %v797 = vunpack.c.l.b16 %v720
  %v798 = vunpack.c.h.b16 %v720
  %v799 = vunpack.c.l.b16 %v721
  %v800 = vunpack.c.h.b16 %v721
  %v801 = vunpack.c.l.b16 %v722
  %v802 = vunpack.c.h.b16 %v722
  %v803 = vunpack.c.l.b16 %v723
  %v804 = vunpack.c.h.b16 %v723
  %v805 = vunpack.c.l.b16 %v724
  %v806 = vunpack.c.h.b16 %v724
  %v807 = vunpack.c.l.b16 %v725
  %v808 = vunpack.c.h.b16 %v725
  %v809 = vunpack.c.l.b16 %v726
  %v810 = vunpack.c.h.b16 %v726
  %v811 = vunpack.c.l.b16 %v727
  %v812 = vunpack.c.h.b16 %v727
  %v813 = vunpack.c.l.b16 %v728
  %v814 = vunpack.c.h.b16 %v728
  %v815 = vunpack.c.l.b16 %v729
  %v816 = vunpack.c.h.b16 %v729
  %v817 = vunpack.c.l.b16 %v730
  %v818 = vunpack.c.h.b16 %v730
  %v819 = vunpack.c.l.b16 %v731
  %v820 = vunpack.c.h.b16 %v731
  %v821 = vunpack.c.l.b16 %v732
  %v822 = vunpack.c.h.b16 %v732
  %v823 = vunpack.c.l.b16 %v733
  %v824 = vunpack.c.h.b16 %v733
  %v825 = vunpack.c.l.b16 %v734
  %v826 = vunpack.c.h.b16 %v734
  %v827 = vunpack.c.l.b16 %v735
  %v828 = vunpack.c.h.b16 %v735
  %v829 = vunpack.c.l.b16 %v736
  %v830 = vunpack.c.h.b16 %v736
  %v831 = vunpack.c.l.b16 %v737
  %v832 = vunpack.c.h.b16 %v737
  %v833 = vunpack.c.l.b16 %v738
  %v834 = vunpack.c.h.b16 %v738
  %v835 = vpack.c.b16 %v771, %v771
  %v836 = vpack.c.b16 %v772, %v772
  %v837 = vpack.c.b16 %v773, %v773
  %v838 = vpack.c.b16 %v774, %v774
  %v839 = vpack.c.b16 %v775, %v775
  %v840 = vpack.c.b16 %v776, %v776
  %v841 = vpack.c.b16 %v777, %v777
  %v842 = vpack.c.b16 %v778, %v778
  %v843 = vpack.c.b16 %v779, %v779
  %v844 = vpack.c.b16 %v780, %v780
  %v845 = vpack.c.b16 %v781, %v781
  %v846 = vpack.c.b16 %v782, %v782
  %v847 = vpack.c.b16 %v783, %v783
  %v848 = vpack.c.b16 %v784, %v784
  %v849 = vpack.c.b16 %v785, %v785
  %v850 = vpack.c.b16 %v786, %v786
  %v851 = vpack.c.b16 %v787, %v787
  %v852 = vpack.c.b16 %v788, %v788
  %v853 = vpack.c.b16 %v789, %v789
  %v854 = vpack.c.b16 %v790, %v790
  %v855 = vpack.c.b16 %v791, %v791
  %v856 = vpack.c.b16 %v792, %v792
  %v857 = vpack.c.b16 %v793, %v793
  %v858 = vpack.c.b16 %v794, %v794
  %v859 = vpack.c.b16 %v795, %v795
  %v860 = vpack.c.b16 %v796, %v796
  %v861 = vpack.c.b16 %v797, %v797
  %v862 = vpack.c.b16 %v798, %v798
  %v863 = vpack.c.b16 %v799, %v799
  %v864 = vpack.c.b16 %v800, %v800
  %v865 = vpack.c.b16 %v801, %v801
  %v866 = vpack.c.b16 %v802, %v802
  %v867 = vpack.c.b16 %v803, %v803
  %v868 = vpack.c.b16 %v804, %v804
  %v869 = vpack.c.b16 %v805, %v805
  %v870 = vpack.c.b16 %v806, %v806
  %v871 = vpack.c.b16 %v807, %v807
  %v872 = vpack.c.b16 %v808, %v808
  %v873 = vpack.c.b16 %v809, %v809
  %v874 = vpack.c.b16 %v810, %v810
  %v875 = vpack.c.b16 %v811, %v811
  %v876 = vpack.c.b16 %v812, %v812
  %v877 = vpack.c.b16 %v813, %v813
  %v878 = vpack.c.b16 %v814, %v814
  %v879 = vpack.c.b16 %v815, %v815
  %v880 = vpack.c.b16 %v816, %v816
  %v881 = vpack.c.b16 %v817, %v817
  %v882 = vpack.c.b16 %v818, %v818
  %v883 = vpack.c.b16 %v819, %v819
  %v884 = vpack.c.b16 %v820, %v820
  %v885 = vpack.c.b16 %v821, %v821
  %v886 = vpack.c.b16 %v822, %v822
  %v887 = vpack.c.b16 %v823, %v823
  %v888 = vpack.c.b16 %v824, %v824
  %v889 = vpack.c.b16 %v825, %v825
  %v890 = vpack.c.b16 %v826, %v826
  %v891 = vpack.c.b16 %v827, %v827
  %v892 = vpack.c.b16 %v828, %v828
  %v893 = vpack.c.b16 %v829, %v829
  %v894 = vpack.c.b16 %v830, %v830
  %v895 = vpack.c.b16 %v831, %v831
  %v896 = vpack.c.b16 %v832, %v832
  %v897 = vpack.c.b16 %v833, %v833
  %v898 = vpack.c.b16 %v834, %v834
  %963 = vst [vmem:[%s4] sm:$0xf] %v835
  %964 = vst [vmem:[%s4 + $0x4] sm:$0xf] %v836
  %965 = vst [vmem:[%s4 + $0x8] sm:$0xf] %v837
  %966 = vst [vmem:[%s4 + $0xc] sm:$0xf] %v838
  %967 = vst [vmem:[%s4 + $0x10] sm:$0xf] %v839
  %968 = vst [vmem:[%s4 + $0x14] sm:$0xf] %v840
  %969 = vst [vmem:[%s4 + $0x18] sm:$0xf] %v841
  %970 = vst [vmem:[%s4 + $0x1c] sm:$0xf] %v842
  %971 = vst [vmem:[%s4 + $0x20] sm:$0xf] %v843
  %972 = vst [vmem:[%s4 + $0x24] sm:$0xf] %v844
  %973 = vst [vmem:[%s4 + $0x28] sm:$0xf] %v845
  %974 = vst [vmem:[%s4 + $0x2c] sm:$0xf] %v846
  %975 = vst [vmem:[%s4 + $0x30] sm:$0xf] %v847
  %976 = vst [vmem:[%s4 + $0x34] sm:$0xf] %v848
  %977 = vst [vmem:[%s4 + $0x38] sm:$0xf] %v849
  %978 = vst [vmem:[%s4 + $0x3c] sm:$0xf] %v850
  %979 = vst [vmem:[%s4 + $0x40] sm:$0xf] %v851
  %980 = vst [vmem:[%s4 + $0x44] sm:$0xf] %v852
  %981 = vst [vmem:[%s4 + $0x48] sm:$0xf] %v853
  %982 = vst [vmem:[%s4 + $0x4c] sm:$0xf] %v854
  %983 = vst [vmem:[%s4 + $0x50] sm:$0xf] %v855
  %984 = vst [vmem:[%s4 + $0x54] sm:$0xf] %v856
  %985 = vst [vmem:[%s4 + $0x58] sm:$0xf] %v857
  %986 = vst [vmem:[%s4 + $0x5c] sm:$0xf] %v858
  %987 = vst [vmem:[%s4 + $0x60] sm:$0xf] %v859
  %988 = vst [vmem:[%s4 + $0x64] sm:$0xf] %v860
  %989 = vst [vmem:[%s4 + $0x68] sm:$0xf] %v861
  %990 = vst [vmem:[%s4 + $0x6c] sm:$0xf] %v862
  %991 = vst [vmem:[%s4 + $0x70] sm:$0xf] %v863
  %992 = vst [vmem:[%s4 + $0x74] sm:$0xf] %v864
  %993 = vst [vmem:[%s4 + $0x78] sm:$0xf] %v865
  %994 = vst [vmem:[%s4 + $0x7c] sm:$0xf] %v866
  %995 = vst [vmem:[%s4 + $0x80] sm:$0xf] %v867
  %996 = vst [vmem:[%s4 + $0x84] sm:$0xf] %v868
  %997 = vst [vmem:[%s4 + $0x88] sm:$0xf] %v869
  %998 = vst [vmem:[%s4 + $0x8c] sm:$0xf] %v870
  %999 = vst [vmem:[%s4 + $0x90] sm:$0xf] %v871
  %1000 = vst [vmem:[%s4 + $0x94] sm:$0xf] %v872
  %1001 = vst [vmem:[%s4 + $0x98] sm:$0xf] %v873
  %1002 = vst [vmem:[%s4 + $0x9c] sm:$0xf] %v874
  %1003 = vst [vmem:[%s4 + $0xa0] sm:$0xf] %v875
  %1004 = vst [vmem:[%s4 + $0xa4] sm:$0xf] %v876
  %1005 = vst [vmem:[%s4 + $0xa8] sm:$0xf] %v877
  %1006 = vst [vmem:[%s4 + $0xac] sm:$0xf] %v878
  %1007 = vst [vmem:[%s4 + $0xb0] sm:$0xf] %v879
  %1008 = vst [vmem:[%s4 + $0xb4] sm:$0xf] %v880
  %1009 = vst [vmem:[%s4 + $0xb8] sm:$0xf] %v881
  %1010 = vst [vmem:[%s4 + $0xbc] sm:$0xf] %v882
  %1011 = vst [vmem:[%s4 + $0xc0] sm:$0xf] %v883
  %1012 = vst [vmem:[%s4 + $0xc4] sm:$0xf] %v884
  %1013 = vst [vmem:[%s4 + $0xc8] sm:$0xf] %v885
  %1014 = vst [vmem:[%s4 + $0xcc] sm:$0xf] %v886
  %1015 = vst [vmem:[%s4 + $0xd0] sm:$0xf] %v887
  %1016 = vst [vmem:[%s4 + $0xd4] sm:$0xf] %v888
  %1017 = vst [vmem:[%s4 + $0xd8] sm:$0xf] %v889
  %1018 = vst [vmem:[%s4 + $0xdc] sm:$0xf] %v890
  %1019 = vst [vmem:[%s4 + $0xe0] sm:$0xf] %v891
  %1020 = vst [vmem:[%s4 + $0xe4] sm:$0xf] %v892
  %1021 = vst [vmem:[%s4 + $0xe8] sm:$0xf] %v893
  %1022 = vst [vmem:[%s4 + $0xec] sm:$0xf] %v894
  %1023 = vst [vmem:[%s4 + $0xf0] sm:$0xf] %v895
  %1024 = vst [vmem:[%s4 + $0xf4] sm:$0xf] %v896
  %1025 = vst [vmem:[%s4 + $0xf8] sm:$0xf] %v897
  %1026 = vst [vmem:[%s4 + $0xfc] sm:$0xf] %v898
  // Predicated region
  $region18: #{_lambda_.4} parent=0 // pred_check
    _
  $region19: #{_lambda_.4} parent=0 // pred_check_branch
    %1028 = sbr.rel (0) target = $region21
  $region20: #{_lambda_.4} parent=0 // pred_region
    _
  $region21: #{_lambda_.4} parent=0 // pred_fallthru
    _
  // Predicated region
  $region22: #{_lambda_.4} parent=0 // pred_check
    _
  $region23: #{_lambda_.4} parent=0 // pred_check_branch
    %1030 = sbr.rel (0) target = $region25
  $region24: #{_lambda_.4} parent=0 // pred_region
    _
  $region25: #{_lambda_.4} parent=0 // pred_fallthru
    _

// kernel: _lambda_.7
$region0: #{_lambda_.7}
  #allocation0 [shape = 'u32[]', space=smem, size = 0x4, offset = 0x4, fixed_abs, tag = 'smem constant byte address 0x4 - core index']
  #allocation1 [shape = 'u32[144,128]{1,0:T(1,128)}', space=vmem, size = 0x12000, scoped, tag = 'internal scratch']
  #allocation2 [shape = 'f32[1,1]{1,0:T(1,128)S(6)}', space=smem, size = 0x200, scoped, tag = 'scoped memory for _lambda_.7']
  %s0 = inlined_call_operand.vmem [shape: bf16[128,128], index: 0, kind: input, shape index: {}]
  %s1 = inlined_call_operand.vmem [shape: bf16[128,128], index: 1, kind: input, shape index: {}]
  %s2 = inlined_call_operand.vmem [shape: f32[1,128], index: 2, kind: input, shape index: {}]
  %s3 = inlined_call_operand.<no memory space> [shape: f32[1,1], index: 3, kind: input, shape index: {}]
  %s4 = inlined_call_operand.vmem [shape: bf16[128,128], index: 4, kind: input, shape index: {}]
  %s5 = inlined_call_operand.hbm [shape: f32[128,128], index: 5, kind: output, shape index: {}]
  %s6 = sld [smem:[#allocation0]]
  $region30: #{_lambda_.7} parent=0
    _
  %s8 = ssub.s32 1, %s6
  %s9 = scalar_select 0, %s8, %s6
  %10 = sst [smem:[#allocation2]] %s3
  $region1: #{_lambda_.7} parent=0
    #allocation3 [shape = 'u8[65536]{0}', space=vmem, size = 0x10000, scoped, tag = 'output window, operand 0, single buffered']
    #allocation4 [shape = 's32[1]{0}', space=sflag, size = 0x4, scoped, tag = 'scoped memory for _lambda_.7']
    %11 = vsyncpa [#allocation4], 0
    // Predicated region
    $region2: #{_lambda_.7} parent=1 // pred_check
      _
    $region3: #{_lambda_.7} parent=1 // pred_check_branch
      %13 = sbr.rel (0) target = $region5
    $region4: #{_lambda_.7} parent=1 // pred_region
      _
    $region5: #{_lambda_.7} parent=1 // pred_fallthru
      _
    // Predicated region
    $region6: #{_lambda_.7} parent=1 // pred_check
      _
    $region7: #{_lambda_.7} parent=1 // pred_check_branch
      %15 = sbr.rel (0) target = $region9
    $region8: #{_lambda_.7} parent=1 // pred_region
      _
    $region9: #{_lambda_.7} parent=1 // pred_fallthru
      _
    // Predicated region
    $region10: #{_lambda_.7} parent=1 // pred_check
      _
    $region11: #{_lambda_.7} parent=1 // pred_check_branch
      %17 = sbr.rel (0) target = $region13
    $region12: #{_lambda_.7} parent=1 // pred_region
      _
    $region13: #{_lambda_.7} parent=1 // pred_fallthru
      _
    // Predicated region
    $region14: #{_lambda_.7} parent=1 // pred_check
      _
    $region15: #{_lambda_.7} parent=1 // pred_check_branch
      %19 = sbr.rel (0) target = $region17
    $region16: #{_lambda_.7} parent=1 // pred_region
      _
    $region17: #{_lambda_.7} parent=1 // pred_fallthru
      _
    // Predicated region
    $region18: #{_lambda_.7} parent=1 // pred_check
      _
    $region19: #{_lambda_.7} parent=1 // pred_check_branch
      %21 = sbr.rel (0) target = $region21
    $region20: #{_lambda_.7} parent=1 // pred_region
      _
    $region21: #{_lambda_.7} parent=1 // pred_fallthru
      _
    %v23 = vld [vmem:[%s0] sm:$0xf]
    %v24 = vld [vmem:[%s0 + $0x4] sm:$0xf]
    %v25 = vld [vmem:[%s0 + $0x8] sm:$0xf]
    %v26 = vld [vmem:[%s0 + $0xc] sm:$0xf]
    %v27 = vld [vmem:[%s0 + $0x10] sm:$0xf]
    %v28 = vld [vmem:[%s0 + $0x14] sm:$0xf]
    %v29 = vld [vmem:[%s0 + $0x18] sm:$0xf]
    %v30 = vld [vmem:[%s0 + $0x1c] sm:$0xf]
    %v31 = vld [vmem:[%s0 + $0x20] sm:$0xf]
    %v32 = vld [vmem:[%s0 + $0x24] sm:$0xf]
    %v33 = vld [vmem:[%s0 + $0x28] sm:$0xf]
    %v34 = vld [vmem:[%s0 + $0x2c] sm:$0xf]
    %v35 = vld [vmem:[%s0 + $0x30] sm:$0xf]
    %v36 = vld [vmem:[%s0 + $0x34] sm:$0xf]
    %v37 = vld [vmem:[%s0 + $0x38] sm:$0xf]
    %v38 = vld [vmem:[%s0 + $0x3c] sm:$0xf]
    %v39 = vld [vmem:[%s1] sm:$0xf]
    %v40 = vld [vmem:[%s1 + $0x4] sm:$0xf]
    %v41 = vld [vmem:[%s1 + $0x8] sm:$0xf]
    %v42 = vld [vmem:[%s1 + $0xc] sm:$0xf]
    %v43 = vld [vmem:[%s1 + $0x10] sm:$0xf]
    %v44 = vld [vmem:[%s1 + $0x14] sm:$0xf]
    %v45 = vld [vmem:[%s1 + $0x18] sm:$0xf]
    %v46 = vld [vmem:[%s1 + $0x1c] sm:$0xf]
    %v47 = vld [vmem:[%s1 + $0x20] sm:$0xf]
    %v48 = vld [vmem:[%s1 + $0x24] sm:$0xf]
    %v49 = vld [vmem:[%s1 + $0x28] sm:$0xf]
    %v50 = vld [vmem:[%s1 + $0x2c] sm:$0xf]
    %v51 = vld [vmem:[%s1 + $0x30] sm:$0xf]
    %v52 = vld [vmem:[%s1 + $0x34] sm:$0xf]
    %v53 = vld [vmem:[%s1 + $0x38] sm:$0xf]
    %v54 = vld [vmem:[%s1 + $0x3c] sm:$0xf]
    %v55 = vld [vmem:[%s2] sm:$0x1]
    %v57 = vlaneseq
    %v58 = vshrl.u32 %v57, 7
    %v59 = vsub.s32 0, %v58
    %v60 = vrot.slane %v55, %v59
    %v78 = vunpack.c.l.b16 %v23
    %v79 = vunpack.c.l.b16 %v24
    %v80 = vunpack.c.l.b16 %v25
    %v81 = vunpack.c.l.b16 %v26
    %v82 = vunpack.c.l.b16 %v27
    %v83 = vunpack.c.l.b16 %v28
    %v84 = vunpack.c.l.b16 %v29
    %v85 = vunpack.c.l.b16 %v30
    %v86 = vunpack.c.l.b16 %v31
    %v87 = vunpack.c.l.b16 %v32
    %v88 = vunpack.c.l.b16 %v33
    %v89 = vunpack.c.l.b16 %v34
    %v90 = vunpack.c.l.b16 %v35
    %v91 = vunpack.c.l.b16 %v36
    %v92 = vunpack.c.l.b16 %v37
    %v93 = vunpack.c.l.b16 %v38
    %v94 = vpack.c.b16 %v79, %v78
    %v95 = vpack.c.b16 %v81, %v80
    %v96 = vpack.c.b16 %v83, %v82
    %v97 = vpack.c.b16 %v85, %v84
    %v98 = vpack.c.b16 %v87, %v86
    %v99 = vpack.c.b16 %v89, %v88
    %v100 = vpack.c.b16 %v91, %v90
    %v101 = vpack.c.b16 %v93, %v92
    %v126 = vunpack.c.l.b16 %v39
    %v127 = vunpack.c.l.b16 %v40
    %v128 = vunpack.c.l.b16 %v41
    %v129 = vunpack.c.l.b16 %v42
    %v130 = vunpack.c.l.b16 %v43
    %v131 = vunpack.c.l.b16 %v44
    %v132 = vunpack.c.l.b16 %v45
    %v133 = vunpack.c.l.b16 %v46
    %v134 = vunpack.c.l.b16 %v47
    %v135 = vunpack.c.l.b16 %v48
    %v136 = vunpack.c.l.b16 %v49
    %v137 = vunpack.c.l.b16 %v50
    %v138 = vunpack.c.l.b16 %v51
    %v139 = vunpack.c.l.b16 %v52
    %v140 = vunpack.c.l.b16 %v53
    %v141 = vunpack.c.l.b16 %v54
    %v142 = vpack.c.b16 %v127, %v126
    %v143 = vpack.c.b16 %v129, %v128
    %v144 = vpack.c.b16 %v131, %v130
    %v145 = vpack.c.b16 %v133, %v132
    %v146 = vpack.c.b16 %v135, %v134
    %v147 = vpack.c.b16 %v137, %v136
    %v148 = vpack.c.b16 %v139, %v138
    %v149 = vpack.c.b16 %v141, %v140
    %158 = vmatprep.subr.bf16.mxu0 0
    %159 = vmatpush1.bf16.msra.mxu0 %v142
    %160 = vmatprep.subr.bf16.mxu0 0
    %161 = vmatpush1.bf16.msra.mxu0 %v143
    %162 = vmatprep.subr.bf16.mxu0 0
    %163 = vmatpush1.bf16.msra.mxu0 %v144
    %164 = vmatprep.subr.bf16.mxu0 0
    %165 = vmatpush1.bf16.msra.mxu0 %v145
    %166 = vmatprep.subr.bf16.mxu0 0
    %167 = vmatpush1.bf16.msra.mxu0 %v146
    %168 = vmatprep.subr.bf16.mxu0 0
    %169 = vmatpush1.bf16.msra.mxu0 %v147
    %170 = vmatprep.subr.bf16.mxu0 0
    %171 = vmatpush1.bf16.msra.mxu0 %v148
    %172 = vmatprep.subr.bf16.mxu0 0
    %173 = vmatpush1.bf16.msra.mxu0 %v149
    %174 = vmatprep.subr.bf16.mxu0 0
    %175 = vmatpush1.bf16.msra.mxu0 0
    %176 = vmatprep.subr.bf16.mxu0 0
    %177 = vmatpush1.bf16.msra.mxu0 0
    %178 = vmatprep.subr.bf16.mxu0 0
    %179 = vmatpush1.bf16.msra.mxu0 0
    %180 = vmatprep.subr.bf16.mxu0 0
    %181 = vmatpush1.bf16.msra.mxu0 0
    %182 = vmatprep.subr.bf16.mxu0 0
    %183 = vmatpush1.bf16.msra.mxu0 0
    %184 = vmatprep.subr.bf16.mxu0 0
    %185 = vmatpush1.bf16.msra.mxu0 0
    %186 = vmatprep.subr.bf16.mxu0 0
    %187 = vmatpush1.bf16.msra.mxu0 0
    %188 = vmatprep.subr.bf16.mxu0 0
    %189 = vmatpush1.bf16.msra.mxu0 0
    %190 = vmatprep.mubr.bf16.mxu0 0
    %191 = vmatmul.mubr.bf16.gmra.mrb[0].mxu0 %v94
    %v192 = vpop.f32.mrb[0].mxu0
    %v193 = vadd.f32 %v60, %v192
    %v194 = vpop.f32.mrb[0].mxu0
    %v195 = vpop.f32.mrb[0].mxu0
    %v196 = vadd.f32 %v60, %v195
    %v197 = vpop.f32.mrb[0].mxu0
    %198 = vmatprep.mubr.bf16.mxu0 0
    %199 = vmatmul.mubr.bf16.gmra.mrb[0].mxu0 %v95
    %v200 = vpop.f32.mrb[0].mxu0
    %v201 = vadd.f32 %v60, %v200
    %v202 = vpop.f32.mrb[0].mxu0
    %v203 = vpop.f32.mrb[0].mxu0
    %v204 = vadd.f32 %v60, %v203
    %v205 = vpop.f32.mrb[0].mxu0
    %206 = vmatprep.mubr.bf16.mxu0 0
    %207 = vmatmul.mubr.bf16.gmra.mrb[0].mxu0 %v96
    %v208 = vpop.f32.mrb[0].mxu0
    %v209 = vadd.f32 %v60, %v208
    %v210 = vpop.f32.mrb[0].mxu0
    %v211 = vpop.f32.mrb[0].mxu0
    %v212 = vadd.f32 %v60, %v211
    %v213 = vpop.f32.mrb[0].mxu0
    %214 = vmatprep.mubr.bf16.mxu0 0
    %215 = vmatmul.mubr.bf16.gmra.mrb[0].mxu0 %v97
    %v216 = vpop.f32.mrb[0].mxu0
    %v217 = vadd.f32 %v60, %v216
    %v218 = vpop.f32.mrb[0].mxu0
    %v219 = vpop.f32.mrb[0].mxu0
    %v220 = vadd.f32 %v60, %v219
    %v221 = vpop.f32.mrb[0].mxu0
    %222 = vmatprep.mubr.bf16.mxu0 0
    %223 = vmatmul.mubr.bf16.gmra.mrb[0].mxu0 %v98
    %v224 = vpop.f32.mrb[0].mxu0
    %v225 = vadd.f32 %v60, %v224
    %v226 = vpop.f32.mrb[0].mxu0
    %v227 = vpop.f32.mrb[0].mxu0
    %v228 = vadd.f32 %v60, %v227
    %v229 = vpop.f32.mrb[0].mxu0
    %230 = vmatprep.mubr.bf16.mxu0 0
    %231 = vmatmul.mubr.bf16.gmra.mrb[0].mxu0 %v99
    %v232 = vpop.f32.mrb[0].mxu0
    %v233 = vadd.f32 %v60, %v232
    %v234 = vpop.f32.mrb[0].mxu0
    %v235 = vpop.f32.mrb[0].mxu0
    %v236 = vadd.f32 %v60, %v235
    %v237 = vpop.f32.mrb[0].mxu0
    %238 = vmatprep.mubr.bf16.mxu0 0
    %239 = vmatmul.mubr.bf16.gmra.mrb[0].mxu0 %v100
    %v240 = vpop.f32.mrb[0].mxu0
    %v241 = vadd.f32 %v60, %v240
    %v242 = vpop.f32.mrb[0].mxu0
    %v243 = vpop.f32.mrb[0].mxu0
    %v244 = vadd.f32 %v60, %v243
    %v245 = vpop.f32.mrb[0].mxu0
    %246 = vmatprep.mubr.bf16.mxu0 0
    %247 = vmatmul.mubr.bf16.gmra.mrb[0].mxu0 %v101
    %v248 = vpop.f32.mrb[0].mxu0
    %v249 = vadd.f32 %v60, %v248
    %v250 = vpop.f32.mrb[0].mxu0
    %v251 = vpop.f32.mrb[0].mxu0
    %v252 = vadd.f32 %v60, %v251
    %v253 = vpop.f32.mrb[0].mxu0
    %254 = vdwg.mxu0
    %v255 = vld [vmem:[%s4] sm:$0xf]
    %v256 = vld [vmem:[%s4 + $0x4] sm:$0xf]
    %v257 = vld [vmem:[%s4 + $0x8] sm:$0xf]
    %v258 = vld [vmem:[%s4 + $0xc] sm:$0xf]
    %v259 = vld [vmem:[%s4 + $0x10] sm:$0xf]
    %v260 = vld [vmem:[%s4 + $0x14] sm:$0xf]
    %v261 = vld [vmem:[%s4 + $0x18] sm:$0xf]
    %v262 = vld [vmem:[%s4 + $0x1c] sm:$0xf]
    %v263 = vld [vmem:[%s4 + $0x20] sm:$0xf]
    %v264 = vld [vmem:[%s4 + $0x24] sm:$0xf]
    %v265 = vld [vmem:[%s4 + $0x28] sm:$0xf]
    %v266 = vld [vmem:[%s4 + $0x2c] sm:$0xf]
    %v267 = vld [vmem:[%s4 + $0x30] sm:$0xf]
    %v268 = vld [vmem:[%s4 + $0x34] sm:$0xf]
    %v269 = vld [vmem:[%s4 + $0x38] sm:$0xf]
    %v270 = vld [vmem:[%s4 + $0x3c] sm:$0xf]
    %v271 = vunpack.c.l.bf16 %v255
    %v272 = vunpack.c.l.bf16 %v256
    %v273 = vunpack.c.l.bf16 %v257
    %v274 = vunpack.c.l.bf16 %v258
    %v275 = vunpack.c.l.bf16 %v259
    %v276 = vunpack.c.l.bf16 %v260
    %v277 = vunpack.c.l.bf16 %v261
    %v278 = vunpack.c.l.bf16 %v262
    %v279 = vunpack.c.l.bf16 %v263
    %v280 = vunpack.c.l.bf16 %v264
    %v281 = vunpack.c.l.bf16 %v265
    %v282 = vunpack.c.l.bf16 %v266
    %v283 = vunpack.c.l.bf16 %v267
    %v284 = vunpack.c.l.bf16 %v268
    %v285 = vunpack.c.l.bf16 %v269
    %v286 = vunpack.c.l.bf16 %v270
    %v287 = vadd.f32 %v193, %v271
    %v288 = vadd.f32 %v196, %v272
    %v289 = vadd.f32 %v201, %v273
    %v290 = vadd.f32 %v204, %v274
    %v291 = vadd.f32 %v209, %v275
    %v292 = vadd.f32 %v212, %v276
    %v293 = vadd.f32 %v217, %v277
    %v294 = vadd.f32 %v220, %v278
    %v295 = vadd.f32 %v225, %v279
    %v296 = vadd.f32 %v228, %v280
    %v297 = vadd.f32 %v233, %v281
    %v298 = vadd.f32 %v236, %v282
    %v299 = vadd.f32 %v241, %v283
    %v300 = vadd.f32 %v244, %v284
    %v301 = vadd.f32 %v249, %v285
    %v302 = vadd.f32 %v252, %v286
    %s303 = sld [smem:[#allocation2]]
    %v304 = vstv %s303
    %v305 = vmax.f32 %v287, %v304
    %v306 = vmax.f32 %v288, %v304
    %v307 = vmax.f32 %v289, %v304
    %v308 = vmax.f32 %v290, %v304
    %v309 = vmax.f32 %v291, %v304
    %v310 = vmax.f32 %v292, %v304
    %v311 = vmax.f32 %v293, %v304
    %v312 = vmax.f32 %v294, %v304
    %v313 = vmax.f32 %v295, %v304
    %v314 = vmax.f32 %v296, %v304
    %v315 = vmax.f32 %v297, %v304
    %v316 = vmax.f32 %v298, %v304
    %v317 = vmax.f32 %v299, %v304
    %v318 = vmax.f32 %v300, %v304
    %v319 = vmax.f32 %v301, %v304
    %v320 = vmax.f32 %v302, %v304
    %321 = vst [vmem:[#allocation3] sm:$0xff] %v305
    %322 = vst [vmem:[#allocation3 + $0x8] sm:$0xff] %v306
    %323 = vst [vmem:[#allocation3 + $0x10] sm:$0xff] %v307
    %324 = vst [vmem:[#allocation3 + $0x18] sm:$0xff] %v308
    %325 = vst [vmem:[#allocation3 + $0x20] sm:$0xff] %v309
    %326 = vst [vmem:[#allocation3 + $0x28] sm:$0xff] %v310
    %327 = vst [vmem:[#allocation3 + $0x30] sm:$0xff] %v311
    %328 = vst [vmem:[#allocation3 + $0x38] sm:$0xff] %v312
    %329 = vst [vmem:[#allocation3 + $0x40] sm:$0xff] %v313
    %330 = vst [vmem:[#allocation3 + $0x48] sm:$0xff] %v314
    %331 = vst [vmem:[#allocation3 + $0x50] sm:$0xff] %v315
    %332 = vst [vmem:[#allocation3 + $0x58] sm:$0xff] %v316
    %333 = vst [vmem:[#allocation3 + $0x60] sm:$0xff] %v317
    %334 = vst [vmem:[#allocation3 + $0x68] sm:$0xff] %v318
    %335 = vst [vmem:[#allocation3 + $0x70] sm:$0xff] %v319
    %336 = vst [vmem:[#allocation3 + $0x78] sm:$0xff] %v320
    // Predicated region
    $region22: #{_lambda_.7} parent=1 // pred_check
      _
    $region23: #{_lambda_.7} parent=1 // pred_check_branch
      %338 = sbr.rel (0) target = $region25
    $region24: #{_lambda_.7} parent=1 // pred_region
      %s340 = ssub.s32 2048, 2048
      %341 = vsyncadd [#allocation4], %s340
      %s342 = sshll.u32 [#allocation3], 4
      %s343 = int_to_ptr.vmem [resolvable:$true] %s342
      %348 = dma.vmem_to_hbm [thread:$0]  %s343, 2048, %s5, [#allocation4], 128, 128, 8
    $region25: #{_lambda_.7} parent=1 // pred_fallthru
      _
    // Predicated region
    $region26: #{_lambda_.7} parent=1 // pred_check
      _
    $region27: #{_lambda_.7} parent=1 // pred_check_branch
      %350 = sbr.rel (0) target = $region29
    $region28: #{_lambda_.7} parent=1 // pred_region
      %351 = dma.done [#allocation4], 2048
    $region29: #{_lambda_.7} parent=1 // pred_fallthru
      _
    %352 = vsyncpa [#allocation4], 1

// kernel: _lambda_.5
$region0: #{_lambda_.5}
  #allocation0 [shape = 'u32[]', space=smem, size = 0x4, offset = 0x4, fixed_abs, tag = 'smem constant byte address 0x4 - core index']
  #allocation1 [shape = 'u32[144,128]{1,0:T(1,128)}', space=vmem, size = 0x12000, scoped, tag = 'internal scratch']
  #allocation2 [shape = 'f32[1,1]{1,0:T(1,128)S(6)}', space=smem, size = 0x200, scoped, tag = 'scoped memory for _lambda_.5']
  %s0 = inlined_call_operand.vmem [shape: bf16[16,5,9,128], index: 0, kind: input, shape index: {}]
  %s1 = inlined_call_operand.vmem [shape: bf16[9,128,128], index: 1, kind: input, shape index: {}]
  %s2 = inlined_call_operand.vmem [shape: f32[1,128], index: 2, kind: input, shape index: {}]
  %s3 = inlined_call_operand.<no memory space> [shape: f32[1,1], index: 3, kind: input, shape index: {}]
  %s4 = inlined_call_operand.vmem [shape: bf16[4,32,128], index: 4, kind: output, shape index: {}]
  %s5 = sld [smem:[#allocation0]]
  $region49: #{_lambda_.5} parent=0
    _
  %s7 = ssub.s32 1, %s5
  %s8 = scalar_select 0, %s7, %s5
  %9 = sst [smem:[#allocation2]] %s3
  loop: start=0, step=1, limit=6
  $region2: #{_lambda_.5} parent=0 // loop_pre_header
    _
  $region3: #{_lambda_.5} parent=0 // loop_header
    %s11 = sphi 0, %s15
    %p12 = scmp.ge.s32.totalorder %s11, 6
    %s21 = sphi 0, %s23
    %s24 = sphi 0, %s21
    %s25 = sphi 0, %s24
    %s41 = sphi 0, %s25
    %s45 = sphi 0, %s45
    %s47 = sphi 0, %s45
    %s48 = sphi 0, %s47
    %s62 = sphi 0, %s48
    %s66 = sphi 0, %s66
    %s68 = sphi 0, %s66
    %s69 = sphi 0, %s68
    %s83 = sphi 0, %s69
    %s87 = sphi 0, %s87
    %s89 = sphi 0, %s87
    %s90 = sphi 0, %s89
    %s104 = sphi 0, %s90
    %s110 = sphi 0, %s112
    %s113 = sphi 0, %s110
    %s114 = sphi 0, %s113
    %s130 = sphi 0, %s114
  $region4: #{_lambda_.5} parent=0 // loop_header_branch
    %14 = sbr.rel (%p12) target = $region8
  $region5: #{_lambda_.5} parent=0 // loop_body
    %s16 = ssub.s32 %s11, 1
    %s17 = ssub.s32 %s11, 2
    %s18 = sadd.s32 %s11, 1
    %s19 = ssub.s32 %s11, %s18
    %p20 = scmp.eq.s32.totalorder %s19, 0
    %s22 = sadd.s32 %s21, 1
    %s23 = scalar_select %p20, %s21, %s22
    %p26 = pneg %p20
    %p27 = scmp.eq.s32.totalorder %s11, 3
    %p28 = por %p26, %p27
    %p29 = scmp.ne.s32.totalorder %s21, %s24
    %p30 = scmp.eq.s32.totalorder %s11, 0
    %p31 = por %p29, %p30
    %p32 = scmp.ne.s32.totalorder %s21, %s24
    %p33 = scmp.eq.s32.totalorder %s16, 3
    %p34 = por %p32, %p33
    %p35 = scmp.ne.s32.totalorder %s24, %s25
    %p36 = scmp.eq.s32.totalorder %s16, 0
    %p37 = por %p35, %p36
    %p38 = scmp.ne.s32.totalorder %s24, %s25
    %p39 = scmp.eq.s32.totalorder %s17, 3
    %p40 = por %p38, %p39
    %p42 = scmp.ne.s32.totalorder %s25, %s41
    %p43 = scmp.eq.s32.totalorder %s17, 0
    %p44 = por %p42, %p43
    %s46 = sadd.s32 %s45, 1
    %p49 = scmp.eq.s32.totalorder %s11, 3
    %p50 = scmp.ne.s32.totalorder %s45, %s47
    %p51 = scmp.eq.s32.totalorder %s11, 0
    %p52 = por %p50, %p51
    %p53 = scmp.ne.s32.totalorder %s45, %s47
    %p54 = scmp.eq.s32.totalorder %s16, 3
    %p55 = por %p53, %p54
    %p56 = scmp.ne.s32.totalorder %s47, %s48
    %p57 = scmp.eq.s32.totalorder %s16, 0
    %p58 = por %p56, %p57
    %p59 = scmp.ne.s32.totalorder %s47, %s48
    %p60 = scmp.eq.s32.totalorder %s17, 3
    %p61 = por %p59, %p60
    %p63 = scmp.ne.s32.totalorder %s48, %s62
    %p64 = scmp.eq.s32.totalorder %s17, 0
    %p65 = por %p63, %p64
    %s67 = sadd.s32 %s66, 1
    %p70 = scmp.eq.s32.totalorder %s11, 3
    %p71 = scmp.ne.s32.totalorder %s66, %s68
    %p72 = scmp.eq.s32.totalorder %s11, 0
    %p73 = por %p71, %p72
    %p74 = scmp.ne.s32.totalorder %s66, %s68
    %p75 = scmp.eq.s32.totalorder %s16, 3
    %p76 = por %p74, %p75
    %p77 = scmp.ne.s32.totalorder %s68, %s69
    %p78 = scmp.eq.s32.totalorder %s16, 0
    %p79 = por %p77, %p78
    %p80 = scmp.ne.s32.totalorder %s68, %s69
    %p81 = scmp.eq.s32.totalorder %s17, 3
    %p82 = por %p80, %p81
    %p84 = scmp.ne.s32.totalorder %s69, %s83
    %p85 = scmp.eq.s32.totalorder %s17, 0
    %p86 = por %p84, %p85
    %s88 = sadd.s32 %s87, 1
    %p91 = scmp.eq.s32.totalorder %s11, 3
    %p92 = scmp.ne.s32.totalorder %s87, %s89
    %p93 = scmp.eq.s32.totalorder %s11, 0
    %p94 = por %p92, %p93
    %p95 = scmp.ne.s32.totalorder %s87, %s89
    %p96 = scmp.eq.s32.totalorder %s16, 3
    %p97 = por %p95, %p96
    %p98 = scmp.ne.s32.totalorder %s89, %s90
    %p99 = scmp.eq.s32.totalorder %s16, 0
    %p100 = por %p98, %p99
    %p101 = scmp.ne.s32.totalorder %s89, %s90
    %p102 = scmp.eq.s32.totalorder %s17, 3
    %p103 = por %p101, %p102
    %p105 = scmp.ne.s32.totalorder %s90, %s104
    %p106 = scmp.eq.s32.totalorder %s17, 0
    %p107 = por %p105, %p106
    %s108 = ssub.s32 %s11, %s18
    %p109 = scmp.eq.s32.totalorder %s108, 0
    %s111 = sadd.s32 %s110, 1
    %s112 = scalar_select %p109, %s110, %s111
    %p115 = pneg %p109
    %p116 = scmp.eq.s32.totalorder %s11, 3
    %p117 = por %p115, %p116
    %p118 = scmp.ne.s32.totalorder %s110, %s113
    %p119 = scmp.eq.s32.totalorder %s11, 0
    %p120 = por %p118, %p119
    %p121 = scmp.ne.s32.totalorder %s110, %s113
    %p122 = scmp.eq.s32.totalorder %s16, 3
    %p123 = por %p121, %p122
    %p124 = scmp.ne.s32.totalorder %s113, %s114
    %p125 = scmp.eq.s32.totalorder %s16, 0
    %p126 = por %p124, %p125
    %p127 = scmp.ne.s32.totalorder %s113, %s114
    %p128 = scmp.eq.s32.totalorder %s17, 3
    %p129 = por %p127, %p128
    %p131 = scmp.ne.s32.totalorder %s114, %s130
    %p132 = scmp.eq.s32.totalorder %s17, 0
    %p133 = por %p131, %p132
    %p134 = scmp.le.s32.totalorder 1, %s11
    %p135 = scmp.lt.s32.totalorder %s11, 5
    %p136 = pnand %p134, %p135
    %p137 = pneg %p136
    // Predicated region
    $region9: #{_lambda_.5} parent=5 // pred_check
      _
    $region10: #{_lambda_.5} parent=5 // pred_check_branch
      %139 = sbr.rel (%p136) target = $region12
    $region11: #{_lambda_.5} parent=5 // pred_region
      %s140 = ssub.s32 %s11, 1
      // Predicated region
      $region13: #{_lambda_.5} parent=11 // pred_check
        %p141 = pneg %p58
      $region14: #{_lambda_.5} parent=11 // pred_check_branch
        %143 = sbr.rel (%p141) target = $region16
      $region15: #{_lambda_.5} parent=11 // pred_region
        _
      $region16: #{_lambda_.5} parent=11 // pred_fallthru
        _
      // Predicated region
      $region17: #{_lambda_.5} parent=11 // pred_check
        %p144 = pneg %p79
      $region18: #{_lambda_.5} parent=11 // pred_check_branch
        %146 = sbr.rel (%p144) target = $region20
      $region19: #{_lambda_.5} parent=11 // pred_region
        _
      $region20: #{_lambda_.5} parent=11 // pred_fallthru
        _
      // Predicated region
      $region21: #{_lambda_.5} parent=11 // pred_check
        %p147 = pneg %p100
      $region22: #{_lambda_.5} parent=11 // pred_check_branch
        %149 = sbr.rel (%p147) target = $region24
      $region23: #{_lambda_.5} parent=11 // pred_region
        _
      $region24: #{_lambda_.5} parent=11 // pred_fallthru
        _
    $region12: #{_lambda_.5} parent=5 // pred_fallthru
      _
    %p150 = scmp.lt.s32.totalorder %s11, 4
    // Predicated region
    $region25: #{_lambda_.5} parent=5 // pred_check
      %p151 = pneg %p150
    $region26: #{_lambda_.5} parent=5 // pred_check_branch
      %153 = sbr.rel (%p151) target = $region28
    $region27: #{_lambda_.5} parent=5 // pred_region
      // Predicated region
      $region29: #{_lambda_.5} parent=27 // pred_check
        %p154 = pneg %p31
      $region30: #{_lambda_.5} parent=27 // pred_check_branch
        %156 = sbr.rel (%p154) target = $region32
      $region31: #{_lambda_.5} parent=27 // pred_region
        %s157 = smul.u32 4, %s11
        %p158 = scmp.lt.s32.totalorder %s157, 15
        %s159 = scalar_select %p158, %s157, 15
        %s160 = smul.addr %s159, 10
        %s161 = smul.addr %s160, 4
        %s162 = scalar_lea.vmem %s0, %s161
        %s163 = smul.u32 4, %s11
      $region32: #{_lambda_.5} parent=27 // pred_fallthru
        _
    $region28: #{_lambda_.5} parent=5 // pred_fallthru
      _
    %p164 = scmp.le.s32.totalorder 1, %s11
    %p165 = scmp.lt.s32.totalorder %s11, 5
    %p166 = pnand %p164, %p165
    %p167 = pneg %p166
    // Predicated region
    $region33: #{_lambda_.5} parent=5 // pred_check
      _
    $region34: #{_lambda_.5} parent=5 // pred_check_branch
      %169 = sbr.rel (%p166) target = $region36
    $region35: #{_lambda_.5} parent=5 // pred_region
      %s170 = ssub.s32 %s11, 1
      %s171 = smul.u32 4, %s16
      %p172 = scmp.lt.s32.totalorder %s171, 15
      %s173 = scalar_select %p172, %s171, 15
      %s174 = smul.addr %s173, 10
      %s175 = smul.addr %s174, 4
      %s176 = scalar_lea.vmem %s0, %s175
      %p177 = pneg %p37
      %p178 = pneg %p34
      %p179 = pneg %p58
      %p180 = pneg %p55
      %p181 = pneg %p79
      %p182 = pneg %p76
      %p183 = pneg %p100
      %p184 = pneg %p97
      %p185 = pneg %p126
      %p186 = pneg %p123
      %p187 = scmp.lt.s32.totalorder %s16, 3
      %s188 = scalar_select %p187, %s16, 3
      %s189 = smul.addr %s188, 4
      %s190 = smul.addr %s189, 4
      %s191 = scalar_lea.vmem %s4, %s190
      %s192 = smul.u32 4, %s16
      %p193 = scmp.lt.s32.totalorder %s192, 15
      %s194 = scalar_select %p193, %s192, 15
      %s195 = smul.addr %s194, 10
      %s196 = smul.addr %s195, 4
      %s197 = scalar_lea.vmem %s0, %s196
      %s198 = smul.u32 4, %s16
      %p199 = scmp.lt.s32.totalorder %s16, 3
      %s200 = scalar_select %p199, %s16, 3
      %s201 = smul.addr %s200, 4
      %s202 = smul.addr %s201, 4
      %s203 = scalar_lea.vmem %s4, %s202
      %v205 = vld [vmem:[%s197] sm:$0xf]
      %v206 = vld [vmem:[%s197 + $0x8] sm:$0xf]
      %v207 = vld [vmem:[%s197 + $0x10] sm:$0xf]
      %v208 = vld [vmem:[%s197 + $0x18] sm:$0xf]
      %v209 = vld [vmem:[%s1] sm:$0xf]
      %v210 = vld [vmem:[%s1 + $0x4] sm:$0xf]
      %v211 = vld [vmem:[%s1 + $0x8] sm:$0xf]
      %v212 = vld [vmem:[%s1 + $0xc] sm:$0xf]
      %v213 = vld [vmem:[%s1 + $0x10] sm:$0xf]
      %v214 = vld [vmem:[%s1 + $0x14] sm:$0xf]
      %v215 = vld [vmem:[%s1 + $0x18] sm:$0xf]
      %v216 = vld [vmem:[%s1 + $0x1c] sm:$0xf]
      %v217 = vld [vmem:[%s1 + $0x20] sm:$0xf]
      %v218 = vld [vmem:[%s1 + $0x24] sm:$0xf]
      %v219 = vld [vmem:[%s1 + $0x28] sm:$0xf]
      %v220 = vld [vmem:[%s1 + $0x2c] sm:$0xf]
      %v221 = vld [vmem:[%s1 + $0x30] sm:$0xf]
      %v222 = vld [vmem:[%s1 + $0x34] sm:$0xf]
      %v223 = vld [vmem:[%s1 + $0x38] sm:$0xf]
      %v224 = vld [vmem:[%s1 + $0x3c] sm:$0xf]
      %s225 = scalar_lea.vmem %s197, 40
      %v226 = vld [vmem:[%s225] sm:$0xf]
      %v227 = vld [vmem:[%s225 + $0x8] sm:$0xf]
      %v228 = vld [vmem:[%s225 + $0x10] sm:$0xf]
      %v229 = vld [vmem:[%s225 + $0x18] sm:$0xf]
      %s230 = scalar_lea.vmem %s1, 64
      %v231 = vld [vmem:[%s230] sm:$0xf]
      %v232 = vld [vmem:[%s230 + $0x4] sm:$0xf]
      %v233 = vld [vmem:[%s230 + $0x8] sm:$0xf]
      %v234 = vld [vmem:[%s230 + $0xc] sm:$0xf]
      %v235 = vld [vmem:[%s230 + $0x10] sm:$0xf]
      %v236 = vld [vmem:[%s230 + $0x14] sm:$0xf]
      %v237 = vld [vmem:[%s230 + $0x18] sm:$0xf]
      %v238 = vld [vmem:[%s230 + $0x1c] sm:$0xf]
      %v239 = vld [vmem:[%s230 + $0x20] sm:$0xf]
      %v240 = vld [vmem:[%s230 + $0x24] sm:$0xf]
      %v241 = vld [vmem:[%s230 + $0x28] sm:$0xf]
      %v242 = vld [vmem:[%s230 + $0x2c] sm:$0xf]
      %v243 = vld [vmem:[%s230 + $0x30] sm:$0xf]
      %v244 = vld [vmem:[%s230 + $0x34] sm:$0xf]
      %v245 = vld [vmem:[%s230 + $0x38] sm:$0xf]
      %v246 = vld [vmem:[%s230 + $0x3c] sm:$0xf]
      %v251 = vunpack.c.l.b16 %v226
      %v252 = vunpack.c.l.b16 %v227
      %v253 = vunpack.c.l.b16 %v228
      %v254 = vunpack.c.l.b16 %v229
      %v255 = vpack.c.b16 %v252, %v251
      %v256 = vpack.c.b16 %v254, %v253
      %v275 = vunpack.c.l.b16 %v231
      %v276 = vunpack.c.l.b16 %v232
      %v277 = vunpack.c.l.b16 %v233
      %v278 = vunpack.c.l.b16 %v234
      %v279 = vunpack.c.l.b16 %v235
      %v280 = vunpack.c.l.b16 %v236
      %v281 = vunpack.c.l.b16 %v237
      %v282 = vunpack.c.l.b16 %v238
      %v283 = vunpack.c.l.b16 %v239
      %v284 = vunpack.c.l.b16 %v240
      %v285 = vunpack.c.l.b16 %v241
      %v286 = vunpack.c.l.b16 %v242
      %v287 = vunpack.c.l.b16 %v243
      %v288 = vunpack.c.l.b16 %v244
      %v289 = vunpack.c.l.b16 %v245
      %v290 = vunpack.c.l.b16 %v246
      %v291 = vpack.c.b16 %v276, %v275
      %v292 = vpack.c.b16 %v278, %v277
      %v293 = vpack.c.b16 %v280, %v279
      %v294 = vpack.c.b16 %v282, %v281
      %v295 = vpack.c.b16 %v284, %v283
      %v296 = vpack.c.b16 %v286, %v285
      %v297 = vpack.c.b16 %v288, %v287
      %v298 = vpack.c.b16 %v290, %v289
      %307 = vmatprep.subr.bf16.mxu0 0
      %308 = vmatpush1.bf16.msra.mxu0 %v291
      %309 = vmatprep.subr.bf16.mxu0 0
      %310 = vmatpush1.bf16.msra.mxu0 %v292
      %311 = vmatprep.subr.bf16.mxu0 0
      %312 = vmatpush1.bf16.msra.mxu0 %v293
      %313 = vmatprep.subr.bf16.mxu0 0
      %314 = vmatpush1.bf16.msra.mxu0 %v294
      %315 = vmatprep.subr.bf16.mxu0 0
      %316 = vmatpush1.bf16.msra.mxu0 %v295
      %317 = vmatprep.subr.bf16.mxu0 0
      %318 = vmatpush1.bf16.msra.mxu0 %v296
      %319 = vmatprep.subr.bf16.mxu0 0
      %320 = vmatpush1.bf16.msra.mxu0 %v297
      %321 = vmatprep.subr.bf16.mxu0 0
      %322 = vmatpush1.bf16.msra.mxu0 %v298
      %323 = vmatprep.subr.bf16.mxu0 0
      %324 = vmatpush1.bf16.msra.mxu0 0
      %325 = vmatprep.subr.bf16.mxu0 0
      %326 = vmatpush1.bf16.msra.mxu0 0
      %327 = vmatprep.subr.bf16.mxu0 0
      %328 = vmatpush1.bf16.msra.mxu0 0
      %329 = vmatprep.subr.bf16.mxu0 0
      %330 = vmatpush1.bf16.msra.mxu0 0
      %331 = vmatprep.subr.bf16.mxu0 0
      %332 = vmatpush1.bf16.msra.mxu0 0
      %333 = vmatprep.subr.bf16.mxu0 0
      %334 = vmatpush1.bf16.msra.mxu0 0
      %335 = vmatprep.subr.bf16.mxu0 0
      %336 = vmatpush1.bf16.msra.mxu0 0
      %337 = vmatprep.subr.bf16.mxu0 0
      %338 = vmatpush1.bf16.msra.mxu0 0
      %339 = vmatprep.mubr.bf16.mxu0 0
      %340 = vmatmul.mubr.bf16.gmra.mrb[0].mxu0 %v255
      %v341 = vpop.f32.mrb[0].mxu0
      %v342 = vadd.f32 0.0, %v341
      %v343 = vpop.f32.mrb[0].mxu0
      %v344 = vpop.f32.mrb[0].mxu0
      %v345 = vadd.f32 0.0, %v344
      %v346 = vpop.f32.mrb[0].mxu0
      %347 = vmatprep.mubr.bf16.mxu0 0
      %348 = vmatmul.mubr.bf16.gmra.mrb[0].mxu0 %v256
      %v349 = vpop.f32.mrb[0].mxu0
      %v350 = vadd.f32 0.0, %v349
      %v351 = vpop.f32.mrb[0].mxu0
      %v352 = vpop.f32.mrb[0].mxu0
      %v353 = vadd.f32 0.0, %v352
      %v354 = vpop.f32.mrb[0].mxu0
      %355 = vdwg.mxu0
      %v360 = vunpack.c.l.b16 %v205
      %v361 = vunpack.c.l.b16 %v206
      %v362 = vunpack.c.l.b16 %v207
      %v363 = vunpack.c.l.b16 %v208
      %v364 = vpack.c.b16 %v361, %v360
      %v365 = vpack.c.b16 %v363, %v362
      %v384 = vunpack.c.l.b16 %v209
      %v385 = vunpack.c.l.b16 %v210
      %v386 = vunpack.c.l.b16 %v211
      %v387 = vunpack.c.l.b16 %v212
      %v388 = vunpack.c.l.b16 %v213
      %v389 = vunpack.c.l.b16 %v214
      %v390 = vunpack.c.l.b16 %v215
      %v391 = vunpack.c.l.b16 %v216
      %v392 = vunpack.c.l.b16 %v217
      %v393 = vunpack.c.l.b16 %v218
      %v394 = vunpack.c.l.b16 %v219
      %v395 = vunpack.c.l.b16 %v220
      %v396 = vunpack.c.l.b16 %v221
      %v397 = vunpack.c.l.b16 %v222
      %v398 = vunpack.c.l.b16 %v223
      %v399 = vunpack.c.l.b16 %v224
      %v400 = vpack.c.b16 %v385, %v384
      %v401 = vpack.c.b16 %v387, %v386
      %v402 = vpack.c.b16 %v389, %v388
      %v403 = vpack.c.b16 %v391, %v390
      %v404 = vpack.c.b16 %v393, %v392
      %v405 = vpack.c.b16 %v395, %v394
      %v406 = vpack.c.b16 %v397, %v396
      %v407 = vpack.c.b16 %v399, %v398
      %416 = vmatprep.subr.bf16.mxu0 0
      %417 = vmatpush1.bf16.msra.mxu0 %v400
      %418 = vmatprep.subr.bf16.mxu0 0
      %419 = vmatpush1.bf16.msra.mxu0 %v401
      %420 = vmatprep.subr.bf16.mxu0 0
      %421 = vmatpush1.bf16.msra.mxu0 %v402
      %422 = vmatprep.subr.bf16.mxu0 0
      %423 = vmatpush1.bf16.msra.mxu0 %v403
      %424 = vmatprep.subr.bf16.mxu0 0
      %425 = vmatpush1.bf16.msra.mxu0 %v404
      %426 = vmatprep.subr.bf16.mxu0 0
      %427 = vmatpush1.bf16.msra.mxu0 %v405
      %428 = vmatprep.subr.bf16.mxu0 0
      %429 = vmatpush1.bf16.msra.mxu0 %v406
      %430 = vmatprep.subr.bf16.mxu0 0
      %431 = vmatpush1.bf16.msra.mxu0 %v407
      %432 = vmatprep.subr.bf16.mxu0 0
      %433 = vmatpush1.bf16.msra.mxu0 0
      %434 = vmatprep.subr.bf16.mxu0 0
      %435 = vmatpush1.bf16.msra.mxu0 0
      %436 = vmatprep.subr.bf16.mxu0 0
      %437 = vmatpush1.bf16.msra.mxu0 0
      %438 = vmatprep.subr.bf16.mxu0 0
      %439 = vmatpush1.bf16.msra.mxu0 0
      %440 = vmatprep.subr.bf16.mxu0 0
      %441 = vmatpush1.bf16.msra.mxu0 0
      %442 = vmatprep.subr.bf16.mxu0 0
      %443 = vmatpush1.bf16.msra.mxu0 0
      %444 = vmatprep.subr.bf16.mxu0 0
      %445 = vmatpush1.bf16.msra.mxu0 0
      %446 = vmatprep.subr.bf16.mxu0 0
      %447 = vmatpush1.bf16.msra.mxu0 0
      %448 = vmatprep.mubr.bf16.mxu0 0
      %449 = vmatmul.mubr.bf16.gmra.mrb[0].mxu0 %v364
      %v450 = vpop.f32.mrb[0].mxu0
      %v451 = vadd.f32 %v342, %v450
      %v452 = vpop.f32.mrb[0].mxu0
      %v453 = vpop.f32.mrb[0].mxu0
      %v454 = vadd.f32 %v345, %v453
      %v455 = vpop.f32.mrb[0].mxu0
      %456 = vmatprep.mubr.bf16.mxu0 0
      %457 = vmatmul.mubr.bf16.gmra.mrb[0].mxu0 %v365
      %v458 = vpop.f32.mrb[0].mxu0
      %v459 = vadd.f32 %v350, %v458
      %v460 = vpop.f32.mrb[0].mxu0
      %v461 = vpop.f32.mrb[0].mxu0
      %v462 = vadd.f32 %v353, %v461
      %v463 = vpop.f32.mrb[0].mxu0
      %464 = vdwg.mxu0
      %v465 = vld [vmem:[%s197] sm:$0xf]
      %v466 = vld [vmem:[%s197 + $0x4] sm:$0x1]
      %v467 = vld [vmem:[%s197 + $0x8] sm:$0xf]
      %v468 = vld [vmem:[%s197 + $0xc] sm:$0x1]
      %v469 = vld [vmem:[%s197 + $0x10] sm:$0xf]
      %v470 = vld [vmem:[%s197 + $0x14] sm:$0x1]
      %v471 = vld [vmem:[%s197 + $0x18] sm:$0xf]
      %v472 = vld [vmem:[%s197 + $0x1c] sm:$0x1]
      %vm473 = vsmask.f32 3328
      %vm474 = vsmask.f32 7440
      %vm475 = vmor %vm473, %vm474
      %v477 = vshrl.u32 %v465, 16
      %v479 = vrot.slane %v477, 4
      %v480 = vshll.u32 %v465, 16
      %v482 = vrot.slane %v480, 5
      %v483 = vor.u32 %v479, %v482
      %v484 = vrot.slane %v483, 4
      %v486 = vshll.u32 %v466, 16
      %v488 = vrot.slane %v486, 5
      %v489 = vsel %vm475, %v484, %v488
      %v491 = vshrl.u32 %v467, 16
      %v493 = vrot.slane %v491, 4
      %v494 = vshll.u32 %v467, 16
      %v496 = vrot.slane %v494, 5
      %v497 = vor.u32 %v493, %v496
      %v498 = vrot.slane %v497, 4
      %v500 = vshll.u32 %v468, 16
      %v502 = vrot.slane %v500, 5
      %v503 = vsel %vm475, %v498, %v502
      %v505 = vshrl.u32 %v469, 16
      %v507 = vrot.slane %v505, 4
      %v508 = vshll.u32 %v469, 16
      %v510 = vrot.slane %v508, 5
      %v511 = vor.u32 %v507, %v510
      %v512 = vrot.slane %v511, 4
      %v514 = vshll.u32 %v470, 16
      %v516 = vrot.slane %v514, 5
      %v517 = vsel %vm475, %v512, %v516
      %v519 = vshrl.u32 %v471, 16
      %v521 = vrot.slane %v519, 4
      %v522 = vshll.u32 %v471, 16
      %v524 = vrot.slane %v522, 5
      %v525 = vor.u32 %v521, %v524
      %v526 = vrot.slane %v525, 4
      %v528 = vshll.u32 %v472, 16
      %v530 = vrot.slane %v528, 5
      %v531 = vsel %vm475, %v526, %v530
      %s532 = scalar_lea.vmem %s1, 128
      %v533 = vld [vmem:[%s532] sm:$0xf]
      %v534 = vld [vmem:[%s532 + $0x4] sm:$0xf]
      %v535 = vld [vmem:[%s532 + $0x8] sm:$0xf]
      %v536 = vld [vmem:[%s532 + $0xc] sm:$0xf]
      %v537 = vld [vmem:[%s532 + $0x10] sm:$0xf]
      %v538 = vld [vmem:[%s532 + $0x14] sm:$0xf]
      %v539 = vld [vmem:[%s532 + $0x18] sm:$0xf]
      %v540 = vld [vmem:[%s532 + $0x1c] sm:$0xf]
      %v541 = vld [vmem:[%s532 + $0x20] sm:$0xf]
      %v542 = vld [vmem:[%s532 + $0x24] sm:$0xf]
      %v543 = vld [vmem:[%s532 + $0x28] sm:$0xf]
      %v544 = vld [vmem:[%s532 + $0x2c] sm:$0xf]
      %v545 = vld [vmem:[%s532 + $0x30] sm:$0xf]
      %v546 = vld [vmem:[%s532 + $0x34] sm:$0xf]
      %v547 = vld [vmem:[%s532 + $0x38] sm:$0xf]
      %v548 = vld [vmem:[%s532 + $0x3c] sm:$0xf]
      %v549 = vunpack.c.l.b16 %v489
      %v550 = vunpack.c.l.b16 %v503
      %v551 = vunpack.c.l.b16 %v517
      %v552 = vunpack.c.l.b16 %v531
      %v553 = vpack.c.b16 %v550, %v549
      %v554 = vpack.c.b16 %v552, %v551
      %v573 = vunpack.c.l.b16 %v533
      %v574 = vunpack.c.l.b16 %v534
      %v575 = vunpack.c.l.b16 %v535
      %v576 = vunpack.c.l.b16 %v536
      %v577 = vunpack.c.l.b16 %v537
      %v578 = vunpack.c.l.b16 %v538
      %v579 = vunpack.c.l.b16 %v539
      %v580 = vunpack.c.l.b16 %v540
      %v581 = vunpack.c.l.b16 %v541
      %v582 = vunpack.c.l.b16 %v542
      %v583 = vunpack.c.l.b16 %v543
      %v584 = vunpack.c.l.b16 %v544
      %v585 = vunpack.c.l.b16 %v545
      %v586 = vunpack.c.l.b16 %v546
      %v587 = vunpack.c.l.b16 %v547
      %v588 = vunpack.c.l.b16 %v548
      %v589 = vpack.c.b16 %v574, %v573
      %v590 = vpack.c.b16 %v576, %v575
      %v591 = vpack.c.b16 %v578, %v577
      %v592 = vpack.c.b16 %v580, %v579
      %v593 = vpack.c.b16 %v582, %v581
      %v594 = vpack.c.b16 %v584, %v583
      %v595 = vpack.c.b16 %v586, %v585
      %v596 = vpack.c.b16 %v588, %v587
      %605 = vmatprep.subr.bf16.mxu0 0
      %606 = vmatpush1.bf16.msra.mxu0 %v589
      %607 = vmatprep.subr.bf16.mxu0 0
      %608 = vmatpush1.bf16.msra.mxu0 %v590
      %609 = vmatprep.subr.bf16.mxu0 0
      %610 = vmatpush1.bf16.msra.mxu0 %v591
      %611 = vmatprep.subr.bf16.mxu0 0
      %612 = vmatpush1.bf16.msra.mxu0 %v592
      %613 = vmatprep.subr.bf16.mxu0 0
      %614 = vmatpush1.bf16.msra.mxu0 %v593
      %615 = vmatprep.subr.bf16.mxu0 0
      %616 = vmatpush1.bf16.msra.mxu0 %v594
      %617 = vmatprep.subr.bf16.mxu0 0
      %618 = vmatpush1.bf16.msra.mxu0 %v595
      %619 = vmatprep.subr.bf16.mxu0 0
      %620 = vmatpush1.bf16.msra.mxu0 %v596
      %621 = vmatprep.subr.bf16.mxu0 0
      %622 = vmatpush1.bf16.msra.mxu0 0
      %623 = vmatprep.subr.bf16.mxu0 0
      %624 = vmatpush1.bf16.msra.mxu0 0
      %625 = vmatprep.subr.bf16.mxu0 0
      %626 = vmatpush1.bf16.msra.mxu0 0
      %627 = vmatprep.subr.bf16.mxu0 0
      %628 = vmatpush1.bf16.msra.mxu0 0
      %629 = vmatprep.subr.bf16.mxu0 0
      %630 = vmatpush1.bf16.msra.mxu0 0
      %631 = vmatprep.subr.bf16.mxu0 0
      %632 = vmatpush1.bf16.msra.mxu0 0
      %633 = vmatprep.subr.bf16.mxu0 0
      %634 = vmatpush1.bf16.msra.mxu0 0
      %635 = vmatprep.subr.bf16.mxu0 0
      %636 = vmatpush1.bf16.msra.mxu0 0
      %637 = vmatprep.mubr.bf16.mxu0 0
      %638 = vmatmul.mubr.bf16.gmra.mrb[0].mxu0 %v553
      %v639 = vpop.f32.mrb[0].mxu0
      %v640 = vadd.f32 0.0, %v639
      %v641 = vpop.f32.mrb[0].mxu0
      %v642 = vpop.f32.mrb[0].mxu0
      %v643 = vadd.f32 0.0, %v642
      %v644 = vpop.f32.mrb[0].mxu0
      %645 = vmatprep.mubr.bf16.mxu0 0
      %646 = vmatmul.mubr.bf16.gmra.mrb[0].mxu0 %v554
      %v647 = vpop.f32.mrb[0].mxu0
      %v648 = vadd.f32 0.0, %v647
      %v649 = vpop.f32.mrb[0].mxu0
      %v650 = vpop.f32.mrb[0].mxu0
      %v651 = vadd.f32 0.0, %v650
      %v652 = vpop.f32.mrb[0].mxu0
      %653 = vdwg.mxu0
      %v654 = vadd.f32 %v451, %v640
      %v655 = vadd.f32 %v454, %v643
      %v656 = vadd.f32 %v459, %v648
      %v657 = vadd.f32 %v462, %v651
      %s658 = scalar_lea.vmem %s197, 80
      %v659 = vld [vmem:[%s658] sm:$0xf]
      %v660 = vld [vmem:[%s658 + $0x8] sm:$0xf]
      %v661 = vld [vmem:[%s658 + $0x10] sm:$0xf]
      %v662 = vld [vmem:[%s658 + $0x18] sm:$0xf]
      %s663 = scalar_lea.vmem %s1, 192
      %v664 = vld [vmem:[%s663] sm:$0xf]
      %v665 = vld [vmem:[%s663 + $0x4] sm:$0xf]
      %v666 = vld [vmem:[%s663 + $0x8] sm:$0xf]
      %v667 = vld [vmem:[%s663 + $0xc] sm:$0xf]
      %v668 = vld [vmem:[%s663 + $0x10] sm:$0xf]
      %v669 = vld [vmem:[%s663 + $0x14] sm:$0xf]
      %v670 = vld [vmem:[%s663 + $0x18] sm:$0xf]
      %v671 = vld [vmem:[%s663 + $0x1c] sm:$0xf]
      %v672 = vld [vmem:[%s663 + $0x20] sm:$0xf]
      %v673 = vld [vmem:[%s663 + $0x24] sm:$0xf]
      %v674 = vld [vmem:[%s663 + $0x28] sm:$0xf]
      %v675 = vld [vmem:[%s663 + $0x2c] sm:$0xf]
      %v676 = vld [vmem:[%s663 + $0x30] sm:$0xf]
      %v677 = vld [vmem:[%s663 + $0x34] sm:$0xf]
      %v678 = vld [vmem:[%s663 + $0x38] sm:$0xf]
      %v679 = vld [vmem:[%s663 + $0x3c] sm:$0xf]
      %v684 = vunpack.c.l.b16 %v659
      %v685 = vunpack.c.l.b16 %v660
      %v686 = vunpack.c.l.b16 %v661
      %v687 = vunpack.c.l.b16 %v662
      %v688 = vpack.c.b16 %v685, %v684
      %v689 = vpack.c.b16 %v687, %v686
      %v708 = vunpack.c.l.b16 %v664
      %v709 = vunpack.c.l.b16 %v665
      %v710 = vunpack.c.l.b16 %v666
      %v711 = vunpack.c.l.b16 %v667
      %v712 = vunpack.c.l.b16 %v668
      %v713 = vunpack.c.l.b16 %v669
      %v714 = vunpack.c.l.b16 %v670
      %v715 = vunpack.c.l.b16 %v671
      %v716 = vunpack.c.l.b16 %v672
      %v717 = vunpack.c.l.b16 %v673
      %v718 = vunpack.c.l.b16 %v674
      %v719 = vunpack.c.l.b16 %v675
      %v720 = vunpack.c.l.b16 %v676
      %v721 = vunpack.c.l.b16 %v677
      %v722 = vunpack.c.l.b16 %v678
      %v723 = vunpack.c.l.b16 %v679
      %v724 = vpack.c.b16 %v709, %v708
      %v725 = vpack.c.b16 %v711, %v710
      %v726 = vpack.c.b16 %v713, %v712
      %v727 = vpack.c.b16 %v715, %v714
      %v728 = vpack.c.b16 %v717, %v716
      %v729 = vpack.c.b16 %v719, %v718
      %v730 = vpack.c.b16 %v721, %v720
      %v731 = vpack.c.b16 %v723, %v722
      %740 = vmatprep.subr.bf16.mxu0 0
      %741 = vmatpush1.bf16.msra.mxu0 %v724
      %742 = vmatprep.subr.bf16.mxu0 0
      %743 = vmatpush1.bf16.msra.mxu0 %v725
      %744 = vmatprep.subr.bf16.mxu0 0
      %745 = vmatpush1.bf16.msra.mxu0 %v726
      %746 = vmatprep.subr.bf16.mxu0 0
      %747 = vmatpush1.bf16.msra.mxu0 %v727
      %748 = vmatprep.subr.bf16.mxu0 0
      %749 = vmatpush1.bf16.msra.mxu0 %v728
      %750 = vmatprep.subr.bf16.mxu0 0
      %751 = vmatpush1.bf16.msra.mxu0 %v729
      %752 = vmatprep.subr.bf16.mxu0 0
      %753 = vmatpush1.bf16.msra.mxu0 %v730
      %754 = vmatprep.subr.bf16.mxu0 0
      %755 = vmatpush1.bf16.msra.mxu0 %v731
      %756 = vmatprep.subr.bf16.mxu0 0
      %757 = vmatpush1.bf16.msra.mxu0 0
      %758 = vmatprep.subr.bf16.mxu0 0
      %759 = vmatpush1.bf16.msra.mxu0 0
      %760 = vmatprep.subr.bf16.mxu0 0
      %761 = vmatpush1.bf16.msra.mxu0 0
      %762 = vmatprep.subr.bf16.mxu0 0
      %763 = vmatpush1.bf16.msra.mxu0 0
      %764 = vmatprep.subr.bf16.mxu0 0
      %765 = vmatpush1.bf16.msra.mxu0 0
      %766 = vmatprep.subr.bf16.mxu0 0
      %767 = vmatpush1.bf16.msra.mxu0 0
      %768 = vmatprep.subr.bf16.mxu0 0
      %769 = vmatpush1.bf16.msra.mxu0 0
      %770 = vmatprep.subr.bf16.mxu0 0
      %771 = vmatpush1.bf16.msra.mxu0 0
      %772 = vmatprep.mubr.bf16.mxu0 0
      %773 = vmatmul.mubr.bf16.gmra.mrb[0].mxu0 %v688
      %v774 = vpop.f32.mrb[0].mxu0
      %v775 = vadd.f32 0.0, %v774
      %v776 = vpop.f32.mrb[0].mxu0
      %v777 = vpop.f32.mrb[0].mxu0
      %v778 = vadd.f32 0.0, %v777
      %v779 = vpop.f32.mrb[0].mxu0
      %780 = vmatprep.mubr.bf16.mxu0 0
      %781 = vmatmul.mubr.bf16.gmra.mrb[0].mxu0 %v689
      %v782 = vpop.f32.mrb[0].mxu0
      %v783 = vadd.f32 0.0, %v782
      %v784 = vpop.f32.mrb[0].mxu0
      %v785 = vpop.f32.mrb[0].mxu0
      %v786 = vadd.f32 0.0, %v785
      %v787 = vpop.f32.mrb[0].mxu0
      %788 = vdwg.mxu0
      %v789 = vadd.f32 %v654, %v775
      %v790 = vadd.f32 %v655, %v778
      %v791 = vadd.f32 %v656, %v783
      %v792 = vadd.f32 %v657, %v786
      %s793 = scalar_lea.vmem %s197, 120
      %v794 = vld [vmem:[%s793] sm:$0xf]
      %v795 = vld [vmem:[%s793 + $0x8] sm:$0xf]
      %v796 = vld [vmem:[%s793 + $0x10] sm:$0xf]
      %v797 = vld [vmem:[%s793 + $0x18] sm:$0xf]
      %s798 = scalar_lea.vmem %s1, 256
      %v799 = vld [vmem:[%s798] sm:$0xf]
      %v800 = vld [vmem:[%s798 + $0x4] sm:$0xf]
      %v801 = vld [vmem:[%s798 + $0x8] sm:$0xf]
      %v802 = vld [vmem:[%s798 + $0xc] sm:$0xf]
      %v803 = vld [vmem:[%s798 + $0x10] sm:$0xf]
      %v804 = vld [vmem:[%s798 + $0x14] sm:$0xf]
      %v805 = vld [vmem:[%s798 + $0x18] sm:$0xf]
      %v806 = vld [vmem:[%s798 + $0x1c] sm:$0xf]
      %v807 = vld [vmem:[%s798 + $0x20] sm:$0xf]
      %v808 = vld [vmem:[%s798 + $0x24] sm:$0xf]
      %v809 = vld [vmem:[%s798 + $0x28] sm:$0xf]
      %v810 = vld [vmem:[%s798 + $0x2c] sm:$0xf]
      %v811 = vld [vmem:[%s798 + $0x30] sm:$0xf]
      %v812 = vld [vmem:[%s798 + $0x34] sm:$0xf]
      %v813 = vld [vmem:[%s798 + $0x38] sm:$0xf]
      %v814 = vld [vmem:[%s798 + $0x3c] sm:$0xf]
      %v819 = vunpack.c.l.b16 %v794
      %v820 = vunpack.c.l.b16 %v795
      %v821 = vunpack.c.l.b16 %v796
      %v822 = vunpack.c.l.b16 %v797
      %v823 = vpack.c.b16 %v820, %v819
      %v824 = vpack.c.b16 %v822, %v821
      %v843 = vunpack.c.l.b16 %v799
      %v844 = vunpack.c.l.b16 %v800
      %v845 = vunpack.c.l.b16 %v801
      %v846 = vunpack.c.l.b16 %v802
      %v847 = vunpack.c.l.b16 %v803
      %v848 = vunpack.c.l.b16 %v804
      %v849 = vunpack.c.l.b16 %v805
      %v850 = vunpack.c.l.b16 %v806
      %v851 = vunpack.c.l.b16 %v807
      %v852 = vunpack.c.l.b16 %v808
      %v853 = vunpack.c.l.b16 %v809
      %v854 = vunpack.c.l.b16 %v810
      %v855 = vunpack.c.l.b16 %v811
      %v856 = vunpack.c.l.b16 %v812
      %v857 = vunpack.c.l.b16 %v813
      %v858 = vunpack.c.l.b16 %v814
      %v859 = vpack.c.b16 %v844, %v843
      %v860 = vpack.c.b16 %v846, %v845
      %v861 = vpack.c.b16 %v848, %v847
      %v862 = vpack.c.b16 %v850, %v849
      %v863 = vpack.c.b16 %v852, %v851
      %v864 = vpack.c.b16 %v854, %v853
      %v865 = vpack.c.b16 %v856, %v855
      %v866 = vpack.c.b16 %v858, %v857
      %875 = vmatprep.subr.bf16.mxu0 0
      %876 = vmatpush1.bf16.msra.mxu0 %v859
      %877 = vmatprep.subr.bf16.mxu0 0
      %878 = vmatpush1.bf16.msra.mxu0 %v860
      %879 = vmatprep.subr.bf16.mxu0 0
      %880 = vmatpush1.bf16.msra.mxu0 %v861
      %881 = vmatprep.subr.bf16.mxu0 0
      %882 = vmatpush1.bf16.msra.mxu0 %v862
      %883 = vmatprep.subr.bf16.mxu0 0
      %884 = vmatpush1.bf16.msra.mxu0 %v863
      %885 = vmatprep.subr.bf16.mxu0 0
      %886 = vmatpush1.bf16.msra.mxu0 %v864
      %887 = vmatprep.subr.bf16.mxu0 0
      %888 = vmatpush1.bf16.msra.mxu0 %v865
      %889 = vmatprep.subr.bf16.mxu0 0
      %890 = vmatpush1.bf16.msra.mxu0 %v866
      %891 = vmatprep.subr.bf16.mxu0 0
      %892 = vmatpush1.bf16.msra.mxu0 0
      %893 = vmatprep.subr.bf16.mxu0 0
      %894 = vmatpush1.bf16.msra.mxu0 0
      %895 = vmatprep.subr.bf16.mxu0 0
      %896 = vmatpush1.bf16.msra.mxu0 0
      %897 = vmatprep.subr.bf16.mxu0 0
      %898 = vmatpush1.bf16.msra.mxu0 0
      %899 = vmatprep.subr.bf16.mxu0 0
      %900 = vmatpush1.bf16.msra.mxu0 0
      %901 = vmatprep.subr.bf16.mxu0 0
      %902 = vmatpush1.bf16.msra.mxu0 0
      %903 = vmatprep.subr.bf16.mxu0 0
      %904 = vmatpush1.bf16.msra.mxu0 0
      %905 = vmatprep.subr.bf16.mxu0 0
      %906 = vmatpush1.bf16.msra.mxu0 0
      %907 = vmatprep.mubr.bf16.mxu0 0
      %908 = vmatmul.mubr.bf16.gmra.mrb[0].mxu0 %v823
      %v909 = vpop.f32.mrb[0].mxu0
      %v910 = vadd.f32 0.0, %v909
      %v911 = vpop.f32.mrb[0].mxu0
      %v912 = vpop.f32.mrb[0].mxu0
      %v913 = vadd.f32 0.0, %v912
      %v914 = vpop.f32.mrb[0].mxu0
      %915 = vmatprep.mubr.bf16.mxu0 0
      %916 = vmatmul.mubr.bf16.gmra.mrb[0].mxu0 %v824
      %v917 = vpop.f32.mrb[0].mxu0
      %v918 = vadd.f32 0.0, %v917
      %v919 = vpop.f32.mrb[0].mxu0
      %v920 = vpop.f32.mrb[0].mxu0
      %v921 = vadd.f32 0.0, %v920
      %v922 = vpop.f32.mrb[0].mxu0
      %923 = vdwg.mxu0
      %v924 = vadd.f32 %v789, %v910
      %v925 = vadd.f32 %v790, %v913
      %v926 = vadd.f32 %v791, %v918
      %v927 = vadd.f32 %v792, %v921
      %v928 = vld [vmem:[%s658] sm:$0xf]
      %v929 = vld [vmem:[%s658 + $0x4] sm:$0x1]
      %v930 = vld [vmem:[%s658 + $0x8] sm:$0xf]
      %v931 = vld [vmem:[%s658 + $0xc] sm:$0x1]
      %v932 = vld [vmem:[%s658 + $0x10] sm:$0xf]
      %v933 = vld [vmem:[%s658 + $0x14] sm:$0x1]
      %v934 = vld [vmem:[%s658 + $0x18] sm:$0xf]
      %v935 = vld [vmem:[%s658 + $0x1c] sm:$0x1]
      %v937 = vshrl.u32 %v928, 16
      %v939 = vrot.slane %v937, 4
      %v940 = vshll.u32 %v928, 16
      %v942 = vrot.slane %v940, 5
      %v943 = vor.u32 %v939, %v942
      %v944 = vrot.slane %v943, 4
      %v946 = vshll.u32 %v929, 16
      %v948 = vrot.slane %v946, 5
      %v949 = vsel %vm475, %v944, %v948
      %v951 = vshrl.u32 %v930, 16
      %v953 = vrot.slane %v951, 4
      %v954 = vshll.u32 %v930, 16
      %v956 = vrot.slane %v954, 5
      %v957 = vor.u32 %v953, %v956
      %v958 = vrot.slane %v957, 4
      %v960 = vshll.u32 %v931, 16
      %v962 = vrot.slane %v960, 5
      %v963 = vsel %vm475, %v958, %v962
      %v965 = vshrl.u32 %v932, 16
      %v967 = vrot.slane %v965, 4
      %v968 = vshll.u32 %v932, 16
      %v970 = vrot.slane %v968, 5
      %v971 = vor.u32 %v967, %v970
      %v972 = vrot.slane %v971, 4
      %v974 = vshll.u32 %v933, 16
      %v976 = vrot.slane %v974, 5
      %v977 = vsel %vm475, %v972, %v976
      %v979 = vshrl.u32 %v934, 16
      %v981 = vrot.slane %v979, 4
      %v982 = vshll.u32 %v934, 16
      %v984 = vrot.slane %v982, 5
      %v985 = vor.u32 %v981, %v984
      %v986 = vrot.slane %v985, 4
      %v988 = vshll.u32 %v935, 16
      %v990 = vrot.slane %v988, 5
      %v991 = vsel %vm475, %v986, %v990
      %s992 = scalar_lea.vmem %s1, 320
      %v993 = vld [vmem:[%s992] sm:$0xf]
      %v994 = vld [vmem:[%s992 + $0x4] sm:$0xf]
      %v995 = vld [vmem:[%s992 + $0x8] sm:$0xf]
      %v996 = vld [vmem:[%s992 + $0xc] sm:$0xf]
      %v997 = vld [vmem:[%s992 + $0x10] sm:$0xf]
      %v998 = vld [vmem:[%s992 + $0x14] sm:$0xf]
      %v999 = vld [vmem:[%s992 + $0x18] sm:$0xf]
      %v1000 = vld [vmem:[%s992 + $0x1c] sm:$0xf]
      %v1001 = vld [vmem:[%s992 + $0x20] sm:$0xf]
      %v1002 = vld [vmem:[%s992 + $0x24] sm:$0xf]
      %v1003 = vld [vmem:[%s992 + $0x28] sm:$0xf]
      %v1004 = vld [vmem:[%s992 + $0x2c] sm:$0xf]
      %v1005 = vld [vmem:[%s992 + $0x30] sm:$0xf]
      %v1006 = vld [vmem:[%s992 + $0x34] sm:$0xf]
      %v1007 = vld [vmem:[%s992 + $0x38] sm:$0xf]
      %v1008 = vld [vmem:[%s992 + $0x3c] sm:$0xf]
      %v1009 = vunpack.c.l.b16 %v949
      %v1010 = vunpack.c.l.b16 %v963
      %v1011 = vunpack.c.l.b16 %v977
      %v1012 = vunpack.c.l.b16 %v991
      %v1013 = vpack.c.b16 %v1010, %v1009
      %v1014 = vpack.c.b16 %v1012, %v1011
      %v1033 = vunpack.c.l.b16 %v993
      %v1034 = vunpack.c.l.b16 %v994
      %v1035 = vunpack.c.l.b16 %v995
      %v1036 = vunpack.c.l.b16 %v996
      %v1037 = vunpack.c.l.b16 %v997
      %v1038 = vunpack.c.l.b16 %v998
      %v1039 = vunpack.c.l.b16 %v999
      %v1040 = vunpack.c.l.b16 %v1000
      %v1041 = vunpack.c.l.b16 %v1001
      %v1042 = vunpack.c.l.b16 %v1002
      %v1043 = vunpack.c.l.b16 %v1003
      %v1044 = vunpack.c.l.b16 %v1004
      %v1045 = vunpack.c.l.b16 %v1005
      %v1046 = vunpack.c.l.b16 %v1006
      %v1047 = vunpack.c.l.b16 %v1007
      %v1048 = vunpack.c.l.b16 %v1008
      %v1049 = vpack.c.b16 %v1034, %v1033
      %v1050 = vpack.c.b16 %v1036, %v1035
      %v1051 = vpack.c.b16 %v1038, %v1037
      %v1052 = vpack.c.b16 %v1040, %v1039
      %v1053 = vpack.c.b16 %v1042, %v1041
      %v1054 = vpack.c.b16 %v1044, %v1043
      %v1055 = vpack.c.b16 %v1046, %v1045
      %v1056 = vpack.c.b16 %v1048, %v1047
      %1065 = vmatprep.subr.bf16.mxu0 0
      %1066 = vmatpush1.bf16.msra.mxu0 %v1049
      %1067 = vmatprep.subr.bf16.mxu0 0
      %1068 = vmatpush1.bf16.msra.mxu0 %v1050
      %1069 = vmatprep.subr.bf16.mxu0 0
      %1070 = vmatpush1.bf16.msra.mxu0 %v1051
      %1071 = vmatprep.subr.bf16.mxu0 0
      %1072 = vmatpush1.bf16.msra.mxu0 %v1052
      %1073 = vmatprep.subr.bf16.mxu0 0
      %1074 = vmatpush1.bf16.msra.mxu0 %v1053
      %1075 = vmatprep.subr.bf16.mxu0 0
      %1076 = vmatpush1.bf16.msra.mxu0 %v1054
      %1077 = vmatprep.subr.bf16.mxu0 0
      %1078 = vmatpush1.bf16.msra.mxu0 %v1055
      %1079 = vmatprep.subr.bf16.mxu0 0
      %1080 = vmatpush1.bf16.msra.mxu0 %v1056
      %1081 = vmatprep.subr.bf16.mxu0 0
      %1082 = vmatpush1.bf16.msra.mxu0 0
      %1083 = vmatprep.subr.bf16.mxu0 0
      %1084 = vmatpush1.bf16.msra.mxu0 0
      %1085 = vmatprep.subr.bf16.mxu0 0
      %1086 = vmatpush1.bf16.msra.mxu0 0
      %1087 = vmatprep.subr.bf16.mxu0 0
      %1088 = vmatpush1.bf16.msra.mxu0 0
      %1089 = vmatprep.subr.bf16.mxu0 0
      %1090 = vmatpush1.bf16.msra.mxu0 0
      %1091 = vmatprep.subr.bf16.mxu0 0
      %1092 = vmatpush1.bf16.msra.mxu0 0
      %1093 = vmatprep.subr.bf16.mxu0 0
      %1094 = vmatpush1.bf16.msra.mxu0 0
      %1095 = vmatprep.subr.bf16.mxu0 0
      %1096 = vmatpush1.bf16.msra.mxu0 0
      %1097 = vmatprep.mubr.bf16.mxu0 0
      %1098 = vmatmul.mubr.bf16.gmra.mrb[0].mxu0 %v1013
      %v1099 = vpop.f32.mrb[0].mxu0
      %v1100 = vadd.f32 0.0, %v1099
      %v1101 = vpop.f32.mrb[0].mxu0
      %v1102 = vpop.f32.mrb[0].mxu0
      %v1103 = vadd.f32 0.0, %v1102
      %v1104 = vpop.f32.mrb[0].mxu0
      %1105 = vmatprep.mubr.bf16.mxu0 0
      %1106 = vmatmul.mubr.bf16.gmra.mrb[0].mxu0 %v1014
      %v1107 = vpop.f32.mrb[0].mxu0
      %v1108 = vadd.f32 0.0, %v1107
      %v1109 = vpop.f32.mrb[0].mxu0
      %v1110 = vpop.f32.mrb[0].mxu0
      %v1111 = vadd.f32 0.0, %v1110
      %v1112 = vpop.f32.mrb[0].mxu0
      %1113 = vdwg.mxu0
      %v1114 = vadd.f32 %v924, %v1100
      %v1115 = vadd.f32 %v925, %v1103
      %v1116 = vadd.f32 %v926, %v1108
      %v1117 = vadd.f32 %v927, %v1111
      %s1118 = scalar_lea.vmem %s197, 8
      %v1119 = vld [vmem:[%s1118] sm:$0xf]
      %v1120 = vld [vmem:[%s1118 + $0x8] sm:$0xf]
      %v1121 = vld [vmem:[%s1118 + $0x10] sm:$0xf]
      %v1122 = vld [vmem:[%s1118 + $0x18] sm:$0xf]
      %s1123 = scalar_lea.vmem %s1, 384
      %v1124 = vld [vmem:[%s1123] sm:$0xf]
      %v1125 = vld [vmem:[%s1123 + $0x4] sm:$0xf]
      %v1126 = vld [vmem:[%s1123 + $0x8] sm:$0xf]
      %v1127 = vld [vmem:[%s1123 + $0xc] sm:$0xf]
      %v1128 = vld [vmem:[%s1123 + $0x10] sm:$0xf]
      %v1129 = vld [vmem:[%s1123 + $0x14] sm:$0xf]
      %v1130 = vld [vmem:[%s1123 + $0x18] sm:$0xf]
      %v1131 = vld [vmem:[%s1123 + $0x1c] sm:$0xf]
      %v1132 = vld [vmem:[%s1123 + $0x20] sm:$0xf]
      %v1133 = vld [vmem:[%s1123 + $0x24] sm:$0xf]
      %v1134 = vld [vmem:[%s1123 + $0x28] sm:$0xf]
      %v1135 = vld [vmem:[%s1123 + $0x2c] sm:$0xf]
      %v1136 = vld [vmem:[%s1123 + $0x30] sm:$0xf]
      %v1137 = vld [vmem:[%s1123 + $0x34] sm:$0xf]
      %v1138 = vld [vmem:[%s1123 + $0x38] sm:$0xf]
      %v1139 = vld [vmem:[%s1123 + $0x3c] sm:$0xf]
      %v1144 = vunpack.c.l.b16 %v1119
      %v1145 = vunpack.c.l.b16 %v1120
      %v1146 = vunpack.c.l.b16 %v1121
      %v1147 = vunpack.c.l.b16 %v1122
      %v1148 = vpack.c.b16 %v1145, %v1144
      %v1149 = vpack.c.b16 %v1147, %v1146
      %v1168 = vunpack.c.l.b16 %v1124
      %v1169 = vunpack.c.l.b16 %v1125
      %v1170 = vunpack.c.l.b16 %v1126
      %v1171 = vunpack.c.l.b16 %v1127
      %v1172 = vunpack.c.l.b16 %v1128
      %v1173 = vunpack.c.l.b16 %v1129
      %v1174 = vunpack.c.l.b16 %v1130
      %v1175 = vunpack.c.l.b16 %v1131
      %v1176 = vunpack.c.l.b16 %v1132
      %v1177 = vunpack.c.l.b16 %v1133
      %v1178 = vunpack.c.l.b16 %v1134
      %v1179 = vunpack.c.l.b16 %v1135
      %v1180 = vunpack.c.l.b16 %v1136
      %v1181 = vunpack.c.l.b16 %v1137
      %v1182 = vunpack.c.l.b16 %v1138
      %v1183 = vunpack.c.l.b16 %v1139
      %v1184 = vpack.c.b16 %v1169, %v1168
      %v1185 = vpack.c.b16 %v1171, %v1170
      %v1186 = vpack.c.b16 %v1173, %v1172
      %v1187 = vpack.c.b16 %v1175, %v1174
      %v1188 = vpack.c.b16 %v1177, %v1176
      %v1189 = vpack.c.b16 %v1179, %v1178
      %v1190 = vpack.c.b16 %v1181, %v1180
      %v1191 = vpack.c.b16 %v1183, %v1182
      %1200 = vmatprep.subr.bf16.mxu0 0
      %1201 = vmatpush1.bf16.msra.mxu0 %v1184
      %1202 = vmatprep.subr.bf16.mxu0 0
      %1203 = vmatpush1.bf16.msra.mxu0 %v1185
      %1204 = vmatprep.subr.bf16.mxu0 0
      %1205 = vmatpush1.bf16.msra.mxu0 %v1186
      %1206 = vmatprep.subr.bf16.mxu0 0
      %1207 = vmatpush1.bf16.msra.mxu0 %v1187
      %1208 = vmatprep.subr.bf16.mxu0 0
      %1209 = vmatpush1.bf16.msra.mxu0 %v1188
      %1210 = vmatprep.subr.bf16.mxu0 0
      %1211 = vmatpush1.bf16.msra.mxu0 %v1189
      %1212 = vmatprep.subr.bf16.mxu0 0
      %1213 = vmatpush1.bf16.msra.mxu0 %v1190
      %1214 = vmatprep.subr.bf16.mxu0 0
      %1215 = vmatpush1.bf16.msra.mxu0 %v1191
      %1216 = vmatprep.subr.bf16.mxu0 0
      %1217 = vmatpush1.bf16.msra.mxu0 0
      %1218 = vmatprep.subr.bf16.mxu0 0
      %1219 = vmatpush1.bf16.msra.mxu0 0
      %1220 = vmatprep.subr.bf16.mxu0 0
      %1221 = vmatpush1.bf16.msra.mxu0 0
      %1222 = vmatprep.subr.bf16.mxu0 0
      %1223 = vmatpush1.bf16.msra.mxu0 0
      %1224 = vmatprep.subr.bf16.mxu0 0
      %1225 = vmatpush1.bf16.msra.mxu0 0
      %1226 = vmatprep.subr.bf16.mxu0 0
      %1227 = vmatpush1.bf16.msra.mxu0 0
      %1228 = vmatprep.subr.bf16.mxu0 0
      %1229 = vmatpush1.bf16.msra.mxu0 0
      %1230 = vmatprep.subr.bf16.mxu0 0
      %1231 = vmatpush1.bf16.msra.mxu0 0
      %1232 = vmatprep.mubr.bf16.mxu0 0
      %1233 = vmatmul.mubr.bf16.gmra.mrb[0].mxu0 %v1148
      %v1234 = vpop.f32.mrb[0].mxu0
      %v1235 = vadd.f32 0.0, %v1234
      %v1236 = vpop.f32.mrb[0].mxu0
      %v1237 = vpop.f32.mrb[0].mxu0
      %v1238 = vadd.f32 0.0, %v1237
      %v1239 = vpop.f32.mrb[0].mxu0
      %1240 = vmatprep.mubr.bf16.mxu0 0
      %1241 = vmatmul.mubr.bf16.gmra.mrb[0].mxu0 %v1149
      %v1242 = vpop.f32.mrb[0].mxu0
      %v1243 = vadd.f32 0.0, %v1242
      %v1244 = vpop.f32.mrb[0].mxu0
      %v1245 = vpop.f32.mrb[0].mxu0
      %v1246 = vadd.f32 0.0, %v1245
      %v1247 = vpop.f32.mrb[0].mxu0
      %1248 = vdwg.mxu0
      %v1249 = vadd.f32 %v1114, %v1235
      %v1250 = vadd.f32 %v1115, %v1238
      %v1251 = vadd.f32 %v1116, %v1243
      %v1252 = vadd.f32 %v1117, %v1246
      %s1253 = scalar_lea.vmem %s197, 48
      %v1254 = vld [vmem:[%s1253] sm:$0xf]
      %v1255 = vld [vmem:[%s1253 + $0x8] sm:$0xf]
      %v1256 = vld [vmem:[%s1253 + $0x10] sm:$0xf]
      %v1257 = vld [vmem:[%s1253 + $0x18] sm:$0xf]
      %s1258 = scalar_lea.vmem %s1, 448
      %v1259 = vld [vmem:[%s1258] sm:$0xf]
      %v1260 = vld [vmem:[%s1258 + $0x4] sm:$0xf]
      %v1261 = vld [vmem:[%s1258 + $0x8] sm:$0xf]
      %v1262 = vld [vmem:[%s1258 + $0xc] sm:$0xf]
      %v1263 = vld [vmem:[%s1258 + $0x10] sm:$0xf]
      %v1264 = vld [vmem:[%s1258 + $0x14] sm:$0xf]
      %v1265 = vld [vmem:[%s1258 + $0x18] sm:$0xf]
      %v1266 = vld [vmem:[%s1258 + $0x1c] sm:$0xf]
      %v1267 = vld [vmem:[%s1258 + $0x20] sm:$0xf]
      %v1268 = vld [vmem:[%s1258 + $0x24] sm:$0xf]
      %v1269 = vld [vmem:[%s1258 + $0x28] sm:$0xf]
      %v1270 = vld [vmem:[%s1258 + $0x2c] sm:$0xf]
      %v1271 = vld [vmem:[%s1258 + $0x30] sm:$0xf]
      %v1272 = vld [vmem:[%s1258 + $0x34] sm:$0xf]
      %v1273 = vld [vmem:[%s1258 + $0x38] sm:$0xf]
      %v1274 = vld [vmem:[%s1258 + $0x3c] sm:$0xf]
      %v1279 = vunpack.c.l.b16 %v1254
      %v1280 = vunpack.c.l.b16 %v1255
      %v1281 = vunpack.c.l.b16 %v1256
      %v1282 = vunpack.c.l.b16 %v1257
      %v1283 = vpack.c.b16 %v1280, %v1279
      %v1284 = vpack.c.b16 %v1282, %v1281
      %v1303 = vunpack.c.l.b16 %v1259
      %v1304 = vunpack.c.l.b16 %v1260
      %v1305 = vunpack.c.l.b16 %v1261
      %v1306 = vunpack.c.l.b16 %v1262
      %v1307 = vunpack.c.l.b16 %v1263
      %v1308 = vunpack.c.l.b16 %v1264
      %v1309 = vunpack.c.l.b16 %v1265
      %v1310 = vunpack.c.l.b16 %v1266
      %v1311 = vunpack.c.l.b16 %v1267
      %v1312 = vunpack.c.l.b16 %v1268
      %v1313 = vunpack.c.l.b16 %v1269
      %v1314 = vunpack.c.l.b16 %v1270
      %v1315 = vunpack.c.l.b16 %v1271
      %v1316 = vunpack.c.l.b16 %v1272
      %v1317 = vunpack.c.l.b16 %v1273
      %v1318 = vunpack.c.l.b16 %v1274
      %v1319 = vpack.c.b16 %v1304, %v1303
      %v1320 = vpack.c.b16 %v1306, %v1305
      %v1321 = vpack.c.b16 %v1308, %v1307
      %v1322 = vpack.c.b16 %v1310, %v1309
      %v1323 = vpack.c.b16 %v1312, %v1311
      %v1324 = vpack.c.b16 %v1314, %v1313
      %v1325 = vpack.c.b16 %v1316, %v1315
      %v1326 = vpack.c.b16 %v1318, %v1317
      %1335 = vmatprep.subr.bf16.mxu0 0
      %1336 = vmatpush1.bf16.msra.mxu0 %v1319
      %1337 = vmatprep.subr.bf16.mxu0 0
      %1338 = vmatpush1.bf16.msra.mxu0 %v1320
      %1339 = vmatprep.subr.bf16.mxu0 0
      %1340 = vmatpush1.bf16.msra.mxu0 %v1321
      %1341 = vmatprep.subr.bf16.mxu0 0
      %1342 = vmatpush1.bf16.msra.mxu0 %v1322
      %1343 = vmatprep.subr.bf16.mxu0 0
      %1344 = vmatpush1.bf16.msra.mxu0 %v1323
      %1345 = vmatprep.subr.bf16.mxu0 0
      %1346 = vmatpush1.bf16.msra.mxu0 %v1324
      %1347 = vmatprep.subr.bf16.mxu0 0
      %1348 = vmatpush1.bf16.msra.mxu0 %v1325
      %1349 = vmatprep.subr.bf16.mxu0 0
      %1350 = vmatpush1.bf16.msra.mxu0 %v1326
      %1351 = vmatprep.subr.bf16.mxu0 0
      %1352 = vmatpush1.bf16.msra.mxu0 0
      %1353 = vmatprep.subr.bf16.mxu0 0
      %1354 = vmatpush1.bf16.msra.mxu0 0
      %1355 = vmatprep.subr.bf16.mxu0 0
      %1356 = vmatpush1.bf16.msra.mxu0 0
      %1357 = vmatprep.subr.bf16.mxu0 0
      %1358 = vmatpush1.bf16.msra.mxu0 0
      %1359 = vmatprep.subr.bf16.mxu0 0
      %1360 = vmatpush1.bf16.msra.mxu0 0
      %1361 = vmatprep.subr.bf16.mxu0 0
      %1362 = vmatpush1.bf16.msra.mxu0 0
      %1363 = vmatprep.subr.bf16.mxu0 0
      %1364 = vmatpush1.bf16.msra.mxu0 0
      %1365 = vmatprep.subr.bf16.mxu0 0
      %1366 = vmatpush1.bf16.msra.mxu0 0
      %1367 = vmatprep.mubr.bf16.mxu0 0
      %1368 = vmatmul.mubr.bf16.gmra.mrb[0].mxu0 %v1283
      %v1369 = vpop.f32.mrb[0].mxu0
      %v1370 = vadd.f32 0.0, %v1369
      %v1371 = vpop.f32.mrb[0].mxu0
      %v1372 = vpop.f32.mrb[0].mxu0
      %v1373 = vadd.f32 0.0, %v1372
      %v1374 = vpop.f32.mrb[0].mxu0
      %1375 = vmatprep.mubr.bf16.mxu0 0
      %1376 = vmatmul.mubr.bf16.gmra.mrb[0].mxu0 %v1284
      %v1377 = vpop.f32.mrb[0].mxu0
      %v1378 = vadd.f32 0.0, %v1377
      %v1379 = vpop.f32.mrb[0].mxu0
      %v1380 = vpop.f32.mrb[0].mxu0
      %v1381 = vadd.f32 0.0, %v1380
      %v1382 = vpop.f32.mrb[0].mxu0
      %1383 = vdwg.mxu0
      %v1384 = vadd.f32 %v1249, %v1370
      %v1385 = vadd.f32 %v1250, %v1373
      %v1386 = vadd.f32 %v1251, %v1378
      %v1387 = vadd.f32 %v1252, %v1381
      %v1388 = vld [vmem:[%s1118] sm:$0xf]
      %v1389 = vld [vmem:[%s1118 + $0x4] sm:$0x1]
      %v1390 = vld [vmem:[%s1118 + $0x8] sm:$0xf]
      %v1391 = vld [vmem:[%s1118 + $0xc] sm:$0x1]
      %v1392 = vld [vmem:[%s1118 + $0x10] sm:$0xf]
      %v1393 = vld [vmem:[%s1118 + $0x14] sm:$0x1]
      %v1394 = vld [vmem:[%s1118 + $0x18] sm:$0xf]
      %v1395 = vld [vmem:[%s1118 + $0x1c] sm:$0x1]
      %v1397 = vshrl.u32 %v1388, 16
      %v1399 = vrot.slane %v1397, 4
      %v1400 = vshll.u32 %v1388, 16
      %v1402 = vrot.slane %v1400, 5
      %v1403 = vor.u32 %v1399, %v1402
      %v1404 = vrot.slane %v1403, 4
      %v1406 = vshll.u32 %v1389, 16
      %v1408 = vrot.slane %v1406, 5
      %v1409 = vsel %vm475, %v1404, %v1408
      %v1411 = vshrl.u32 %v1390, 16
      %v1413 = vrot.slane %v1411, 4
      %v1414 = vshll.u32 %v1390, 16
      %v1416 = vrot.slane %v1414, 5
      %v1417 = vor.u32 %v1413, %v1416
      %v1418 = vrot.slane %v1417, 4
      %v1420 = vshll.u32 %v1391, 16
      %v1422 = vrot.slane %v1420, 5
      %v1423 = vsel %vm475, %v1418, %v1422
      %v1425 = vshrl.u32 %v1392, 16
      %v1427 = vrot.slane %v1425, 4
      %v1428 = vshll.u32 %v1392, 16
      %v1430 = vrot.slane %v1428, 5
      %v1431 = vor.u32 %v1427, %v1430
      %v1432 = vrot.slane %v1431, 4
      %v1434 = vshll.u32 %v1393, 16
      %v1436 = vrot.slane %v1434, 5
      %v1437 = vsel %vm475, %v1432, %v1436
      %v1439 = vshrl.u32 %v1394, 16
      %v1441 = vrot.slane %v1439, 4
      %v1442 = vshll.u32 %v1394, 16
      %v1444 = vrot.slane %v1442, 5
      %v1445 = vor.u32 %v1441, %v1444
      %v1446 = vrot.slane %v1445, 4
      %v1448 = vshll.u32 %v1395, 16
      %v1450 = vrot.slane %v1448, 5
      %v1451 = vsel %vm475, %v1446, %v1450
      %s1452 = scalar_lea.vmem %s1, 512
      %v1453 = vld [vmem:[%s1452] sm:$0xf]
      %v1454 = vld [vmem:[%s1452 + $0x4] sm:$0xf]
      %v1455 = vld [vmem:[%s1452 + $0x8] sm:$0xf]
      %v1456 = vld [vmem:[%s1452 + $0xc] sm:$0xf]
      %v1457 = vld [vmem:[%s1452 + $0x10] sm:$0xf]
      %v1458 = vld [vmem:[%s1452 + $0x14] sm:$0xf]
      %v1459 = vld [vmem:[%s1452 + $0x18] sm:$0xf]
      %v1460 = vld [vmem:[%s1452 + $0x1c] sm:$0xf]
      %v1461 = vld [vmem:[%s1452 + $0x20] sm:$0xf]
      %v1462 = vld [vmem:[%s1452 + $0x24] sm:$0xf]
      %v1463 = vld [vmem:[%s1452 + $0x28] sm:$0xf]
      %v1464 = vld [vmem:[%s1452 + $0x2c] sm:$0xf]
      %v1465 = vld [vmem:[%s1452 + $0x30] sm:$0xf]
      %v1466 = vld [vmem:[%s1452 + $0x34] sm:$0xf]
      %v1467 = vld [vmem:[%s1452 + $0x38] sm:$0xf]
      %v1468 = vld [vmem:[%s1452 + $0x3c] sm:$0xf]
      %v1469 = vunpack.c.l.b16 %v1409
      %v1470 = vunpack.c.l.b16 %v1423
      %v1471 = vunpack.c.l.b16 %v1437
      %v1472 = vunpack.c.l.b16 %v1451
      %v1473 = vpack.c.b16 %v1470, %v1469
      %v1474 = vpack.c.b16 %v1472, %v1471
      %v1493 = vunpack.c.l.b16 %v1453
      %v1494 = vunpack.c.l.b16 %v1454
      %v1495 = vunpack.c.l.b16 %v1455
      %v1496 = vunpack.c.l.b16 %v1456
      %v1497 = vunpack.c.l.b16 %v1457
      %v1498 = vunpack.c.l.b16 %v1458
      %v1499 = vunpack.c.l.b16 %v1459
      %v1500 = vunpack.c.l.b16 %v1460
      %v1501 = vunpack.c.l.b16 %v1461
      %v1502 = vunpack.c.l.b16 %v1462
      %v1503 = vunpack.c.l.b16 %v1463
      %v1504 = vunpack.c.l.b16 %v1464
      %v1505 = vunpack.c.l.b16 %v1465
      %v1506 = vunpack.c.l.b16 %v1466
      %v1507 = vunpack.c.l.b16 %v1467
      %v1508 = vunpack.c.l.b16 %v1468
      %v1509 = vpack.c.b16 %v1494, %v1493
      %v1510 = vpack.c.b16 %v1496, %v1495
      %v1511 = vpack.c.b16 %v1498, %v1497
      %v1512 = vpack.c.b16 %v1500, %v1499
      %v1513 = vpack.c.b16 %v1502, %v1501
      %v1514 = vpack.c.b16 %v1504, %v1503
      %v1515 = vpack.c.b16 %v1506, %v1505
      %v1516 = vpack.c.b16 %v1508, %v1507
      %1525 = vmatprep.subr.bf16.mxu0 0
      %1526 = vmatpush1.bf16.msra.mxu0 %v1509
      %1527 = vmatprep.subr.bf16.mxu0 0
      %1528 = vmatpush1.bf16.msra.mxu0 %v1510
      %1529 = vmatprep.subr.bf16.mxu0 0
      %1530 = vmatpush1.bf16.msra.mxu0 %v1511
      %1531 = vmatprep.subr.bf16.mxu0 0
      %1532 = vmatpush1.bf16.msra.mxu0 %v1512
      %1533 = vmatprep.subr.bf16.mxu0 0
      %1534 = vmatpush1.bf16.msra.mxu0 %v1513
      %1535 = vmatprep.subr.bf16.mxu0 0
      %1536 = vmatpush1.bf16.msra.mxu0 %v1514
      %1537 = vmatprep.subr.bf16.mxu0 0
      %1538 = vmatpush1.bf16.msra.mxu0 %v1515
      %1539 = vmatprep.subr.bf16.mxu0 0
      %1540 = vmatpush1.bf16.msra.mxu0 %v1516
      %1541 = vmatprep.subr.bf16.mxu0 0
      %1542 = vmatpush1.bf16.msra.mxu0 0
      %1543 = vmatprep.subr.bf16.mxu0 0
      %1544 = vmatpush1.bf16.msra.mxu0 0
      %1545 = vmatprep.subr.bf16.mxu0 0
      %1546 = vmatpush1.bf16.msra.mxu0 0
      %1547 = vmatprep.subr.bf16.mxu0 0
      %1548 = vmatpush1.bf16.msra.mxu0 0
      %1549 = vmatprep.subr.bf16.mxu0 0
      %1550 = vmatpush1.bf16.msra.mxu0 0
      %1551 = vmatprep.subr.bf16.mxu0 0
      %1552 = vmatpush1.bf16.msra.mxu0 0
      %1553 = vmatprep.subr.bf16.mxu0 0
      %1554 = vmatpush1.bf16.msra.mxu0 0
      %1555 = vmatprep.subr.bf16.mxu0 0
      %1556 = vmatpush1.bf16.msra.mxu0 0
      %1557 = vmatprep.mubr.bf16.mxu0 0
      %1558 = vmatmul.mubr.bf16.gmra.mrb[0].mxu0 %v1473
      %v1559 = vpop.f32.mrb[0].mxu0
      %v1560 = vadd.f32 0.0, %v1559
      %v1561 = vpop.f32.mrb[0].mxu0
      %v1562 = vpop.f32.mrb[0].mxu0
      %v1563 = vadd.f32 0.0, %v1562
      %v1564 = vpop.f32.mrb[0].mxu0
      %1565 = vmatprep.mubr.bf16.mxu0 0
      %1566 = vmatmul.mubr.bf16.gmra.mrb[0].mxu0 %v1474
      %v1567 = vpop.f32.mrb[0].mxu0
      %v1568 = vadd.f32 0.0, %v1567
      %v1569 = vpop.f32.mrb[0].mxu0
      %v1570 = vpop.f32.mrb[0].mxu0
      %v1571 = vadd.f32 0.0, %v1570
      %v1572 = vpop.f32.mrb[0].mxu0
      %1573 = vdwg.mxu0
      %v1574 = vadd.f32 %v1384, %v1560
      %v1575 = vadd.f32 %v1385, %v1563
      %v1576 = vadd.f32 %v1386, %v1568
      %v1577 = vadd.f32 %v1387, %v1571
      %v1578 = vld [vmem:[%s2] sm:$0x1]
      %v1580 = vlaneseq
      %v1581 = vshrl.u32 %v1580, 7
      %v1582 = vsub.s32 0, %v1581
      %v1583 = vrot.slane %v1578, %v1582
      %v1585 = vadd.f32 %v1574, %v1583
      %v1586 = vadd.f32 %v1575, %v1583
      %v1587 = vadd.f32 %v1576, %v1583
      %v1588 = vadd.f32 %v1577, %v1583
      %s1589 = sld [smem:[#allocation2]]
      %v1590 = vstv %s1589
      %v1591 = vmax.f32 %v1585, %v1590
      %v1592 = vmax.f32 %v1586, %v1590
      %v1593 = vmax.f32 %v1587, %v1590
      %v1594 = vmax.f32 %v1588, %v1590
      %v1595 = vpack.c.bf16 %v1592, %v1591
      %v1596 = vpack.c.bf16 %v1594, %v1593
      %v1599 = vunpack.c.l.b16 %v1595
      %v1600 = vunpack.c.h.b16 %v1595
      %v1601 = vunpack.c.l.b16 %v1596
      %v1602 = vunpack.c.h.b16 %v1596
      %v1603 = vpack.c.b16 %v1599, %v1599
      %v1604 = vpack.c.b16 %v1600, %v1600
      %v1605 = vpack.c.b16 %v1601, %v1601
      %v1606 = vpack.c.b16 %v1602, %v1602
      %1611 = vst [vmem:[%s203] sm:$0xf] %v1603
      %1612 = vst [vmem:[%s203 + $0x4] sm:$0xf] %v1604
      %1613 = vst [vmem:[%s203 + $0x8] sm:$0xf] %v1605
      %1614 = vst [vmem:[%s203 + $0xc] sm:$0xf] %v1606
      %p1615 = scmp.lt.s32.totalorder %s16, 3
      %s1616 = scalar_select %p1615, %s16, 3
      %s1617 = smul.addr %s1616, 4
      %s1618 = smul.addr %s1617, 4
      %s1619 = scalar_lea.vmem %s4, %s1618
      // Predicated region
      $region37: #{_lambda_.5} parent=35 // pred_check
        %p1620 = pneg %p123
      $region38: #{_lambda_.5} parent=35 // pred_check_branch
        %1622 = sbr.rel (%p1620) target = $region40
      $region39: #{_lambda_.5} parent=35 // pred_region
        _
      $region40: #{_lambda_.5} parent=35 // pred_fallthru
        _
    $region36: #{_lambda_.5} parent=5 // pred_fallthru
      _
    %p1623 = scmp.le.s32.totalorder 2, %s11
    // Predicated region
    $region41: #{_lambda_.5} parent=5 // pred_check
      %p1624 = pneg %p1623
    $region42: #{_lambda_.5} parent=5 // pred_check_branch
      %1626 = sbr.rel (%p1624) target = $region44
    $region43: #{_lambda_.5} parent=5 // pred_region
      %s1627 = ssub.s32 %s11, 2
      // Predicated region
      $region45: #{_lambda_.5} parent=43 // pred_check
        %p1628 = pneg %p129
      $region46: #{_lambda_.5} parent=43 // pred_check_branch
        %1630 = sbr.rel (%p1628) target = $region48
      $region47: #{_lambda_.5} parent=43 // pred_region
        %p1631 = scmp.lt.s32.totalorder %s17, 3
        %s1632 = scalar_select %p1631, %s17, 3
        %s1633 = smul.addr %s1632, 4
        %s1634 = smul.addr %s1633, 4
        %s1635 = scalar_lea.vmem %s4, %s1634
      $region48: #{_lambda_.5} parent=43 // pred_fallthru
        _
    $region44: #{_lambda_.5} parent=5 // pred_fallthru
      _
  $region6: #{_lambda_.5} parent=0 // loop_footer
    %s15 = sadd.s32 1, %s11
  $region7: #{_lambda_.5} parent=0 // loop_footer_branch
    %10 = sbr.rel target = $region3
  $region8: #{_lambda_.5} parent=0 // loop_exit
    _

</llo_original>
